<compile_context>
chip_gen: v7x
topology: tpu7x:2x2x1
jax: 0.10.0
libtpu: 0.0.40
codegen_flags: <defaults>
</compile_context>

<pallas_src>
import functools

import jax
import jax.numpy as jnp
from jax.experimental import pallas as pl
from jax.experimental.pallas import tpu as pltpu


# ---------------------------------------------------------------------------
# Fused kernel: GCNConv(1,Hg)+ReLU -> edge gather/concat -> LSTM -> Linear
# ---------------------------------------------------------------------------
def _edge_gcn_lstm_kernel(ei_ref, eit_ref, x_ref, ea_ref, wa_ref, wb_ref,
                          out_ref, h_all_sc, *, Hg, Hl, O):
    N = x_ref.shape[0]
    E = ea_ref.shape[0]

    # ---- packed weight slabs (loaded once; wb is a single (8,128) vreg) ----
    wa = wa_ref[...]                              # (2Hg+Hl, 4Hl) bf16
    wb = wb_ref[...]                              # (6+2O,  4Hl) f32
    wih_s = wa[0:Hg]                              # (Hg, 4Hl) bf16
    wih_r = wa[Hg:2 * Hg]                         # (Hg, 4Hl) bf16
    whh = wa[2 * Hg:2 * Hg + Hl]                  # (Hl, 4Hl) bf16
    gcn_w = wb[0:1, 0:Hg]                         # (1, Hg)
    gcn_b = wb[1:2, 0:Hg]                         # (1, Hg)
    b_gate = wb[2:3, :]                           # (1, 4Hl)  (b_ih + b_hh)
    w_lin = wb[3:3 + O, 0:Hl]                     # (O, Hl)
    b_lin = wb[3 + O:3 + 2 * O, 0:1]              # (O, 1)
    wih_a = wb[3 + 2 * O:6 + 2 * O, :]            # (3, 4Hl)  f32 (tiny K)

    # ---- one-hot selectors for gather + dense adjacency --------------------
    s_col = eit_ref[:, 0:1]                       # (E, 1) senders
    r_col = eit_ref[:, 1:2]                       # (E, 1) receivers
    r_row = ei_ref[1:2, :]                        # (1, E) receivers

    iota_en = jax.lax.broadcasted_iota(jnp.int32, (E, N), 1)
    oh_s = (iota_en == s_col).astype(jnp.float32)      # (E, N)
    oh_r = (iota_en == r_col).astype(jnp.float32)      # (E, N)
    iota_ne = jax.lax.broadcasted_iota(jnp.int32, (N, E), 0)
    oh_r_t = (iota_ne == r_row).astype(jnp.float32)    # (N, E)

    # ---- GCNConv(1, Hg) + ReLU ---------------------------------------------
    # A[i, j] = #edges j -> i (target i, source j).
    a = jnp.dot(oh_r_t, oh_s, preferred_element_type=jnp.float32)     # (N, N)
    eye = (jax.lax.broadcasted_iota(jnp.int32, (N, N), 0)
           == jax.lax.broadcasted_iota(jnp.int32, (N, N), 1))
    # PyG gcn_norm / add_remaining_self_loops: diagonal forced to weight 1.
    a_hat = jnp.where(eye, 1.0, a)                                    # (N, N)
    deg = jnp.sum(a_hat, axis=1, keepdims=True)                       # (N, 1)
    dinv = jnp.where(deg > 0, jax.lax.rsqrt(deg), 0.0)                # (N, 1)
    # A_norm @ x == dinv * (A_hat @ (dinv * x));  x:[N,1], W:[1,Hg] outer.
    ax = dinv * jnp.dot(a_hat, dinv * x_ref[...],
                        preferred_element_type=jnp.float32)           # (N, 1)
    h_nodes = jnp.maximum(ax * gcn_w + gcn_b, 0.0)                    # (N, Hg)
    # F.dropout(training=False) == identity.
    # TODO(synk): training-mode dropout (random mask) is not implemented.

    # ---- edge gather + batched LSTM input projection ------------------------
    sender = jnp.dot(oh_s, h_nodes, preferred_element_type=jnp.float32)    # (E, Hg)
    receiver = jnp.dot(oh_r, h_nodes, preferred_element_type=jnp.float32)  # (E, Hg)
    # concat([sender, receiver, edge_attr]) @ W_ih^T as 3 split matmuls; the
    # two big blocks run with bf16 operands / f32 accumulation (single-pass).
    gates_x = (jnp.dot(sender.astype(jnp.bfloat16), wih_s,
                       preferred_element_type=jnp.float32)
               + jnp.dot(receiver.astype(jnp.bfloat16), wih_r,
                         preferred_element_type=jnp.float32)
               + jnp.dot(ea_ref[...], wih_a,
                         preferred_element_type=jnp.float32)
               + b_gate)                                               # (E, 4Hl) f32, kept in vregs

    # ---- LSTM recurrence (batch=1), fully unrolled with static indices ------
    h = jnp.zeros((1, Hl), jnp.float32)
    c = jnp.zeros((1, Hl), jnp.float32)
    for t in range(E):  # E is static; straight-line code, no VMEM round trip
        g = gates_x[t:t + 1, :] + jnp.dot(h.astype(jnp.bfloat16), whh,
                                          preferred_element_type=jnp.float32)  # (1, 4Hl)
        sig = jax.nn.sigmoid(g)        # ONE full-vreg EUP push (i|f|.|o)
        th = jnp.tanh(g)               # ONE full-vreg EUP push (g quarter)
        c = sig[:, Hl:2 * Hl] * c + sig[:, 0:Hl] * th[:, 2 * Hl:3 * Hl]
        h = sig[:, 3 * Hl:4 * Hl] * jnp.tanh(c)
        h_all_sc[t:t + 1, :] = h       # off the serial chain

    # ---- batched output Linear, lane-dense (O, E) output --------------------
    out = jax.lax.dot_general(
        w_lin, h_all_sc[...],
        dimension_numbers=(((1,), (1,)), ((), ())),
        preferred_element_type=jnp.float32)                            # (O, E)
    out_ref[...] = (out + b_lin).astype(out_ref.dtype)


# ---------------------------------------------------------------------------
# One-time weight packing (outside the per-call path)
# ---------------------------------------------------------------------------
def pack_params(params):
    Hg = params["gcn_w"].shape[1]
    Hl = params["w_hh"].shape[1]          # w_hh: (4H, H)
    O = params["lin_w"].shape[0]
    G = 4 * Hl
    assert G >= max(Hg, Hl, O), "packing assumes 4*Hl lanes cover Hg/Hl/O"

    # PyTorch LSTM: w_ih [4H, 2Hg+3], w_hh [4H, H]; transpose + split once.
    w_ih_t = params["w_ih"].T                         # (2Hg+3, 4Hl)
    wih_s = w_ih_t[:Hg]                               # (Hg, 4Hl)
    wih_r = w_ih_t[Hg:2 * Hg]                         # (Hg, 4Hl)
    wih_a = w_ih_t[2 * Hg:]                           # (3,  4Hl)
    whh_t = params["w_hh"].T                          # (Hl, 4Hl)

    slab_a = jnp.concatenate([wih_s, wih_r, whh_t], axis=0).astype(jnp.bfloat16)

    def pad_cols(m):
        m = jnp.asarray(m, jnp.float32)
        return jnp.pad(m, ((0, 0), (0, G - m.shape[1])))

    slab_b = jnp.concatenate([
        pad_cols(params["gcn_w"]),                              # row 0
        pad_cols(params["gcn_b"].reshape(1, Hg)),               # row 1
        (params["b_ih"] + params["b_hh"]).reshape(1, G)
            .astype(jnp.float32),                               # row 2
        pad_cols(params["lin_w"]),                              # rows 3 .. 3+O
        pad_cols(params["lin_b"].reshape(O, 1)),                # rows 3+O .. 3+2O
        pad_cols(wih_a),                                        # rows 3+2O .. 6+2O
    ], axis=0)                                                  # (6+2O, 4Hl) f32

    return {"slab_a": slab_a, "slab_b": slab_b}


# ---------------------------------------------------------------------------
# Wrapper: single pallas_call (no grid, whole arrays resident in VMEM)
# ---------------------------------------------------------------------------
@jax.jit
def edge_gcn_lstm_forward(slab_a, slab_b, x, edge_index, edge_attr):
    Hl = slab_a.shape[1] // 4
    Hg = (slab_a.shape[0] - Hl) // 2
    O = (slab_b.shape[0] - 6) // 2
    E = edge_index.shape[1]

    ei = edge_index.astype(jnp.int32)                 # (2, E)
    eit = ei.T                                        # (E, 2)

    kernel = functools.partial(_edge_gcn_lstm_kernel, Hg=Hg, Hl=Hl, O=O)
    out_oe = pl.pallas_call(
        kernel,
        out_shape=jax.ShapeDtypeStruct((O, E), jnp.float32),
        scratch_shapes=[pltpu.VMEM((E, Hl), jnp.float32)],   # all h_t rows
    )(ei, eit,
      x.astype(jnp.float32), edge_attr.astype(jnp.float32),
      slab_a, slab_b)

    # (O, E) -> (E, O) -> flat, matching out.view(-1)
    return out_oe.T.reshape(-1)


# ---------------------------------------------------------------------------
# Parameter init (PyTorch layouts)
# ---------------------------------------------------------------------------
def init_params(key, hidden_channels, lstm_hidden_channels, out_channels):
    ks = jax.random.split(key, 7)
    d_in = hidden_channels * 2 + 3
    H = lstm_hidden_channels
    return {
        # GCNConv: internal Linear (no bias) weight^T [1, Hg], bias [Hg]
        "gcn_w": jax.random.normal(ks[0], (1, hidden_channels), jnp.float32) * 0.1,
        "gcn_b": jnp.zeros((hidden_channels,), jnp.float32),
        # nn.LSTM(input_size=d_in, hidden_size=H): gate order i, f, g, o
        "w_ih": jax.random.normal(ks[1], (4 * H, d_in), jnp.float32) * 0.1,
        "w_hh": jax.random.normal(ks[2], (4 * H, H), jnp.float32) * 0.1,
        "b_ih": jax.random.normal(ks[3], (4 * H,), jnp.float32) * 0.1,
        "b_hh": jax.random.normal(ks[4], (4 * H,), jnp.float32) * 0.1,
        # nn.Linear(H, out_channels)
        "lin_w": jax.random.normal(ks[5], (out_channels, H), jnp.float32) * 0.1,
        "lin_b": jax.random.normal(ks[6], (out_channels,), jnp.float32) * 0.1,
    }


if __name__ == "__main__":
    key = jax.random.PRNGKey(0)
    k_x, k_ei, k_ea, k_p = jax.random.split(key, 4)

    N, E = 16, 24
    hidden_channels, lstm_hidden, out_channels = 32, 32, 1

    x = jax.random.normal(k_x, (N, 1), jnp.float32)                  # node features
    edge_index = jax.random.randint(k_ei, (2, E), 0, N, dtype=jnp.int32)
    edge_attr = jax.random.normal(k_ea, (E, 3), jnp.float32)         # [E, 3]

    params = init_params(k_p, hidden_channels, lstm_hidden, out_channels)
    packed = pack_params(params)                                     # once, off hot path

    out = edge_gcn_lstm_forward(packed["slab_a"], packed["slab_b"],
                                x, edge_index, edge_attr)
    jax.block_until_ready(out)
    assert out.shape == (E * out_channels,), out.shape
    assert bool(jnp.all(jnp.isfinite(out)))
    print("KERNEL_OK")
</pallas_src>

<mosaic_0001>
module attributes {stable_mosaic.version = 11 : i64} {
  func.func @_edge_gcn_lstm_kernel(%arg0: memref<2x24xi32, #tpu.memory_space<vmem>>, %arg1: memref<24x2xi32, #tpu.memory_space<vmem>>, %arg2: memref<16x1xf32, #tpu.memory_space<vmem>>, %arg3: memref<24x3xf32, #tpu.memory_space<vmem>>, %arg4: memref<96x128xbf16, #tpu.memory_space<vmem>>, %arg5: memref<8x128xf32, #tpu.memory_space<vmem>>, %arg6: memref<1x24xf32, #tpu.memory_space<vmem>>, %arg7: memref<24x32xf32, #tpu.memory_space<vmem>>) attributes {dimension_semantics = [], scalar_prefetch = 0 : i64, scratch_operands = 1 : i64, tpu.core_type = #tpu.core_type<tc>} {
    %c0 = arith.constant 0 : index
    %c0_0 = arith.constant 0 : index
    %0 = vector.load %arg4[%c0, %c0_0] : memref<96x128xbf16, #tpu.memory_space<vmem>>, vector<96x128xbf16>
    %c0_1 = arith.constant 0 : index
    %c0_2 = arith.constant 0 : index
    %1 = vector.load %arg5[%c0_1, %c0_2] : memref<8x128xf32, #tpu.memory_space<vmem>>, vector<8x128xf32>
    %2 = vector.extract_strided_slice %0 {offsets = [0, 0], sizes = [32, 128], strides = [1, 1]} : vector<96x128xbf16> to vector<32x128xbf16>
    %3 = vector.extract_strided_slice %0 {offsets = [32, 0], sizes = [32, 128], strides = [1, 1]} : vector<96x128xbf16> to vector<32x128xbf16>
    %4 = vector.extract_strided_slice %0 {offsets = [64, 0], sizes = [32, 128], strides = [1, 1]} : vector<96x128xbf16> to vector<32x128xbf16>
    %5 = vector.extract_strided_slice %1 {offsets = [0, 0], sizes = [1, 32], strides = [1, 1]} : vector<8x128xf32> to vector<1x32xf32>
    %6 = vector.extract_strided_slice %1 {offsets = [1, 0], sizes = [1, 32], strides = [1, 1]} : vector<8x128xf32> to vector<1x32xf32>
    %7 = vector.extract_strided_slice %1 {offsets = [2, 0], sizes = [1, 128], strides = [1, 1]} : vector<8x128xf32> to vector<1x128xf32>
    %8 = vector.extract_strided_slice %1 {offsets = [3, 0], sizes = [1, 32], strides = [1, 1]} : vector<8x128xf32> to vector<1x32xf32>
    %9 = vector.extract_strided_slice %1 {offsets = [4, 0], sizes = [1, 1], strides = [1, 1]} : vector<8x128xf32> to vector<1x1xf32>
    %10 = vector.extract_strided_slice %1 {offsets = [5, 0], sizes = [3, 128], strides = [1, 1]} : vector<8x128xf32> to vector<3x128xf32>
    %c0_3 = arith.constant 0 : index
    %c0_4 = arith.constant 0 : index
    %11 = vector.load %arg1[%c0_3, %c0_4] : memref<24x2xi32, #tpu.memory_space<vmem>>, vector<24x1xi32>
    %c0_5 = arith.constant 0 : index
    %c1 = arith.constant 1 : index
    %12 = vector.load %arg1[%c0_5, %c1] : memref<24x2xi32, #tpu.memory_space<vmem>>, vector<24x1xi32>
    %c1_6 = arith.constant 1 : index
    %c0_7 = arith.constant 0 : index
    %13 = vector.load %arg0[%c1_6, %c0_7] : memref<2x24xi32, #tpu.memory_space<vmem>>, vector<1x24xi32>
    %14 = tpu.iota {dimensions = array<i32: 1>} : vector<24x16xi32>
    %15 = vector.broadcast %11 : vector<24x1xi32> to vector<24x16xi32>
    %16 = arith.cmpi eq, %14, %15 : vector<24x16xi32>
    %17 = arith.extui %16 : vector<24x16xi1> to vector<24x16xi32>
    %18 = arith.sitofp %17 : vector<24x16xi32> to vector<24x16xf32>
    %19 = vector.broadcast %12 : vector<24x1xi32> to vector<24x16xi32>
    %20 = arith.cmpi eq, %14, %19 : vector<24x16xi32>
    %21 = arith.extui %20 : vector<24x16xi1> to vector<24x16xi32>
    %22 = arith.sitofp %21 : vector<24x16xi32> to vector<24x16xf32>
    %23 = tpu.iota {dimensions = array<i32: 0>} : vector<16x24xi32>
    %24 = vector.broadcast %13 : vector<1x24xi32> to vector<16x24xi32>
    %25 = arith.cmpi eq, %23, %24 : vector<16x24xi32>
    %26 = arith.extui %25 : vector<16x24xi1> to vector<16x24xi32>
    %27 = arith.sitofp %26 : vector<16x24xi32> to vector<16x24xf32>
    %cst = arith.constant dense<0.000000e+00> : vector<16x16xf32>
    %28 = tpu.matmul %27, %18, %cst {dimension_numbers = #tpu.dot_dimension_numbers<[1], [0], [0], [1], [0, 0, 1, 1], [], []>} : vector<16x24xf32>, vector<24x16xf32>, vector<16x16xf32> -> vector<16x16xf32>
    %29 = tpu.iota {dimensions = array<i32: 0>} : vector<16x16xi32>
    %30 = tpu.iota {dimensions = array<i32: 1>} : vector<16x16xi32>
    %31 = arith.cmpi eq, %29, %30 : vector<16x16xi32>
    %cst_8 = arith.constant 1.000000e+00 : f32
    %32 = vector.broadcast %cst_8 : f32 to vector<16x16xf32>
    %33 = arith.select %31, %32, %28 : vector<16x16xi1>, vector<16x16xf32>
    %cst_9 = arith.constant dense<0.000000e+00> : vector<16xf32>
    %34 = vector.multi_reduction <add>, %33, %cst_9 [1] : vector<16x16xf32> to vector<16xf32>
    %35 = vector.shape_cast %34 : vector<16xf32> to vector<16x1xf32>
    %cst_10 = arith.constant 0.000000e+00 : f32
    %36 = vector.broadcast %cst_10 : f32 to vector<16x1xf32>
    %37 = arith.cmpf ogt, %35, %36 : vector<16x1xf32>
    %38 = math.rsqrt %35 : vector<16x1xf32>
    %cst_11 = arith.constant 0.000000e+00 : f32
    %39 = vector.broadcast %cst_11 : f32 to vector<16x1xf32>
    %40 = arith.select %37, %38, %39 : vector<16x1xi1>, vector<16x1xf32>
    %c0_12 = arith.constant 0 : index
    %c0_13 = arith.constant 0 : index
    %41 = vector.load %arg2[%c0_12, %c0_13] : memref<16x1xf32, #tpu.memory_space<vmem>>, vector<16x1xf32>
    %42 = arith.mulf %40, %41 : vector<16x1xf32>
    %cst_14 = arith.constant dense<0.000000e+00> : vector<16x1xf32>
    %43 = tpu.matmul %33, %42, %cst_14 {dimension_numbers = #tpu.dot_dimension_numbers<[1], [0], [0], [1], [0, 0, 1, 1], [], []>} : vector<16x16xf32>, vector<16x1xf32>, vector<16x1xf32> -> vector<16x1xf32>
    %44 = arith.mulf %40, %43 : vector<16x1xf32>
    %45 = vector.broadcast %44 : vector<16x1xf32> to vector<16x32xf32>
    %46 = vector.broadcast %5 : vector<1x32xf32> to vector<16x32xf32>
    %47 = arith.mulf %45, %46 : vector<16x32xf32>
    %48 = vector.broadcast %6 : vector<1x32xf32> to vector<16x32xf32>
    %49 = arith.addf %47, %48 : vector<16x32xf32>
    %cst_15 = arith.constant 0.000000e+00 : f32
    %50 = vector.broadcast %cst_15 : f32 to vector<16x32xf32>
    %51 = arith.maximumf %49, %50 : vector<16x32xf32>
    %cst_16 = arith.constant dense<0.000000e+00> : vector<24x32xf32>
    %52 = tpu.matmul %18, %51, %cst_16 {dimension_numbers = #tpu.dot_dimension_numbers<[1], [0], [0], [1], [0, 0, 1, 1], [], []>} : vector<24x16xf32>, vector<16x32xf32>, vector<24x32xf32> -> vector<24x32xf32>
    %cst_17 = arith.constant dense<0.000000e+00> : vector<24x32xf32>
    %53 = tpu.matmul %22, %51, %cst_17 {dimension_numbers = #tpu.dot_dimension_numbers<[1], [0], [0], [1], [0, 0, 1, 1], [], []>} : vector<24x16xf32>, vector<16x32xf32>, vector<24x32xf32> -> vector<24x32xf32>
    %54 = arith.truncf %52 : vector<24x32xf32> to vector<24x32xbf16>
    %cst_18 = arith.constant dense<0.000000e+00> : vector<24x128xf32>
    %55 = tpu.matmul %54, %2, %cst_18 {dimension_numbers = #tpu.dot_dimension_numbers<[1], [0], [0], [1], [0, 0, 1, 1], [], []>} : vector<24x32xbf16>, vector<32x128xbf16>, vector<24x128xf32> -> vector<24x128xf32>
    %56 = arith.truncf %53 : vector<24x32xf32> to vector<24x32xbf16>
    %cst_19 = arith.constant dense<0.000000e+00> : vector<24x128xf32>
    %57 = tpu.matmul %56, %3, %cst_19 {dimension_numbers = #tpu.dot_dimension_numbers<[1], [0], [0], [1], [0, 0, 1, 1], [], []>} : vector<24x32xbf16>, vector<32x128xbf16>, vector<24x128xf32> -> vector<24x128xf32>
    %58 = arith.addf %55, %57 : vector<24x128xf32>
    %c0_20 = arith.constant 0 : index
    %c0_21 = arith.constant 0 : index
    %59 = vector.load %arg3[%c0_20, %c0_21] : memref<24x3xf32, #tpu.memory_space<vmem>>, vector<24x3xf32>
    %cst_22 = arith.constant dense<0.000000e+00> : vector<24x128xf32>
    %60 = tpu.matmul %59, %10, %cst_22 {dimension_numbers = #tpu.dot_dimension_numbers<[1], [0], [0], [1], [0, 0, 1, 1], [], []>} : vector<24x3xf32>, vector<3x128xf32>, vector<24x128xf32> -> vector<24x128xf32>
    %61 = arith.addf %58, %60 : vector<24x128xf32>
    %62 = vector.broadcast %7 : vector<1x128xf32> to vector<24x128xf32>
    %63 = arith.addf %61, %62 : vector<24x128xf32>
    %cst_23 = arith.constant 0.000000e+00 : f32
    %64 = vector.broadcast %cst_23 : f32 to vector<1x32xf32>
    %cst_24 = arith.constant 0.000000e+00 : f32
    %65 = vector.broadcast %cst_24 : f32 to vector<1x32xf32>
    %66 = vector.extract_strided_slice %63 {offsets = [0, 0], sizes = [1, 128], strides = [1, 1]} : vector<24x128xf32> to vector<1x128xf32>
    %67 = arith.truncf %64 : vector<1x32xf32> to vector<1x32xbf16>
    %cst_25 = arith.constant dense<0.000000e+00> : vector<1x128xf32>
    %68 = tpu.matmul %67, %4, %cst_25 {dimension_numbers = #tpu.dot_dimension_numbers<[1], [0], [0], [1], [0, 0, 1, 1], [], []>} : vector<1x32xbf16>, vector<32x128xbf16>, vector<1x128xf32> -> vector<1x128xf32>
    %69 = arith.addf %66, %68 : vector<1x128xf32>
    %70 = arith.negf %69 : vector<1x128xf32>
    %71 = math.exp %70 : vector<1x128xf32>
    %cst_26 = arith.constant 1.000000e+00 : f32
    %72 = vector.broadcast %cst_26 : f32 to vector<1x128xf32>
    %73 = arith.addf %72, %71 : vector<1x128xf32>
    %74 = arith.divf %72, %73 : vector<1x128xf32>
    %75 = math.tanh %69 : vector<1x128xf32>
    %76 = vector.extract_strided_slice %74 {offsets = [0, 32], sizes = [1, 32], strides = [1, 1]} : vector<1x128xf32> to vector<1x32xf32>
    %77 = arith.mulf %76, %65 : vector<1x32xf32>
    %78 = vector.extract_strided_slice %74 {offsets = [0, 0], sizes = [1, 32], strides = [1, 1]} : vector<1x128xf32> to vector<1x32xf32>
    %79 = vector.extract_strided_slice %75 {offsets = [0, 64], sizes = [1, 32], strides = [1, 1]} : vector<1x128xf32> to vector<1x32xf32>
    %80 = arith.mulf %78, %79 : vector<1x32xf32>
    %81 = arith.addf %77, %80 : vector<1x32xf32>
    %82 = vector.extract_strided_slice %74 {offsets = [0, 96], sizes = [1, 32], strides = [1, 1]} : vector<1x128xf32> to vector<1x32xf32>
    %83 = math.tanh %81 : vector<1x32xf32>
    %84 = arith.mulf %82, %83 : vector<1x32xf32>
    %c0_27 = arith.constant 0 : index
    %c0_28 = arith.constant 0 : index
    %85 = vector.load %arg7[%c0_27, %c0_28] : memref<24x32xf32, #tpu.memory_space<vmem>>, vector<1x32xf32>
    tpu.vector_store %arg7[%c0_27, %c0_28], %84 {strides = array<i32>} : memref<24x32xf32, #tpu.memory_space<vmem>>, vector<1x32xf32>,
    %86 = vector.extract_strided_slice %63 {offsets = [1, 0], sizes = [1, 128], strides = [1, 1]} : vector<24x128xf32> to vector<1x128xf32>
    %87 = arith.truncf %84 : vector<1x32xf32> to vector<1x32xbf16>
    %cst_29 = arith.constant dense<0.000000e+00> : vector<1x128xf32>
    %88 = tpu.matmul %87, %4, %cst_29 {dimension_numbers = #tpu.dot_dimension_numbers<[1], [0], [0], [1], [0, 0, 1, 1], [], []>} : vector<1x32xbf16>, vector<32x128xbf16>, vector<1x128xf32> -> vector<1x128xf32>
    %89 = arith.addf %86, %88 : vector<1x128xf32>
    %90 = arith.negf %89 : vector<1x128xf32>
    %91 = math.exp %90 : vector<1x128xf32>
    %cst_30 = arith.constant 1.000000e+00 : f32
    %92 = vector.broadcast %cst_30 : f32 to vector<1x128xf32>
    %93 = arith.addf %92, %91 : vector<1x128xf32>
    %94 = arith.divf %92, %93 : vector<1x128xf32>
    %95 = math.tanh %89 : vector<1x128xf32>
    %96 = vector.extract_strided_slice %94 {offsets = [0, 32], sizes = [1, 32], strides = [1, 1]} : vector<1x128xf32> to vector<1x32xf32>
    %97 = arith.mulf %96, %81 : vector<1x32xf32>
    %98 = vector.extract_strided_slice %94 {offsets = [0, 0], sizes = [1, 32], strides = [1, 1]} : vector<1x128xf32> to vector<1x32xf32>
    %99 = vector.extract_strided_slice %95 {offsets = [0, 64], sizes = [1, 32], strides = [1, 1]} : vector<1x128xf32> to vector<1x32xf32>
    %100 = arith.mulf %98, %99 : vector<1x32xf32>
    %101 = arith.addf %97, %100 : vector<1x32xf32>
    %102 = vector.extract_strided_slice %94 {offsets = [0, 96], sizes = [1, 32], strides = [1, 1]} : vector<1x128xf32> to vector<1x32xf32>
    %103 = math.tanh %101 : vector<1x32xf32>
    %104 = arith.mulf %102, %103 : vector<1x32xf32>
    %c1_31 = arith.constant 1 : index
    %c0_32 = arith.constant 0 : index
    %105 = vector.load %arg7[%c1_31, %c0_32] : memref<24x32xf32, #tpu.memory_space<vmem>>, vector<1x32xf32>
    tpu.vector_store %arg7[%c1_31, %c0_32], %104 {strides = array<i32>} : memref<24x32xf32, #tpu.memory_space<vmem>>, vector<1x32xf32>,
    %106 = vector.extract_strided_slice %63 {offsets = [2, 0], sizes = [1, 128], strides = [1, 1]} : vector<24x128xf32> to vector<1x128xf32>
    %107 = arith.truncf %104 : vector<1x32xf32> to vector<1x32xbf16>
    %cst_33 = arith.constant dense<0.000000e+00> : vector<1x128xf32>
    %108 = tpu.matmul %107, %4, %cst_33 {dimension_numbers = #tpu.dot_dimension_numbers<[1], [0], [0], [1], [0, 0, 1, 1], [], []>} : vector<1x32xbf16>, vector<32x128xbf16>, vector<1x128xf32> -> vector<1x128xf32>
    %109 = arith.addf %106, %108 : vector<1x128xf32>
    %110 = arith.negf %109 : vector<1x128xf32>
    %111 = math.exp %110 : vector<1x128xf32>
    %cst_34 = arith.constant 1.000000e+00 : f32
    %112 = vector.broadcast %cst_34 : f32 to vector<1x128xf32>
    %113 = arith.addf %112, %111 : vector<1x128xf32>
    %114 = arith.divf %112, %113 : vector<1x128xf32>
    %115 = math.tanh %109 : vector<1x128xf32>
    %116 = vector.extract_strided_slice %114 {offsets = [0, 32], sizes = [1, 32], strides = [1, 1]} : vector<1x128xf32> to vector<1x32xf32>
    %117 = arith.mulf %116, %101 : vector<1x32xf32>
    %118 = vector.extract_strided_slice %114 {offsets = [0, 0], sizes = [1, 32], strides = [1, 1]} : vector<1x128xf32> to vector<1x32xf32>
    %119 = vector.extract_strided_slice %115 {offsets = [0, 64], sizes = [1, 32], strides = [1, 1]} : vector<1x128xf32> to vector<1x32xf32>
    %120 = arith.mulf %118, %119 : vector<1x32xf32>
    %121 = arith.addf %117, %120 : vector<1x32xf32>
    %122 = vector.extract_strided_slice %114 {offsets = [0, 96], sizes = [1, 32], strides = [1, 1]} : vector<1x128xf32> to vector<1x32xf32>
    %123 = math.tanh %121 : vector<1x32xf32>
    %124 = arith.mulf %122, %123 : vector<1x32xf32>
    %c2 = arith.constant 2 : index
    %c0_35 = arith.constant 0 : index
    %125 = vector.load %arg7[%c2, %c0_35] : memref<24x32xf32, #tpu.memory_space<vmem>>, vector<1x32xf32>
    tpu.vector_store %arg7[%c2, %c0_35], %124 {strides = array<i32>} : memref<24x32xf32, #tpu.memory_space<vmem>>, vector<1x32xf32>,
    %126 = vector.extract_strided_slice %63 {offsets = [3, 0], sizes = [1, 128], strides = [1, 1]} : vector<24x128xf32> to vector<1x128xf32>
    %127 = arith.truncf %124 : vector<1x32xf32> to vector<1x32xbf16>
    %cst_36 = arith.constant dense<0.000000e+00> : vector<1x128xf32>
    %128 = tpu.matmul %127, %4, %cst_36 {dimension_numbers = #tpu.dot_dimension_numbers<[1], [0], [0], [1], [0, 0, 1, 1], [], []>} : vector<1x32xbf16>, vector<32x128xbf16>, vector<1x128xf32> -> vector<1x128xf32>
    %129 = arith.addf %126, %128 : vector<1x128xf32>
    %130 = arith.negf %129 : vector<1x128xf32>
    %131 = math.exp %130 : vector<1x128xf32>
    %cst_37 = arith.constant 1.000000e+00 : f32
    %132 = vector.broadcast %cst_37 : f32 to vector<1x128xf32>
    %133 = arith.addf %132, %131 : vector<1x128xf32>
    %134 = arith.divf %132, %133 : vector<1x128xf32>
    %135 = math.tanh %129 : vector<1x128xf32>
    %136 = vector.extract_strided_slice %134 {offsets = [0, 32], sizes = [1, 32], strides = [1, 1]} : vector<1x128xf32> to vector<1x32xf32>
    %137 = arith.mulf %136, %121 : vector<1x32xf32>
    %138 = vector.extract_strided_slice %134 {offsets = [0, 0], sizes = [1, 32], strides = [1, 1]} : vector<1x128xf32> to vector<1x32xf32>
    %139 = vector.extract_strided_slice %135 {offsets = [0, 64], sizes = [1, 32], strides = [1, 1]} : vector<1x128xf32> to vector<1x32xf32>
    %140 = arith.mulf %138, %139 : vector<1x32xf32>
    %141 = arith.addf %137, %140 : vector<1x32xf32>
    %142 = vector.extract_strided_slice %134 {offsets = [0, 96], sizes = [1, 32], strides = [1, 1]} : vector<1x128xf32> to vector<1x32xf32>
    %143 = math.tanh %141 : vector<1x32xf32>
    %144 = arith.mulf %142, %143 : vector<1x32xf32>
    %c3 = arith.constant 3 : index
    %c0_38 = arith.constant 0 : index
    %145 = vector.load %arg7[%c3, %c0_38] : memref<24x32xf32, #tpu.memory_space<vmem>>, vector<1x32xf32>
    tpu.vector_store %arg7[%c3, %c0_38], %144 {strides = array<i32>} : memref<24x32xf32, #tpu.memory_space<vmem>>, vector<1x32xf32>,
    %146 = vector.extract_strided_slice %63 {offsets = [4, 0], sizes = [1, 128], strides = [1, 1]} : vector<24x128xf32> to vector<1x128xf32>
    %147 = arith.truncf %144 : vector<1x32xf32> to vector<1x32xbf16>
    %cst_39 = arith.constant dense<0.000000e+00> : vector<1x128xf32>
    %148 = tpu.matmul %147, %4, %cst_39 {dimension_numbers = #tpu.dot_dimension_numbers<[1], [0], [0], [1], [0, 0, 1, 1], [], []>} : vector<1x32xbf16>, vector<32x128xbf16>, vector<1x128xf32> -> vector<1x128xf32>
    %149 = arith.addf %146, %148 : vector<1x128xf32>
    %150 = arith.negf %149 : vector<1x128xf32>
    %151 = math.exp %150 : vector<1x128xf32>
    %cst_40 = arith.constant 1.000000e+00 : f32
    %152 = vector.broadcast %cst_40 : f32 to vector<1x128xf32>
    %153 = arith.addf %152, %151 : vector<1x128xf32>
    %154 = arith.divf %152, %153 : vector<1x128xf32>
    %155 = math.tanh %149 : vector<1x128xf32>
    %156 = vector.extract_strided_slice %154 {offsets = [0, 32], sizes = [1, 32], strides = [1, 1]} : vector<1x128xf32> to vector<1x32xf32>
    %157 = arith.mulf %156, %141 : vector<1x32xf32>
    %158 = vector.extract_strided_slice %154 {offsets = [0, 0], sizes = [1, 32], strides = [1, 1]} : vector<1x128xf32> to vector<1x32xf32>
    %159 = vector.extract_strided_slice %155 {offsets = [0, 64], sizes = [1, 32], strides = [1, 1]} : vector<1x128xf32> to vector<1x32xf32>
    %160 = arith.mulf %158, %159 : vector<1x32xf32>
    %161 = arith.addf %157, %160 : vector<1x32xf32>
    %162 = vector.extract_strided_slice %154 {offsets = [0, 96], sizes = [1, 32], strides = [1, 1]} : vector<1x128xf32> to vector<1x32xf32>
    %163 = math.tanh %161 : vector<1x32xf32>
    %164 = arith.mulf %162, %163 : vector<1x32xf32>
    %c4 = arith.constant 4 : index
    %c0_41 = arith.constant 0 : index
    %165 = vector.load %arg7[%c4, %c0_41] : memref<24x32xf32, #tpu.memory_space<vmem>>, vector<1x32xf32>
    tpu.vector_store %arg7[%c4, %c0_41], %164 {strides = array<i32>} : memref<24x32xf32, #tpu.memory_space<vmem>>, vector<1x32xf32>,
    %166 = vector.extract_strided_slice %63 {offsets = [5, 0], sizes = [1, 128], strides = [1, 1]} : vector<24x128xf32> to vector<1x128xf32>
    %167 = arith.truncf %164 : vector<1x32xf32> to vector<1x32xbf16>
    %cst_42 = arith.constant dense<0.000000e+00> : vector<1x128xf32>
    %168 = tpu.matmul %167, %4, %cst_42 {dimension_numbers = #tpu.dot_dimension_numbers<[1], [0], [0], [1], [0, 0, 1, 1], [], []>} : vector<1x32xbf16>, vector<32x128xbf16>, vector<1x128xf32> -> vector<1x128xf32>
    %169 = arith.addf %166, %168 : vector<1x128xf32>
    %170 = arith.negf %169 : vector<1x128xf32>
    %171 = math.exp %170 : vector<1x128xf32>
    %cst_43 = arith.constant 1.000000e+00 : f32
    %172 = vector.broadcast %cst_43 : f32 to vector<1x128xf32>
    %173 = arith.addf %172, %171 : vector<1x128xf32>
    %174 = arith.divf %172, %173 : vector<1x128xf32>
    %175 = math.tanh %169 : vector<1x128xf32>
    %176 = vector.extract_strided_slice %174 {offsets = [0, 32], sizes = [1, 32], strides = [1, 1]} : vector<1x128xf32> to vector<1x32xf32>
    %177 = arith.mulf %176, %161 : vector<1x32xf32>
    %178 = vector.extract_strided_slice %174 {offsets = [0, 0], sizes = [1, 32], strides = [1, 1]} : vector<1x128xf32> to vector<1x32xf32>
    %179 = vector.extract_strided_slice %175 {offsets = [0, 64], sizes = [1, 32], strides = [1, 1]} : vector<1x128xf32> to vector<1x32xf32>
    %180 = arith.mulf %178, %179 : vector<1x32xf32>
    %181 = arith.addf %177, %180 : vector<1x32xf32>
    %182 = vector.extract_strided_slice %174 {offsets = [0, 96], sizes = [1, 32], strides = [1, 1]} : vector<1x128xf32> to vector<1x32xf32>
    %183 = math.tanh %181 : vector<1x32xf32>
    %184 = arith.mulf %182, %183 : vector<1x32xf32>
    %c5 = arith.constant 5 : index
    %c0_44 = arith.constant 0 : index
    %185 = vector.load %arg7[%c5, %c0_44] : memref<24x32xf32, #tpu.memory_space<vmem>>, vector<1x32xf32>
    tpu.vector_store %arg7[%c5, %c0_44], %184 {strides = array<i32>} : memref<24x32xf32, #tpu.memory_space<vmem>>, vector<1x32xf32>,
    %186 = vector.extract_strided_slice %63 {offsets = [6, 0], sizes = [1, 128], strides = [1, 1]} : vector<24x128xf32> to vector<1x128xf32>
    %187 = arith.truncf %184 : vector<1x32xf32> to vector<1x32xbf16>
    %cst_45 = arith.constant dense<0.000000e+00> : vector<1x128xf32>
    %188 = tpu.matmul %187, %4, %cst_45 {dimension_numbers = #tpu.dot_dimension_numbers<[1], [0], [0], [1], [0, 0, 1, 1], [], []>} : vector<1x32xbf16>, vector<32x128xbf16>, vector<1x128xf32> -> vector<1x128xf32>
    %189 = arith.addf %186, %188 : vector<1x128xf32>
    %190 = arith.negf %189 : vector<1x128xf32>
    %191 = math.exp %190 : vector<1x128xf32>
    %cst_46 = arith.constant 1.000000e+00 : f32
    %192 = vector.broadcast %cst_46 : f32 to vector<1x128xf32>
    %193 = arith.addf %192, %191 : vector<1x128xf32>
    %194 = arith.divf %192, %193 : vector<1x128xf32>
    %195 = math.tanh %189 : vector<1x128xf32>
    %196 = vector.extract_strided_slice %194 {offsets = [0, 32], sizes = [1, 32], strides = [1, 1]} : vector<1x128xf32> to vector<1x32xf32>
    %197 = arith.mulf %196, %181 : vector<1x32xf32>
    %198 = vector.extract_strided_slice %194 {offsets = [0, 0], sizes = [1, 32], strides = [1, 1]} : vector<1x128xf32> to vector<1x32xf32>
    %199 = vector.extract_strided_slice %195 {offsets = [0, 64], sizes = [1, 32], strides = [1, 1]} : vector<1x128xf32> to vector<1x32xf32>
    %200 = arith.mulf %198, %199 : vector<1x32xf32>
    %201 = arith.addf %197, %200 : vector<1x32xf32>
    %202 = vector.extract_strided_slice %194 {offsets = [0, 96], sizes = [1, 32], strides = [1, 1]} : vector<1x128xf32> to vector<1x32xf32>
    %203 = math.tanh %201 : vector<1x32xf32>
    %204 = arith.mulf %202, %203 : vector<1x32xf32>
    %c6 = arith.constant 6 : index
    %c0_47 = arith.constant 0 : index
    %205 = vector.load %arg7[%c6, %c0_47] : memref<24x32xf32, #tpu.memory_space<vmem>>, vector<1x32xf32>
    tpu.vector_store %arg7[%c6, %c0_47], %204 {strides = array<i32>} : memref<24x32xf32, #tpu.memory_space<vmem>>, vector<1x32xf32>,
    %206 = vector.extract_strided_slice %63 {offsets = [7, 0], sizes = [1, 128], strides = [1, 1]} : vector<24x128xf32> to vector<1x128xf32>
    %207 = arith.truncf %204 : vector<1x32xf32> to vector<1x32xbf16>
    %cst_48 = arith.constant dense<0.000000e+00> : vector<1x128xf32>
    %208 = tpu.matmul %207, %4, %cst_48 {dimension_numbers = #tpu.dot_dimension_numbers<[1], [0], [0], [1], [0, 0, 1, 1], [], []>} : vector<1x32xbf16>, vector<32x128xbf16>, vector<1x128xf32> -> vector<1x128xf32>
    %209 = arith.addf %206, %208 : vector<1x128xf32>
    %210 = arith.negf %209 : vector<1x128xf32>
    %211 = math.exp %210 : vector<1x128xf32>
    %cst_49 = arith.constant 1.000000e+00 : f32
    %212 = vector.broadcast %cst_49 : f32 to vector<1x128xf32>
    %213 = arith.addf %212, %211 : vector<1x128xf32>
    %214 = arith.divf %212, %213 : vector<1x128xf32>
    %215 = math.tanh %209 : vector<1x128xf32>
    %216 = vector.extract_strided_slice %214 {offsets = [0, 32], sizes = [1, 32], strides = [1, 1]} : vector<1x128xf32> to vector<1x32xf32>
    %217 = arith.mulf %216, %201 : vector<1x32xf32>
    %218 = vector.extract_strided_slice %214 {offsets = [0, 0], sizes = [1, 32], strides = [1, 1]} : vector<1x128xf32> to vector<1x32xf32>
    %219 = vector.extract_strided_slice %215 {offsets = [0, 64], sizes = [1, 32], strides = [1, 1]} : vector<1x128xf32> to vector<1x32xf32>
    %220 = arith.mulf %218, %219 : vector<1x32xf32>
    %221 = arith.addf %217, %220 : vector<1x32xf32>
    %222 = vector.extract_strided_slice %214 {offsets = [0, 96], sizes = [1, 32], strides = [1, 1]} : vector<1x128xf32> to vector<1x32xf32>
    %223 = math.tanh %221 : vector<1x32xf32>
    %224 = arith.mulf %222, %223 : vector<1x32xf32>
    %c7 = arith.constant 7 : index
    %c0_50 = arith.constant 0 : index
    %225 = vector.load %arg7[%c7, %c0_50] : memref<24x32xf32, #tpu.memory_space<vmem>>, vector<1x32xf32>
    tpu.vector_store %arg7[%c7, %c0_50], %224 {strides = array<i32>} : memref<24x32xf32, #tpu.memory_space<vmem>>, vector<1x32xf32>,
    %226 = vector.extract_strided_slice %63 {offsets = [8, 0], sizes = [1, 128], strides = [1, 1]} : vector<24x128xf32> to vector<1x128xf32>
    %227 = arith.truncf %224 : vector<1x32xf32> to vector<1x32xbf16>
    %cst_51 = arith.constant dense<0.000000e+00> : vector<1x128xf32>
    %228 = tpu.matmul %227, %4, %cst_51 {dimension_numbers = #tpu.dot_dimension_numbers<[1], [0], [0], [1], [0, 0, 1, 1], [], []>} : vector<1x32xbf16>, vector<32x128xbf16>, vector<1x128xf32> -> vector<1x128xf32>
    %229 = arith.addf %226, %228 : vector<1x128xf32>
    %230 = arith.negf %229 : vector<1x128xf32>
    %231 = math.exp %230 : vector<1x128xf32>
    %cst_52 = arith.constant 1.000000e+00 : f32
    %232 = vector.broadcast %cst_52 : f32 to vector<1x128xf32>
    %233 = arith.addf %232, %231 : vector<1x128xf32>
    %234 = arith.divf %232, %233 : vector<1x128xf32>
    %235 = math.tanh %229 : vector<1x128xf32>
    %236 = vector.extract_strided_slice %234 {offsets = [0, 32], sizes = [1, 32], strides = [1, 1]} : vector<1x128xf32> to vector<1x32xf32>
    %237 = arith.mulf %236, %221 : vector<1x32xf32>
    %238 = vector.extract_strided_slice %234 {offsets = [0, 0], sizes = [1, 32], strides = [1, 1]} : vector<1x128xf32> to vector<1x32xf32>
    %239 = vector.extract_strided_slice %235 {offsets = [0, 64], sizes = [1, 32], strides = [1, 1]} : vector<1x128xf32> to vector<1x32xf32>
    %240 = arith.mulf %238, %239 : vector<1x32xf32>
    %241 = arith.addf %237, %240 : vector<1x32xf32>
    %242 = vector.extract_strided_slice %234 {offsets = [0, 96], sizes = [1, 32], strides = [1, 1]} : vector<1x128xf32> to vector<1x32xf32>
    %243 = math.tanh %241 : vector<1x32xf32>
    %244 = arith.mulf %242, %243 : vector<1x32xf32>
    %c8 = arith.constant 8 : index
    %c0_53 = arith.constant 0 : index
    %245 = vector.load %arg7[%c8, %c0_53] : memref<24x32xf32, #tpu.memory_space<vmem>>, vector<1x32xf32>
    tpu.vector_store %arg7[%c8, %c0_53], %244 {strides = array<i32>} : memref<24x32xf32, #tpu.memory_space<vmem>>, vector<1x32xf32>,
    %246 = vector.extract_strided_slice %63 {offsets = [9, 0], sizes = [1, 128], strides = [1, 1]} : vector<24x128xf32> to vector<1x128xf32>
    %247 = arith.truncf %244 : vector<1x32xf32> to vector<1x32xbf16>
    %cst_54 = arith.constant dense<0.000000e+00> : vector<1x128xf32>
    %248 = tpu.matmul %247, %4, %cst_54 {dimension_numbers = #tpu.dot_dimension_numbers<[1], [0], [0], [1], [0, 0, 1, 1], [], []>} : vector<1x32xbf16>, vector<32x128xbf16>, vector<1x128xf32> -> vector<1x128xf32>
    %249 = arith.addf %246, %248 : vector<1x128xf32>
    %250 = arith.negf %249 : vector<1x128xf32>
    %251 = math.exp %250 : vector<1x128xf32>
    %cst_55 = arith.constant 1.000000e+00 : f32
    %252 = vector.broadcast %cst_55 : f32 to vector<1x128xf32>
    %253 = arith.addf %252, %251 : vector<1x128xf32>
    %254 = arith.divf %252, %253 : vector<1x128xf32>
    %255 = math.tanh %249 : vector<1x128xf32>
    %256 = vector.extract_strided_slice %254 {offsets = [0, 32], sizes = [1, 32], strides = [1, 1]} : vector<1x128xf32> to vector<1x32xf32>
    %257 = arith.mulf %256, %241 : vector<1x32xf32>
    %258 = vector.extract_strided_slice %254 {offsets = [0, 0], sizes = [1, 32], strides = [1, 1]} : vector<1x128xf32> to vector<1x32xf32>
    %259 = vector.extract_strided_slice %255 {offsets = [0, 64], sizes = [1, 32], strides = [1, 1]} : vector<1x128xf32> to vector<1x32xf32>
    %260 = arith.mulf %258, %259 : vector<1x32xf32>
    %261 = arith.addf %257, %260 : vector<1x32xf32>
    %262 = vector.extract_strided_slice %254 {offsets = [0, 96], sizes = [1, 32], strides = [1, 1]} : vector<1x128xf32> to vector<1x32xf32>
    %263 = math.tanh %261 : vector<1x32xf32>
    %264 = arith.mulf %262, %263 : vector<1x32xf32>
    %c9 = arith.constant 9 : index
    %c0_56 = arith.constant 0 : index
    %265 = vector.load %arg7[%c9, %c0_56] : memref<24x32xf32, #tpu.memory_space<vmem>>, vector<1x32xf32>
    tpu.vector_store %arg7[%c9, %c0_56], %264 {strides = array<i32>} : memref<24x32xf32, #tpu.memory_space<vmem>>, vector<1x32xf32>,
    %266 = vector.extract_strided_slice %63 {offsets = [10, 0], sizes = [1, 128], strides = [1, 1]} : vector<24x128xf32> to vector<1x128xf32>
    %267 = arith.truncf %264 : vector<1x32xf32> to vector<1x32xbf16>
    %cst_57 = arith.constant dense<0.000000e+00> : vector<1x128xf32>
    %268 = tpu.matmul %267, %4, %cst_57 {dimension_numbers = #tpu.dot_dimension_numbers<[1], [0], [0], [1], [0, 0, 1, 1], [], []>} : vector<1x32xbf16>, vector<32x128xbf16>, vector<1x128xf32> -> vector<1x128xf32>
    %269 = arith.addf %266, %268 : vector<1x128xf32>
    %270 = arith.negf %269 : vector<1x128xf32>
    %271 = math.exp %270 : vector<1x128xf32>
    %cst_58 = arith.constant 1.000000e+00 : f32
    %272 = vector.broadcast %cst_58 : f32 to vector<1x128xf32>
    %273 = arith.addf %272, %271 : vector<1x128xf32>
    %274 = arith.divf %272, %273 : vector<1x128xf32>
    %275 = math.tanh %269 : vector<1x128xf32>
    %276 = vector.extract_strided_slice %274 {offsets = [0, 32], sizes = [1, 32], strides = [1, 1]} : vector<1x128xf32> to vector<1x32xf32>
    %277 = arith.mulf %276, %261 : vector<1x32xf32>
    %278 = vector.extract_strided_slice %274 {offsets = [0, 0], sizes = [1, 32], strides = [1, 1]} : vector<1x128xf32> to vector<1x32xf32>
    %279 = vector.extract_strided_slice %275 {offsets = [0, 64], sizes = [1, 32], strides = [1, 1]} : vector<1x128xf32> to vector<1x32xf32>
    %280 = arith.mulf %278, %279 : vector<1x32xf32>
    %281 = arith.addf %277, %280 : vector<1x32xf32>
    %282 = vector.extract_strided_slice %274 {offsets = [0, 96], sizes = [1, 32], strides = [1, 1]} : vector<1x128xf32> to vector<1x32xf32>
    %283 = math.tanh %281 : vector<1x32xf32>
    %284 = arith.mulf %282, %283 : vector<1x32xf32>
    %c10 = arith.constant 10 : index
    %c0_59 = arith.constant 0 : index
    %285 = vector.load %arg7[%c10, %c0_59] : memref<24x32xf32, #tpu.memory_space<vmem>>, vector<1x32xf32>
    tpu.vector_store %arg7[%c10, %c0_59], %284 {strides = array<i32>} : memref<24x32xf32, #tpu.memory_space<vmem>>, vector<1x32xf32>,
    %286 = vector.extract_strided_slice %63 {offsets = [11, 0], sizes = [1, 128], strides = [1, 1]} : vector<24x128xf32> to vector<1x128xf32>
    %287 = arith.truncf %284 : vector<1x32xf32> to vector<1x32xbf16>
    %cst_60 = arith.constant dense<0.000000e+00> : vector<1x128xf32>
    %288 = tpu.matmul %287, %4, %cst_60 {dimension_numbers = #tpu.dot_dimension_numbers<[1], [0], [0], [1], [0, 0, 1, 1], [], []>} : vector<1x32xbf16>, vector<32x128xbf16>, vector<1x128xf32> -> vector<1x128xf32>
    %289 = arith.addf %286, %288 : vector<1x128xf32>
    %290 = arith.negf %289 : vector<1x128xf32>
    %291 = math.exp %290 : vector<1x128xf32>
    %cst_61 = arith.constant 1.000000e+00 : f32
    %292 = vector.broadcast %cst_61 : f32 to vector<1x128xf32>
    %293 = arith.addf %292, %291 : vector<1x128xf32>
    %294 = arith.divf %292, %293 : vector<1x128xf32>
    %295 = math.tanh %289 : vector<1x128xf32>
    %296 = vector.extract_strided_slice %294 {offsets = [0, 32], sizes = [1, 32], strides = [1, 1]} : vector<1x128xf32> to vector<1x32xf32>
    %297 = arith.mulf %296, %281 : vector<1x32xf32>
    %298 = vector.extract_strided_slice %294 {offsets = [0, 0], sizes = [1, 32], strides = [1, 1]} : vector<1x128xf32> to vector<1x32xf32>
    %299 = vector.extract_strided_slice %295 {offsets = [0, 64], sizes = [1, 32], strides = [1, 1]} : vector<1x128xf32> to vector<1x32xf32>
    %300 = arith.mulf %298, %299 : vector<1x32xf32>
    %301 = arith.addf %297, %300 : vector<1x32xf32>
    %302 = vector.extract_strided_slice %294 {offsets = [0, 96], sizes = [1, 32], strides = [1, 1]} : vector<1x128xf32> to vector<1x32xf32>
    %303 = math.tanh %301 : vector<1x32xf32>
    %304 = arith.mulf %302, %303 : vector<1x32xf32>
    %c11 = arith.constant 11 : index
    %c0_62 = arith.constant 0 : index
    %305 = vector.load %arg7[%c11, %c0_62] : memref<24x32xf32, #tpu.memory_space<vmem>>, vector<1x32xf32>
    tpu.vector_store %arg7[%c11, %c0_62], %304 {strides = array<i32>} : memref<24x32xf32, #tpu.memory_space<vmem>>, vector<1x32xf32>,
    %306 = vector.extract_strided_slice %63 {offsets = [12, 0], sizes = [1, 128], strides = [1, 1]} : vector<24x128xf32> to vector<1x128xf32>
    %307 = arith.truncf %304 : vector<1x32xf32> to vector<1x32xbf16>
    %cst_63 = arith.constant dense<0.000000e+00> : vector<1x128xf32>
    %308 = tpu.matmul %307, %4, %cst_63 {dimension_numbers = #tpu.dot_dimension_numbers<[1], [0], [0], [1], [0, 0, 1, 1], [], []>} : vector<1x32xbf16>, vector<32x128xbf16>, vector<1x128xf32> -> vector<1x128xf32>
    %309 = arith.addf %306, %308 : vector<1x128xf32>
    %310 = arith.negf %309 : vector<1x128xf32>
    %311 = math.exp %310 : vector<1x128xf32>
    %cst_64 = arith.constant 1.000000e+00 : f32
    %312 = vector.broadcast %cst_64 : f32 to vector<1x128xf32>
    %313 = arith.addf %312, %311 : vector<1x128xf32>
    %314 = arith.divf %312, %313 : vector<1x128xf32>
    %315 = math.tanh %309 : vector<1x128xf32>
    %316 = vector.extract_strided_slice %314 {offsets = [0, 32], sizes = [1, 32], strides = [1, 1]} : vector<1x128xf32> to vector<1x32xf32>
    %317 = arith.mulf %316, %301 : vector<1x32xf32>
    %318 = vector.extract_strided_slice %314 {offsets = [0, 0], sizes = [1, 32], strides = [1, 1]} : vector<1x128xf32> to vector<1x32xf32>
    %319 = vector.extract_strided_slice %315 {offsets = [0, 64], sizes = [1, 32], strides = [1, 1]} : vector<1x128xf32> to vector<1x32xf32>
    %320 = arith.mulf %318, %319 : vector<1x32xf32>
    %321 = arith.addf %317, %320 : vector<1x32xf32>
    %322 = vector.extract_strided_slice %314 {offsets = [0, 96], sizes = [1, 32], strides = [1, 1]} : vector<1x128xf32> to vector<1x32xf32>
    %323 = math.tanh %321 : vector<1x32xf32>
    %324 = arith.mulf %322, %323 : vector<1x32xf32>
    %c12 = arith.constant 12 : index
    %c0_65 = arith.constant 0 : index
    %325 = vector.load %arg7[%c12, %c0_65] : memref<24x32xf32, #tpu.memory_space<vmem>>, vector<1x32xf32>
    tpu.vector_store %arg7[%c12, %c0_65], %324 {strides = array<i32>} : memref<24x32xf32, #tpu.memory_space<vmem>>, vector<1x32xf32>,
    %326 = vector.extract_strided_slice %63 {offsets = [13, 0], sizes = [1, 128], strides = [1, 1]} : vector<24x128xf32> to vector<1x128xf32>
    %327 = arith.truncf %324 : vector<1x32xf32> to vector<1x32xbf16>
    %cst_66 = arith.constant dense<0.000000e+00> : vector<1x128xf32>
    %328 = tpu.matmul %327, %4, %cst_66 {dimension_numbers = #tpu.dot_dimension_numbers<[1], [0], [0], [1], [0, 0, 1, 1], [], []>} : vector<1x32xbf16>, vector<32x128xbf16>, vector<1x128xf32> -> vector<1x128xf32>
    %329 = arith.addf %326, %328 : vector<1x128xf32>
    %330 = arith.negf %329 : vector<1x128xf32>
    %331 = math.exp %330 : vector<1x128xf32>
    %cst_67 = arith.constant 1.000000e+00 : f32
    %332 = vector.broadcast %cst_67 : f32 to vector<1x128xf32>
    %333 = arith.addf %332, %331 : vector<1x128xf32>
    %334 = arith.divf %332, %333 : vector<1x128xf32>
    %335 = math.tanh %329 : vector<1x128xf32>
    %336 = vector.extract_strided_slice %334 {offsets = [0, 32], sizes = [1, 32], strides = [1, 1]} : vector<1x128xf32> to vector<1x32xf32>
    %337 = arith.mulf %336, %321 : vector<1x32xf32>
    %338 = vector.extract_strided_slice %334 {offsets = [0, 0], sizes = [1, 32], strides = [1, 1]} : vector<1x128xf32> to vector<1x32xf32>
    %339 = vector.extract_strided_slice %335 {offsets = [0, 64], sizes = [1, 32], strides = [1, 1]} : vector<1x128xf32> to vector<1x32xf32>
    %340 = arith.mulf %338, %339 : vector<1x32xf32>
    %341 = arith.addf %337, %340 : vector<1x32xf32>
    %342 = vector.extract_strided_slice %334 {offsets = [0, 96], sizes = [1, 32], strides = [1, 1]} : vector<1x128xf32> to vector<1x32xf32>
    %343 = math.tanh %341 : vector<1x32xf32>
    %344 = arith.mulf %342, %343 : vector<1x32xf32>
    %c13 = arith.constant 13 : index
    %c0_68 = arith.constant 0 : index
    %345 = vector.load %arg7[%c13, %c0_68] : memref<24x32xf32, #tpu.memory_space<vmem>>, vector<1x32xf32>
    tpu.vector_store %arg7[%c13, %c0_68], %344 {strides = array<i32>} : memref<24x32xf32, #tpu.memory_space<vmem>>, vector<1x32xf32>,
    %346 = vector.extract_strided_slice %63 {offsets = [14, 0], sizes = [1, 128], strides = [1, 1]} : vector<24x128xf32> to vector<1x128xf32>
    %347 = arith.truncf %344 : vector<1x32xf32> to vector<1x32xbf16>
    %cst_69 = arith.constant dense<0.000000e+00> : vector<1x128xf32>
    %348 = tpu.matmul %347, %4, %cst_69 {dimension_numbers = #tpu.dot_dimension_numbers<[1], [0], [0], [1], [0, 0, 1, 1], [], []>} : vector<1x32xbf16>, vector<32x128xbf16>, vector<1x128xf32> -> vector<1x128xf32>
    %349 = arith.addf %346, %348 : vector<1x128xf32>
    %350 = arith.negf %349 : vector<1x128xf32>
    %351 = math.exp %350 : vector<1x128xf32>
    %cst_70 = arith.constant 1.000000e+00 : f32
    %352 = vector.broadcast %cst_70 : f32 to vector<1x128xf32>
    %353 = arith.addf %352, %351 : vector<1x128xf32>
    %354 = arith.divf %352, %353 : vector<1x128xf32>
    %355 = math.tanh %349 : vector<1x128xf32>
    %356 = vector.extract_strided_slice %354 {offsets = [0, 32], sizes = [1, 32], strides = [1, 1]} : vector<1x128xf32> to vector<1x32xf32>
    %357 = arith.mulf %356, %341 : vector<1x32xf32>
    %358 = vector.extract_strided_slice %354 {offsets = [0, 0], sizes = [1, 32], strides = [1, 1]} : vector<1x128xf32> to vector<1x32xf32>
    %359 = vector.extract_strided_slice %355 {offsets = [0, 64], sizes = [1, 32], strides = [1, 1]} : vector<1x128xf32> to vector<1x32xf32>
    %360 = arith.mulf %358, %359 : vector<1x32xf32>
    %361 = arith.addf %357, %360 : vector<1x32xf32>
    %362 = vector.extract_strided_slice %354 {offsets = [0, 96], sizes = [1, 32], strides = [1, 1]} : vector<1x128xf32> to vector<1x32xf32>
    %363 = math.tanh %361 : vector<1x32xf32>
    %364 = arith.mulf %362, %363 : vector<1x32xf32>
    %c14 = arith.constant 14 : index
    %c0_71 = arith.constant 0 : index
    %365 = vector.load %arg7[%c14, %c0_71] : memref<24x32xf32, #tpu.memory_space<vmem>>, vector<1x32xf32>
    tpu.vector_store %arg7[%c14, %c0_71], %364 {strides = array<i32>} : memref<24x32xf32, #tpu.memory_space<vmem>>, vector<1x32xf32>,
    %366 = vector.extract_strided_slice %63 {offsets = [15, 0], sizes = [1, 128], strides = [1, 1]} : vector<24x128xf32> to vector<1x128xf32>
    %367 = arith.truncf %364 : vector<1x32xf32> to vector<1x32xbf16>
    %cst_72 = arith.constant dense<0.000000e+00> : vector<1x128xf32>
    %368 = tpu.matmul %367, %4, %cst_72 {dimension_numbers = #tpu.dot_dimension_numbers<[1], [0], [0], [1], [0, 0, 1, 1], [], []>} : vector<1x32xbf16>, vector<32x128xbf16>, vector<1x128xf32> -> vector<1x128xf32>
    %369 = arith.addf %366, %368 : vector<1x128xf32>
    %370 = arith.negf %369 : vector<1x128xf32>
    %371 = math.exp %370 : vector<1x128xf32>
    %cst_73 = arith.constant 1.000000e+00 : f32
    %372 = vector.broadcast %cst_73 : f32 to vector<1x128xf32>
    %373 = arith.addf %372, %371 : vector<1x128xf32>
    %374 = arith.divf %372, %373 : vector<1x128xf32>
    %375 = math.tanh %369 : vector<1x128xf32>
    %376 = vector.extract_strided_slice %374 {offsets = [0, 32], sizes = [1, 32], strides = [1, 1]} : vector<1x128xf32> to vector<1x32xf32>
    %377 = arith.mulf %376, %361 : vector<1x32xf32>
    %378 = vector.extract_strided_slice %374 {offsets = [0, 0], sizes = [1, 32], strides = [1, 1]} : vector<1x128xf32> to vector<1x32xf32>
    %379 = vector.extract_strided_slice %375 {offsets = [0, 64], sizes = [1, 32], strides = [1, 1]} : vector<1x128xf32> to vector<1x32xf32>
    %380 = arith.mulf %378, %379 : vector<1x32xf32>
    %381 = arith.addf %377, %380 : vector<1x32xf32>
    %382 = vector.extract_strided_slice %374 {offsets = [0, 96], sizes = [1, 32], strides = [1, 1]} : vector<1x128xf32> to vector<1x32xf32>
    %383 = math.tanh %381 : vector<1x32xf32>
    %384 = arith.mulf %382, %383 : vector<1x32xf32>
    %c15 = arith.constant 15 : index
    %c0_74 = arith.constant 0 : index
    %385 = vector.load %arg7[%c15, %c0_74] : memref<24x32xf32, #tpu.memory_space<vmem>>, vector<1x32xf32>
    tpu.vector_store %arg7[%c15, %c0_74], %384 {strides = array<i32>} : memref<24x32xf32, #tpu.memory_space<vmem>>, vector<1x32xf32>,
    %386 = vector.extract_strided_slice %63 {offsets = [16, 0], sizes = [1, 128], strides = [1, 1]} : vector<24x128xf32> to vector<1x128xf32>
    %387 = arith.truncf %384 : vector<1x32xf32> to vector<1x32xbf16>
    %cst_75 = arith.constant dense<0.000000e+00> : vector<1x128xf32>
    %388 = tpu.matmul %387, %4, %cst_75 {dimension_numbers = #tpu.dot_dimension_numbers<[1], [0], [0], [1], [0, 0, 1, 1], [], []>} : vector<1x32xbf16>, vector<32x128xbf16>, vector<1x128xf32> -> vector<1x128xf32>
    %389 = arith.addf %386, %388 : vector<1x128xf32>
    %390 = arith.negf %389 : vector<1x128xf32>
    %391 = math.exp %390 : vector<1x128xf32>
    %cst_76 = arith.constant 1.000000e+00 : f32
    %392 = vector.broadcast %cst_76 : f32 to vector<1x128xf32>
    %393 = arith.addf %392, %391 : vector<1x128xf32>
    %394 = arith.divf %392, %393 : vector<1x128xf32>
    %395 = math.tanh %389 : vector<1x128xf32>
    %396 = vector.extract_strided_slice %394 {offsets = [0, 32], sizes = [1, 32], strides = [1, 1]} : vector<1x128xf32> to vector<1x32xf32>
    %397 = arith.mulf %396, %381 : vector<1x32xf32>
    %398 = vector.extract_strided_slice %394 {offsets = [0, 0], sizes = [1, 32], strides = [1, 1]} : vector<1x128xf32> to vector<1x32xf32>
    %399 = vector.extract_strided_slice %395 {offsets = [0, 64], sizes = [1, 32], strides = [1, 1]} : vector<1x128xf32> to vector<1x32xf32>
    %400 = arith.mulf %398, %399 : vector<1x32xf32>
    %401 = arith.addf %397, %400 : vector<1x32xf32>
    %402 = vector.extract_strided_slice %394 {offsets = [0, 96], sizes = [1, 32], strides = [1, 1]} : vector<1x128xf32> to vector<1x32xf32>
    %403 = math.tanh %401 : vector<1x32xf32>
    %404 = arith.mulf %402, %403 : vector<1x32xf32>
    %c16 = arith.constant 16 : index
    %c0_77 = arith.constant 0 : index
    %405 = vector.load %arg7[%c16, %c0_77] : memref<24x32xf32, #tpu.memory_space<vmem>>, vector<1x32xf32>
    tpu.vector_store %arg7[%c16, %c0_77], %404 {strides = array<i32>} : memref<24x32xf32, #tpu.memory_space<vmem>>, vector<1x32xf32>,
    %406 = vector.extract_strided_slice %63 {offsets = [17, 0], sizes = [1, 128], strides = [1, 1]} : vector<24x128xf32> to vector<1x128xf32>
    %407 = arith.truncf %404 : vector<1x32xf32> to vector<1x32xbf16>
    %cst_78 = arith.constant dense<0.000000e+00> : vector<1x128xf32>
    %408 = tpu.matmul %407, %4, %cst_78 {dimension_numbers = #tpu.dot_dimension_numbers<[1], [0], [0], [1], [0, 0, 1, 1], [], []>} : vector<1x32xbf16>, vector<32x128xbf16>, vector<1x128xf32> -> vector<1x128xf32>
    %409 = arith.addf %406, %408 : vector<1x128xf32>
    %410 = arith.negf %409 : vector<1x128xf32>
    %411 = math.exp %410 : vector<1x128xf32>
    %cst_79 = arith.constant 1.000000e+00 : f32
    %412 = vector.broadcast %cst_79 : f32 to vector<1x128xf32>
    %413 = arith.addf %412, %411 : vector<1x128xf32>
    %414 = arith.divf %412, %413 : vector<1x128xf32>
    %415 = math.tanh %409 : vector<1x128xf32>
    %416 = vector.extract_strided_slice %414 {offsets = [0, 32], sizes = [1, 32], strides = [1, 1]} : vector<1x128xf32> to vector<1x32xf32>
    %417 = arith.mulf %416, %401 : vector<1x32xf32>
    %418 = vector.extract_strided_slice %414 {offsets = [0, 0], sizes = [1, 32], strides = [1, 1]} : vector<1x128xf32> to vector<1x32xf32>
    %419 = vector.extract_strided_slice %415 {offsets = [0, 64], sizes = [1, 32], strides = [1, 1]} : vector<1x128xf32> to vector<1x32xf32>
    %420 = arith.mulf %418, %419 : vector<1x32xf32>
    %421 = arith.addf %417, %420 : vector<1x32xf32>
    %422 = vector.extract_strided_slice %414 {offsets = [0, 96], sizes = [1, 32], strides = [1, 1]} : vector<1x128xf32> to vector<1x32xf32>
    %423 = math.tanh %421 : vector<1x32xf32>
    %424 = arith.mulf %422, %423 : vector<1x32xf32>
    %c17 = arith.constant 17 : index
    %c0_80 = arith.constant 0 : index
    %425 = vector.load %arg7[%c17, %c0_80] : memref<24x32xf32, #tpu.memory_space<vmem>>, vector<1x32xf32>
    tpu.vector_store %arg7[%c17, %c0_80], %424 {strides = array<i32>} : memref<24x32xf32, #tpu.memory_space<vmem>>, vector<1x32xf32>,
    %426 = vector.extract_strided_slice %63 {offsets = [18, 0], sizes = [1, 128], strides = [1, 1]} : vector<24x128xf32> to vector<1x128xf32>
    %427 = arith.truncf %424 : vector<1x32xf32> to vector<1x32xbf16>
    %cst_81 = arith.constant dense<0.000000e+00> : vector<1x128xf32>
    %428 = tpu.matmul %427, %4, %cst_81 {dimension_numbers = #tpu.dot_dimension_numbers<[1], [0], [0], [1], [0, 0, 1, 1], [], []>} : vector<1x32xbf16>, vector<32x128xbf16>, vector<1x128xf32> -> vector<1x128xf32>
    %429 = arith.addf %426, %428 : vector<1x128xf32>
    %430 = arith.negf %429 : vector<1x128xf32>
    %431 = math.exp %430 : vector<1x128xf32>
    %cst_82 = arith.constant 1.000000e+00 : f32
    %432 = vector.broadcast %cst_82 : f32 to vector<1x128xf32>
    %433 = arith.addf %432, %431 : vector<1x128xf32>
    %434 = arith.divf %432, %433 : vector<1x128xf32>
    %435 = math.tanh %429 : vector<1x128xf32>
    %436 = vector.extract_strided_slice %434 {offsets = [0, 32], sizes = [1, 32], strides = [1, 1]} : vector<1x128xf32> to vector<1x32xf32>
    %437 = arith.mulf %436, %421 : vector<1x32xf32>
    %438 = vector.extract_strided_slice %434 {offsets = [0, 0], sizes = [1, 32], strides = [1, 1]} : vector<1x128xf32> to vector<1x32xf32>
    %439 = vector.extract_strided_slice %435 {offsets = [0, 64], sizes = [1, 32], strides = [1, 1]} : vector<1x128xf32> to vector<1x32xf32>
    %440 = arith.mulf %438, %439 : vector<1x32xf32>
    %441 = arith.addf %437, %440 : vector<1x32xf32>
    %442 = vector.extract_strided_slice %434 {offsets = [0, 96], sizes = [1, 32], strides = [1, 1]} : vector<1x128xf32> to vector<1x32xf32>
    %443 = math.tanh %441 : vector<1x32xf32>
    %444 = arith.mulf %442, %443 : vector<1x32xf32>
    %c18 = arith.constant 18 : index
    %c0_83 = arith.constant 0 : index
    %445 = vector.load %arg7[%c18, %c0_83] : memref<24x32xf32, #tpu.memory_space<vmem>>, vector<1x32xf32>
    tpu.vector_store %arg7[%c18, %c0_83], %444 {strides = array<i32>} : memref<24x32xf32, #tpu.memory_space<vmem>>, vector<1x32xf32>,
    %446 = vector.extract_strided_slice %63 {offsets = [19, 0], sizes = [1, 128], strides = [1, 1]} : vector<24x128xf32> to vector<1x128xf32>
    %447 = arith.truncf %444 : vector<1x32xf32> to vector<1x32xbf16>
    %cst_84 = arith.constant dense<0.000000e+00> : vector<1x128xf32>
    %448 = tpu.matmul %447, %4, %cst_84 {dimension_numbers = #tpu.dot_dimension_numbers<[1], [0], [0], [1], [0, 0, 1, 1], [], []>} : vector<1x32xbf16>, vector<32x128xbf16>, vector<1x128xf32> -> vector<1x128xf32>
    %449 = arith.addf %446, %448 : vector<1x128xf32>
    %450 = arith.negf %449 : vector<1x128xf32>
    %451 = math.exp %450 : vector<1x128xf32>
    %cst_85 = arith.constant 1.000000e+00 : f32
    %452 = vector.broadcast %cst_85 : f32 to vector<1x128xf32>
    %453 = arith.addf %452, %451 : vector<1x128xf32>
    %454 = arith.divf %452, %453 : vector<1x128xf32>
    %455 = math.tanh %449 : vector<1x128xf32>
    %456 = vector.extract_strided_slice %454 {offsets = [0, 32], sizes = [1, 32], strides = [1, 1]} : vector<1x128xf32> to vector<1x32xf32>
    %457 = arith.mulf %456, %441 : vector<1x32xf32>
    %458 = vector.extract_strided_slice %454 {offsets = [0, 0], sizes = [1, 32], strides = [1, 1]} : vector<1x128xf32> to vector<1x32xf32>
    %459 = vector.extract_strided_slice %455 {offsets = [0, 64], sizes = [1, 32], strides = [1, 1]} : vector<1x128xf32> to vector<1x32xf32>
    %460 = arith.mulf %458, %459 : vector<1x32xf32>
    %461 = arith.addf %457, %460 : vector<1x32xf32>
    %462 = vector.extract_strided_slice %454 {offsets = [0, 96], sizes = [1, 32], strides = [1, 1]} : vector<1x128xf32> to vector<1x32xf32>
    %463 = math.tanh %461 : vector<1x32xf32>
    %464 = arith.mulf %462, %463 : vector<1x32xf32>
    %c19 = arith.constant 19 : index
    %c0_86 = arith.constant 0 : index
    %465 = vector.load %arg7[%c19, %c0_86] : memref<24x32xf32, #tpu.memory_space<vmem>>, vector<1x32xf32>
    tpu.vector_store %arg7[%c19, %c0_86], %464 {strides = array<i32>} : memref<24x32xf32, #tpu.memory_space<vmem>>, vector<1x32xf32>,
    %466 = vector.extract_strided_slice %63 {offsets = [20, 0], sizes = [1, 128], strides = [1, 1]} : vector<24x128xf32> to vector<1x128xf32>
    %467 = arith.truncf %464 : vector<1x32xf32> to vector<1x32xbf16>
    %cst_87 = arith.constant dense<0.000000e+00> : vector<1x128xf32>
    %468 = tpu.matmul %467, %4, %cst_87 {dimension_numbers = #tpu.dot_dimension_numbers<[1], [0], [0], [1], [0, 0, 1, 1], [], []>} : vector<1x32xbf16>, vector<32x128xbf16>, vector<1x128xf32> -> vector<1x128xf32>
    %469 = arith.addf %466, %468 : vector<1x128xf32>
    %470 = arith.negf %469 : vector<1x128xf32>
    %471 = math.exp %470 : vector<1x128xf32>
    %cst_88 = arith.constant 1.000000e+00 : f32
    %472 = vector.broadcast %cst_88 : f32 to vector<1x128xf32>
    %473 = arith.addf %472, %471 : vector<1x128xf32>
    %474 = arith.divf %472, %473 : vector<1x128xf32>
    %475 = math.tanh %469 : vector<1x128xf32>
    %476 = vector.extract_strided_slice %474 {offsets = [0, 32], sizes = [1, 32], strides = [1, 1]} : vector<1x128xf32> to vector<1x32xf32>
    %477 = arith.mulf %476, %461 : vector<1x32xf32>
    %478 = vector.extract_strided_slice %474 {offsets = [0, 0], sizes = [1, 32], strides = [1, 1]} : vector<1x128xf32> to vector<1x32xf32>
    %479 = vector.extract_strided_slice %475 {offsets = [0, 64], sizes = [1, 32], strides = [1, 1]} : vector<1x128xf32> to vector<1x32xf32>
    %480 = arith.mulf %478, %479 : vector<1x32xf32>
    %481 = arith.addf %477, %480 : vector<1x32xf32>
    %482 = vector.extract_strided_slice %474 {offsets = [0, 96], sizes = [1, 32], strides = [1, 1]} : vector<1x128xf32> to vector<1x32xf32>
    %483 = math.tanh %481 : vector<1x32xf32>
    %484 = arith.mulf %482, %483 : vector<1x32xf32>
    %c20 = arith.constant 20 : index
    %c0_89 = arith.constant 0 : index
    %485 = vector.load %arg7[%c20, %c0_89] : memref<24x32xf32, #tpu.memory_space<vmem>>, vector<1x32xf32>
    tpu.vector_store %arg7[%c20, %c0_89], %484 {strides = array<i32>} : memref<24x32xf32, #tpu.memory_space<vmem>>, vector<1x32xf32>,
    %486 = vector.extract_strided_slice %63 {offsets = [21, 0], sizes = [1, 128], strides = [1, 1]} : vector<24x128xf32> to vector<1x128xf32>
    %487 = arith.truncf %484 : vector<1x32xf32> to vector<1x32xbf16>
    %cst_90 = arith.constant dense<0.000000e+00> : vector<1x128xf32>
    %488 = tpu.matmul %487, %4, %cst_90 {dimension_numbers = #tpu.dot_dimension_numbers<[1], [0], [0], [1], [0, 0, 1, 1], [], []>} : vector<1x32xbf16>, vector<32x128xbf16>, vector<1x128xf32> -> vector<1x128xf32>
    %489 = arith.addf %486, %488 : vector<1x128xf32>
    %490 = arith.negf %489 : vector<1x128xf32>
    %491 = math.exp %490 : vector<1x128xf32>
    %cst_91 = arith.constant 1.000000e+00 : f32
    %492 = vector.broadcast %cst_91 : f32 to vector<1x128xf32>
    %493 = arith.addf %492, %491 : vector<1x128xf32>
    %494 = arith.divf %492, %493 : vector<1x128xf32>
    %495 = math.tanh %489 : vector<1x128xf32>
    %496 = vector.extract_strided_slice %494 {offsets = [0, 32], sizes = [1, 32], strides = [1, 1]} : vector<1x128xf32> to vector<1x32xf32>
    %497 = arith.mulf %496, %481 : vector<1x32xf32>
    %498 = vector.extract_strided_slice %494 {offsets = [0, 0], sizes = [1, 32], strides = [1, 1]} : vector<1x128xf32> to vector<1x32xf32>
    %499 = vector.extract_strided_slice %495 {offsets = [0, 64], sizes = [1, 32], strides = [1, 1]} : vector<1x128xf32> to vector<1x32xf32>
    %500 = arith.mulf %498, %499 : vector<1x32xf32>
    %501 = arith.addf %497, %500 : vector<1x32xf32>
    %502 = vector.extract_strided_slice %494 {offsets = [0, 96], sizes = [1, 32], strides = [1, 1]} : vector<1x128xf32> to vector<1x32xf32>
    %503 = math.tanh %501 : vector<1x32xf32>
    %504 = arith.mulf %502, %503 : vector<1x32xf32>
    %c21 = arith.constant 21 : index
    %c0_92 = arith.constant 0 : index
    %505 = vector.load %arg7[%c21, %c0_92] : memref<24x32xf32, #tpu.memory_space<vmem>>, vector<1x32xf32>
    tpu.vector_store %arg7[%c21, %c0_92], %504 {strides = array<i32>} : memref<24x32xf32, #tpu.memory_space<vmem>>, vector<1x32xf32>,
    %506 = vector.extract_strided_slice %63 {offsets = [22, 0], sizes = [1, 128], strides = [1, 1]} : vector<24x128xf32> to vector<1x128xf32>
    %507 = arith.truncf %504 : vector<1x32xf32> to vector<1x32xbf16>
    %cst_93 = arith.constant dense<0.000000e+00> : vector<1x128xf32>
    %508 = tpu.matmul %507, %4, %cst_93 {dimension_numbers = #tpu.dot_dimension_numbers<[1], [0], [0], [1], [0, 0, 1, 1], [], []>} : vector<1x32xbf16>, vector<32x128xbf16>, vector<1x128xf32> -> vector<1x128xf32>
    %509 = arith.addf %506, %508 : vector<1x128xf32>
    %510 = arith.negf %509 : vector<1x128xf32>
    %511 = math.exp %510 : vector<1x128xf32>
    %cst_94 = arith.constant 1.000000e+00 : f32
    %512 = vector.broadcast %cst_94 : f32 to vector<1x128xf32>
    %513 = arith.addf %512, %511 : vector<1x128xf32>
    %514 = arith.divf %512, %513 : vector<1x128xf32>
    %515 = math.tanh %509 : vector<1x128xf32>
    %516 = vector.extract_strided_slice %514 {offsets = [0, 32], sizes = [1, 32], strides = [1, 1]} : vector<1x128xf32> to vector<1x32xf32>
    %517 = arith.mulf %516, %501 : vector<1x32xf32>
    %518 = vector.extract_strided_slice %514 {offsets = [0, 0], sizes = [1, 32], strides = [1, 1]} : vector<1x128xf32> to vector<1x32xf32>
    %519 = vector.extract_strided_slice %515 {offsets = [0, 64], sizes = [1, 32], strides = [1, 1]} : vector<1x128xf32> to vector<1x32xf32>
    %520 = arith.mulf %518, %519 : vector<1x32xf32>
    %521 = arith.addf %517, %520 : vector<1x32xf32>
    %522 = vector.extract_strided_slice %514 {offsets = [0, 96], sizes = [1, 32], strides = [1, 1]} : vector<1x128xf32> to vector<1x32xf32>
    %523 = math.tanh %521 : vector<1x32xf32>
    %524 = arith.mulf %522, %523 : vector<1x32xf32>
    %c22 = arith.constant 22 : index
    %c0_95 = arith.constant 0 : index
    %525 = vector.load %arg7[%c22, %c0_95] : memref<24x32xf32, #tpu.memory_space<vmem>>, vector<1x32xf32>
    tpu.vector_store %arg7[%c22, %c0_95], %524 {strides = array<i32>} : memref<24x32xf32, #tpu.memory_space<vmem>>, vector<1x32xf32>,
    %526 = vector.extract_strided_slice %63 {offsets = [23, 0], sizes = [1, 128], strides = [1, 1]} : vector<24x128xf32> to vector<1x128xf32>
    %527 = arith.truncf %524 : vector<1x32xf32> to vector<1x32xbf16>
    %cst_96 = arith.constant dense<0.000000e+00> : vector<1x128xf32>
    %528 = tpu.matmul %527, %4, %cst_96 {dimension_numbers = #tpu.dot_dimension_numbers<[1], [0], [0], [1], [0, 0, 1, 1], [], []>} : vector<1x32xbf16>, vector<32x128xbf16>, vector<1x128xf32> -> vector<1x128xf32>
    %529 = arith.addf %526, %528 : vector<1x128xf32>
    %530 = arith.negf %529 : vector<1x128xf32>
    %531 = math.exp %530 : vector<1x128xf32>
    %cst_97 = arith.constant 1.000000e+00 : f32
    %532 = vector.broadcast %cst_97 : f32 to vector<1x128xf32>
    %533 = arith.addf %532, %531 : vector<1x128xf32>
    %534 = arith.divf %532, %533 : vector<1x128xf32>
    %535 = math.tanh %529 : vector<1x128xf32>
    %536 = vector.extract_strided_slice %534 {offsets = [0, 32], sizes = [1, 32], strides = [1, 1]} : vector<1x128xf32> to vector<1x32xf32>
    %537 = arith.mulf %536, %521 : vector<1x32xf32>
    %538 = vector.extract_strided_slice %534 {offsets = [0, 0], sizes = [1, 32], strides = [1, 1]} : vector<1x128xf32> to vector<1x32xf32>
    %539 = vector.extract_strided_slice %535 {offsets = [0, 64], sizes = [1, 32], strides = [1, 1]} : vector<1x128xf32> to vector<1x32xf32>
    %540 = arith.mulf %538, %539 : vector<1x32xf32>
    %541 = arith.addf %537, %540 : vector<1x32xf32>
    %542 = vector.extract_strided_slice %534 {offsets = [0, 96], sizes = [1, 32], strides = [1, 1]} : vector<1x128xf32> to vector<1x32xf32>
    %543 = math.tanh %541 : vector<1x32xf32>
    %544 = arith.mulf %542, %543 : vector<1x32xf32>
    %c23 = arith.constant 23 : index
    %c0_98 = arith.constant 0 : index
    %545 = vector.load %arg7[%c23, %c0_98] : memref<24x32xf32, #tpu.memory_space<vmem>>, vector<1x32xf32>
    tpu.vector_store %arg7[%c23, %c0_98], %544 {strides = array<i32>} : memref<24x32xf32, #tpu.memory_space<vmem>>, vector<1x32xf32>,
    %c0_99 = arith.constant 0 : index
    %c0_100 = arith.constant 0 : index
    %546 = vector.load %arg7[%c0_99, %c0_100] : memref<24x32xf32, #tpu.memory_space<vmem>>, vector<24x32xf32>
    %cst_101 = arith.constant dense<0.000000e+00> : vector<1x24xf32>
    %547 = tpu.matmul %8, %546, %cst_101 {dimension_numbers = #tpu.dot_dimension_numbers<[1], [1], [0], [0], [0, 0, 1, 0], [], []>} : vector<1x32xf32>, vector<24x32xf32>, vector<1x24xf32> -> vector<1x24xf32>
    %548 = vector.broadcast %9 : vector<1x1xf32> to vector<1x24xf32>
    %549 = arith.addf %547, %548 : vector<1x24xf32>
    %c0_102 = arith.constant 0 : index
    %c0_103 = arith.constant 0 : index
    %550 = vector.load %arg6[%c0_102, %c0_103] : memref<1x24xf32, #tpu.memory_space<vmem>>, vector<1x24xf32>
    tpu.vector_store %arg6[%c0_102, %c0_103], %549 {strides = array<i32>} : memref<1x24xf32, #tpu.memory_space<vmem>>, vector<1x24xf32>,
    return
  }
}

</mosaic_0001>

<llo_original>
// kernel: edge_gcn_lstm_forward.1
$region0: #{edge_gcn_lstm_forward.1}
  #allocation0 [shape = 'u32[]', space=smem, size = 0x4, offset = 0x4, fixed_abs, tag = 'smem constant byte address 0x4 - core index']
  #allocation1 [shape = 'u32[144,128]{1,0:T(1,128)}', space=vmem, size = 0x12000, scoped, tag = 'internal scratch']
  #allocation2 [shape = 'f32[24,32]{1,0:T(8,128)}', space=vmem, size = 0x3000, scoped, tag = 'scratch operand']
  %s0 = inlined_call_operand.vmem [shape: s32[2,24], index: 0, kind: input, shape index: {}]
  %s1 = inlined_call_operand.vmem [shape: s32[24,2], index: 1, kind: input, shape index: {}]
  %s2 = inlined_call_operand.vmem [shape: f32[16,1], index: 2, kind: input, shape index: {}]
  %s3 = inlined_call_operand.vmem [shape: f32[24,3], index: 3, kind: input, shape index: {}]
  %s4 = inlined_call_operand.vmem [shape: bf16[96,128], index: 4, kind: input, shape index: {}]
  %s5 = inlined_call_operand.vmem [shape: f32[8,128], index: 5, kind: input, shape index: {}]
  %s6 = inlined_call_operand.hbm [shape: f32[1,24], index: 6, kind: output, shape index: {}]
  %s7 = sld [smem:[#allocation0]]
  $region34: #{edge_gcn_lstm_forward.1} parent=0
    _
  %s9 = ssub.s32 1, %s7
  %s10 = scalar_select 0, %s9, %s7
  $region1: #{edge_gcn_lstm_forward.1} parent=0
    #allocation3 [shape = 'u8[512]{0}', space=vmem, size = 0x400, scoped, tag = 'output window, operand 0, single buffered']
    #allocation4 [shape = 's32[1]{0}', space=sflag, size = 0x4, scoped, tag = 'scoped memory for edge_gcn_lstm_forward.1']
    %11 = vsyncpa [#allocation4], 0
    // Predicated region
    $region2: #{edge_gcn_lstm_forward.1} parent=1 // pred_check
      _
    $region3: #{edge_gcn_lstm_forward.1} parent=1 // pred_check_branch
      %13 = sbr.rel (0) target = $region5
    $region4: #{edge_gcn_lstm_forward.1} parent=1 // pred_region
      _
    $region5: #{edge_gcn_lstm_forward.1} parent=1 // pred_fallthru
      _
    // Predicated region
    $region6: #{edge_gcn_lstm_forward.1} parent=1 // pred_check
      _
    $region7: #{edge_gcn_lstm_forward.1} parent=1 // pred_check_branch
      %15 = sbr.rel (0) target = $region9
    $region8: #{edge_gcn_lstm_forward.1} parent=1 // pred_region
      _
    $region9: #{edge_gcn_lstm_forward.1} parent=1 // pred_fallthru
      _
    // Predicated region
    $region10: #{edge_gcn_lstm_forward.1} parent=1 // pred_check
      _
    $region11: #{edge_gcn_lstm_forward.1} parent=1 // pred_check_branch
      %17 = sbr.rel (0) target = $region13
    $region12: #{edge_gcn_lstm_forward.1} parent=1 // pred_region
      _
    $region13: #{edge_gcn_lstm_forward.1} parent=1 // pred_fallthru
      _
    // Predicated region
    $region14: #{edge_gcn_lstm_forward.1} parent=1 // pred_check
      _
    $region15: #{edge_gcn_lstm_forward.1} parent=1 // pred_check_branch
      %19 = sbr.rel (0) target = $region17
    $region16: #{edge_gcn_lstm_forward.1} parent=1 // pred_region
      _
    $region17: #{edge_gcn_lstm_forward.1} parent=1 // pred_fallthru
      _
    // Predicated region
    $region18: #{edge_gcn_lstm_forward.1} parent=1 // pred_check
      _
    $region19: #{edge_gcn_lstm_forward.1} parent=1 // pred_check_branch
      %21 = sbr.rel (0) target = $region21
    $region20: #{edge_gcn_lstm_forward.1} parent=1 // pred_region
      _
    $region21: #{edge_gcn_lstm_forward.1} parent=1 // pred_fallthru
      _
    // Predicated region
    $region22: #{edge_gcn_lstm_forward.1} parent=1 // pred_check
      _
    $region23: #{edge_gcn_lstm_forward.1} parent=1 // pred_check_branch
      %23 = sbr.rel (0) target = $region25
    $region24: #{edge_gcn_lstm_forward.1} parent=1 // pred_region
      _
    $region25: #{edge_gcn_lstm_forward.1} parent=1 // pred_fallthru
      _
    %v25 = vld [vmem:[%s4] sm:$0xf]
    %v26 = vld [vmem:[%s4 + $0x4] sm:$0xf]
    %v27 = vld [vmem:[%s4 + $0x8] sm:$0xf]
    %v28 = vld [vmem:[%s4 + $0xc] sm:$0xf]
    %v29 = vld [vmem:[%s4 + $0x10] sm:$0xf]
    %v30 = vld [vmem:[%s4 + $0x14] sm:$0xf]
    %v31 = vld [vmem:[%s4 + $0x18] sm:$0xf]
    %v32 = vld [vmem:[%s4 + $0x1c] sm:$0xf]
    %v33 = vld [vmem:[%s4 + $0x20] sm:$0xf]
    %v34 = vld [vmem:[%s4 + $0x24] sm:$0xf]
    %v35 = vld [vmem:[%s4 + $0x28] sm:$0xf]
    %v36 = vld [vmem:[%s4 + $0x2c] sm:$0xf]
    %v37 = vld [vmem:[%s5] sm:$0xff]
    %v38 = vld [vmem:[%s1] sm:$0xff]
    %v39 = vld [vmem:[%s1 + $0x8] sm:$0xff]
    %v40 = vld [vmem:[%s1 + $0x10] sm:$0xff]
    %v41 = vld [vmem:[%s0 + $0x1] sm:$0x1]
    %v42 = vlaneseq
    %v43 = vand.u32 %v42, 127
    %44 = vset.pattern.permute.xlu0 0
    %45 = vperm.xlu0 %44, %v38
    %v46 = vpop.permute.xlu0 %45
    %47 = vset.pattern.permute.xlu0 0
    %48 = vperm.xlu0 %47, %v39
    %v49 = vpop.permute.xlu0 %48
    %50 = vset.pattern.permute.xlu0 0
    %51 = vperm.xlu0 %50, %v40
    %v52 = vpop.permute.xlu0 %51
    %vm53 = vcmp.eq.s32.totalorder %v43, %v46
    %vm54 = vcmp.eq.s32.totalorder %v43, %v49
    %vm55 = vcmp.eq.s32.totalorder %v43, %v52
    %v56 = vsel %vm53, 1, 0
    %v57 = vsel %vm54, 1, 0
    %v58 = vsel %vm55, 1, 0
    %v59 = vcvt.s32.f32 %v56
    %v60 = vcvt.s32.f32 %v57
    %v61 = vcvt.s32.f32 %v58
    %62 = vset.pattern.permute.xlu0 1
    %63 = vperm.xlu0 %62, %v38
    %v64 = vpop.permute.xlu0 %63
    %65 = vset.pattern.permute.xlu0 1
    %66 = vperm.xlu0 %65, %v39
    %v67 = vpop.permute.xlu0 %66
    %68 = vset.pattern.permute.xlu0 1
    %69 = vperm.xlu0 %68, %v40
    %v70 = vpop.permute.xlu0 %69
    %vm71 = vcmp.eq.s32.totalorder %v43, %v64
    %vm72 = vcmp.eq.s32.totalorder %v43, %v67
    %vm73 = vcmp.eq.s32.totalorder %v43, %v70
    %v74 = vsel %vm71, 1, 0
    %v75 = vsel %vm72, 1, 0
    %v76 = vsel %vm73, 1, 0
    %v77 = vcvt.s32.f32 %v74
    %v78 = vcvt.s32.f32 %v75
    %v79 = vcvt.s32.f32 %v76
    %v80 = vlaneseq
    %v81 = vshrl.u32 %v80, 7
    %v82 = vadd.s32 %v81, 8
    %v83 = vlaneseq
    %v84 = vshrl.u32 %v83, 7
    %v85 = vsub.s32 0, %v84
    %v86 = vrot.slane %v41, %v85
    %vm87 = vcmp.eq.s32.totalorder %v81, %v86
    %vm88 = vcmp.eq.s32.totalorder %v82, %v86
    %v89 = vsel %vm87, 1, 0
    %v90 = vsel %vm88, 1, 0
    %v91 = vcvt.s32.f32 %v89
    %v92 = vcvt.s32.f32 %v90
    %vm93 = vcmask 195584
    %v95 = vsel %vm93, %v91, 0
    %v98 = vsel %vm93, %v92, 0
    %100 = vmatprep.subr.mxu0 0.0
    %101 = vmatpush1.msra.mxu0 %v59
    %102 = vmatprep.subr.mxu0 0.0
    %103 = vmatpush1.msra.mxu0 %v60
    %104 = vmatprep.subr.mxu0 0.0
    %105 = vmatpush1.msra.mxu0 %v61
    %106 = vmatprep.subr.mxu0 0.0
    %107 = vmatpush1.msra.mxu0 0.0
    %108 = vmatprep.subr.mxu0 0.0
    %109 = vmatpush1.msra.mxu0 0.0
    %110 = vmatprep.subr.mxu0 0.0
    %111 = vmatpush1.msra.mxu0 0.0
    %112 = vmatprep.subr.mxu0 0.0
    %113 = vmatpush1.msra.mxu0 0.0
    %114 = vmatprep.subr.mxu0 0.0
    %115 = vmatpush1.msra.mxu0 0.0
    %116 = vmatprep.subr.mxu0 0.0
    %117 = vmatpush1.msra.mxu0 0.0
    %118 = vmatprep.subr.mxu0 0.0
    %119 = vmatpush1.msra.mxu0 0.0
    %120 = vmatprep.subr.mxu0 0.0
    %121 = vmatpush1.msra.mxu0 0.0
    %122 = vmatprep.subr.mxu0 0.0
    %123 = vmatpush1.msra.mxu0 0.0
    %124 = vmatprep.subr.mxu0 0.0
    %125 = vmatpush1.msra.mxu0 0.0
    %126 = vmatprep.subr.mxu0 0.0
    %127 = vmatpush1.msra.mxu0 0.0
    %128 = vmatprep.subr.mxu0 0.0
    %129 = vmatpush1.msra.mxu0 0.0
    %130 = vmatprep.subr.mxu0 0.0
    %131 = vmatpush1.msra.mxu0 0.0
    %132 = vmatprep.subr.mxu0 0.0
    %133 = vmatpush1.msra.mxu0 0.0
    %134 = vmatprep.subr.mxu0 0.0
    %135 = vmatpush1.msra.mxu0 0.0
    %136 = vmatprep.subr.mxu0 0.0
    %137 = vmatpush1.msra.mxu0 0.0
    %138 = vmatprep.subr.mxu0 0.0
    %139 = vmatpush1.msra.mxu0 0.0
    %140 = vmatprep.subr.mxu0 0.0
    %141 = vmatpush1.msra.mxu0 0.0
    %142 = vmatprep.subr.mxu0 0.0
    %143 = vmatpush1.msra.mxu0 0.0
    %144 = vmatprep.subr.mxu0 0.0
    %145 = vmatpush1.msra.mxu0 0.0
    %146 = vmatprep.subr.mxu0 0.0
    %147 = vmatpush1.msra.mxu0 0.0
    %148 = vmatprep.subr.mxu0 0.0
    %149 = vmatpush1.msra.mxu0 0.0
    %150 = vmatprep.subr.mxu0 0.0
    %151 = vmatpush1.msra.mxu0 0.0
    %152 = vmatprep.subr.mxu0 0.0
    %153 = vmatpush1.msra.mxu0 0.0
    %154 = vmatprep.subr.mxu0 0.0
    %155 = vmatpush1.msra.mxu0 0.0
    %156 = vmatprep.subr.mxu0 0.0
    %157 = vmatpush1.msra.mxu0 0.0
    %158 = vmatprep.subr.mxu0 0.0
    %159 = vmatpush1.msra.mxu0 0.0
    %160 = vmatprep.subr.mxu0 0.0
    %161 = vmatpush1.msra.mxu0 0.0
    %162 = vmatprep.subr.mxu0 0.0
    %163 = vmatpush1.msra.mxu0 0.0
    %164 = vmatprep.mubr.f32.mxu0 0.0
    %165 = vmatmul.mubr.f32.gmra.mrb[0].mxu0 %v95
    %v166 = vpop.f32.mrb[0].mxu0
    %v167 = vadd.f32 0.0, %v166
    %v168 = vpop.f32.mrb[0].mxu0
    %169 = vmatprep.mubr.f32.mxu0 0.0
    %170 = vmatmul.mubr.f32.gmra.mrb[0].mxu0 %v98
    %v171 = vpop.f32.mrb[0].mxu0
    %v172 = vadd.f32 0.0, %v171
    %v173 = vpop.f32.mrb[0].mxu0
    %174 = vdwg.mxu0
    %vm175 = vcmp.eq.s32.totalorder %v81, %v43
    %vm176 = vcmp.eq.s32.totalorder %v82, %v43
    %v177 = vsel %vm175, 1.0, %v167
    %v178 = vsel %vm176, 1.0, %v172
    %vm179 = vcmask 130048
    %v180 = vsel %vm179, %v177, 0.0
    %181 = vadd.xlane.f32.xlu0 %v180
    %v182 = vpop.xlane.xlu0 %181
    %v183 = vsel %vm179, %v178, 0.0
    %184 = vadd.xlane.f32.xlu0 %v183
    %v185 = vpop.xlane.xlu0 %184
    %vm186 = vcmp.gt.f32.partialorder %v182, 0.0
    %vm187 = vcmp.gt.f32.partialorder %v185, 0.0
    %v188 = vrsqrt.pop %v182
    %v189 = vrsqrt.pop %v185
    %v190 = vsel %vm186, %v188, 0.0
    %v191 = vsel %vm187, %v189, 0.0
    %v192 = vld [vmem:[%s2] sm:$0xff]
    %v193 = vld [vmem:[%s2 + $0x8] sm:$0xff]
    %v194 = vmul.f32 %v190, %v192
    %v195 = vmul.f32 %v191, %v193
    %v197 = vsel %vm179, %v177, 0
    %v200 = vsel %vm179, %v178, 0
    %202 = vmatprep.subr.mxu0 0.0
    %203 = vmatpush1.msra.mxu0 %v194
    %204 = vmatprep.subr.mxu0 0.0
    %205 = vmatpush1.msra.mxu0 %v195
    %206 = vmatprep.subr.mxu0 0.0
    %207 = vmatpush1.msra.mxu0 0.0
    %208 = vmatprep.subr.mxu0 0.0
    %209 = vmatpush1.msra.mxu0 0.0
    %210 = vmatprep.subr.mxu0 0.0
    %211 = vmatpush1.msra.mxu0 0.0
    %212 = vmatprep.subr.mxu0 0.0
    %213 = vmatpush1.msra.mxu0 0.0
    %214 = vmatprep.subr.mxu0 0.0
    %215 = vmatpush1.msra.mxu0 0.0
    %216 = vmatprep.subr.mxu0 0.0
    %217 = vmatpush1.msra.mxu0 0.0
    %218 = vmatprep.subr.mxu0 0.0
    %219 = vmatpush1.msra.mxu0 0.0
    %220 = vmatprep.subr.mxu0 0.0
    %221 = vmatpush1.msra.mxu0 0.0
    %222 = vmatprep.subr.mxu0 0.0
    %223 = vmatpush1.msra.mxu0 0.0
    %224 = vmatprep.subr.mxu0 0.0
    %225 = vmatpush1.msra.mxu0 0.0
    %226 = vmatprep.subr.mxu0 0.0
    %227 = vmatpush1.msra.mxu0 0.0
    %228 = vmatprep.subr.mxu0 0.0
    %229 = vmatpush1.msra.mxu0 0.0
    %230 = vmatprep.subr.mxu0 0.0
    %231 = vmatpush1.msra.mxu0 0.0
    %232 = vmatprep.subr.mxu0 0.0
    %233 = vmatpush1.msra.mxu0 0.0
    %234 = vmatprep.subr.mxu0 0.0
    %235 = vmatpush1.msra.mxu0 0.0
    %236 = vmatprep.subr.mxu0 0.0
    %237 = vmatpush1.msra.mxu0 0.0
    %238 = vmatprep.subr.mxu0 0.0
    %239 = vmatpush1.msra.mxu0 0.0
    %240 = vmatprep.subr.mxu0 0.0
    %241 = vmatpush1.msra.mxu0 0.0
    %242 = vmatprep.subr.mxu0 0.0
    %243 = vmatpush1.msra.mxu0 0.0
    %244 = vmatprep.subr.mxu0 0.0
    %245 = vmatpush1.msra.mxu0 0.0
    %246 = vmatprep.subr.mxu0 0.0
    %247 = vmatpush1.msra.mxu0 0.0
    %248 = vmatprep.subr.mxu0 0.0
    %249 = vmatpush1.msra.mxu0 0.0
    %250 = vmatprep.subr.mxu0 0.0
    %251 = vmatpush1.msra.mxu0 0.0
    %252 = vmatprep.subr.mxu0 0.0
    %253 = vmatpush1.msra.mxu0 0.0
    %254 = vmatprep.subr.mxu0 0.0
    %255 = vmatpush1.msra.mxu0 0.0
    %256 = vmatprep.subr.mxu0 0.0
    %257 = vmatpush1.msra.mxu0 0.0
    %258 = vmatprep.subr.mxu0 0.0
    %259 = vmatpush1.msra.mxu0 0.0
    %260 = vmatprep.subr.mxu0 0.0
    %261 = vmatpush1.msra.mxu0 0.0
    %262 = vmatprep.subr.mxu0 0.0
    %263 = vmatpush1.msra.mxu0 0.0
    %264 = vmatprep.subr.mxu0 0.0
    %265 = vmatpush1.msra.mxu0 0.0
    %266 = vmatprep.mubr.f32.mxu0 0.0
    %267 = vmatmul.mubr.f32.gmra.mrb[0].mxu0 %v197
    %v268 = vpop.f32.mrb[0].mxu0
    %v269 = vadd.f32 0.0, %v268
    %v270 = vpop.f32.mrb[0].mxu0
    %271 = vmatprep.mubr.f32.mxu0 0.0
    %272 = vmatmul.mubr.f32.gmra.mrb[0].mxu0 %v200
    %v273 = vpop.f32.mrb[0].mxu0
    %v274 = vadd.f32 0.0, %v273
    %v275 = vpop.f32.mrb[0].mxu0
    %276 = vdwg.mxu0
    %v277 = vmul.f32 %v190, %v269
    %v278 = vmul.f32 %v191, %v274
    %280 = vset.pattern.permute.xlu0 0
    %281 = vperm.xlu0 %280, %v277
    %v282 = vpop.permute.xlu0 %281
    %285 = vset.pattern.permute.xlu0 0
    %286 = vperm.xlu0 %285, %v278
    %v287 = vpop.permute.xlu0 %286
    %v289 = vlaneseq
    %v290 = vshrl.u32 %v289, 7
    %v291 = vsub.s32 0, %v290
    %v292 = vrot.slane %v37, %v291
    %v293 = vmul.f32 %v282, %v292
    %v294 = vmul.f32 %v287, %v292
    %v295 = vlaneseq
    %v296 = vshrl.u32 %v295, 7
    %v297 = vsub.s32 1, %v296
    %v298 = vrot.slane %v37, %v297
    %v299 = vadd.f32 %v293, %v298
    %v300 = vadd.f32 %v294, %v298
    %v301 = vmax.f32 %v299, 0.0
    %v302 = vmax.f32 %v300, 0.0
    %v304 = vsel %vm179, %v59, 0
    %v307 = vsel %vm179, %v60, 0
    %v310 = vsel %vm179, %v61, 0
    %312 = vmatprep.subr.mxu0 0.0
    %313 = vmatpush1.msra.mxu0 %v301
    %314 = vmatprep.subr.mxu0 0.0
    %315 = vmatpush1.msra.mxu0 %v302
    %316 = vmatprep.subr.mxu0 0.0
    %317 = vmatpush1.msra.mxu0 0.0
    %318 = vmatprep.subr.mxu0 0.0
    %319 = vmatpush1.msra.mxu0 0.0
    %320 = vmatprep.subr.mxu0 0.0
    %321 = vmatpush1.msra.mxu0 0.0
    %322 = vmatprep.subr.mxu0 0.0
    %323 = vmatpush1.msra.mxu0 0.0
    %324 = vmatprep.subr.mxu0 0.0
    %325 = vmatpush1.msra.mxu0 0.0
    %326 = vmatprep.subr.mxu0 0.0
    %327 = vmatpush1.msra.mxu0 0.0
    %328 = vmatprep.subr.mxu0 0.0
    %329 = vmatpush1.msra.mxu0 0.0
    %330 = vmatprep.subr.mxu0 0.0
    %331 = vmatpush1.msra.mxu0 0.0
    %332 = vmatprep.subr.mxu0 0.0
    %333 = vmatpush1.msra.mxu0 0.0
    %334 = vmatprep.subr.mxu0 0.0
    %335 = vmatpush1.msra.mxu0 0.0
    %336 = vmatprep.subr.mxu0 0.0
    %337 = vmatpush1.msra.mxu0 0.0
    %338 = vmatprep.subr.mxu0 0.0
    %339 = vmatpush1.msra.mxu0 0.0
    %340 = vmatprep.subr.mxu0 0.0
    %341 = vmatpush1.msra.mxu0 0.0
    %342 = vmatprep.subr.mxu0 0.0
    %343 = vmatpush1.msra.mxu0 0.0
    %344 = vmatprep.subr.mxu0 0.0
    %345 = vmatpush1.msra.mxu0 0.0
    %346 = vmatprep.subr.mxu0 0.0
    %347 = vmatpush1.msra.mxu0 0.0
    %348 = vmatprep.subr.mxu0 0.0
    %349 = vmatpush1.msra.mxu0 0.0
    %350 = vmatprep.subr.mxu0 0.0
    %351 = vmatpush1.msra.mxu0 0.0
    %352 = vmatprep.subr.mxu0 0.0
    %353 = vmatpush1.msra.mxu0 0.0
    %354 = vmatprep.subr.mxu0 0.0
    %355 = vmatpush1.msra.mxu0 0.0
    %356 = vmatprep.subr.mxu0 0.0
    %357 = vmatpush1.msra.mxu0 0.0
    %358 = vmatprep.subr.mxu0 0.0
    %359 = vmatpush1.msra.mxu0 0.0
    %360 = vmatprep.subr.mxu0 0.0
    %361 = vmatpush1.msra.mxu0 0.0
    %362 = vmatprep.subr.mxu0 0.0
    %363 = vmatpush1.msra.mxu0 0.0
    %364 = vmatprep.subr.mxu0 0.0
    %365 = vmatpush1.msra.mxu0 0.0
    %366 = vmatprep.subr.mxu0 0.0
    %367 = vmatpush1.msra.mxu0 0.0
    %368 = vmatprep.subr.mxu0 0.0
    %369 = vmatpush1.msra.mxu0 0.0
    %370 = vmatprep.subr.mxu0 0.0
    %371 = vmatpush1.msra.mxu0 0.0
    %372 = vmatprep.subr.mxu0 0.0
    %373 = vmatpush1.msra.mxu0 0.0
    %374 = vmatprep.subr.mxu0 0.0
    %375 = vmatpush1.msra.mxu0 0.0
    %376 = vmatprep.mubr.f32.mxu0 0.0
    %377 = vmatmul.mubr.f32.gmra.mrb[0].mxu0 %v304
    %v378 = vpop.f32.mrb[0].mxu0
    %v379 = vadd.f32 0.0, %v378
    %v380 = vpop.f32.mrb[0].mxu0
    %381 = vmatprep.mubr.f32.mxu0 0.0
    %382 = vmatmul.mubr.f32.gmra.mrb[0].mxu0 %v307
    %v383 = vpop.f32.mrb[0].mxu0
    %v384 = vadd.f32 0.0, %v383
    %v385 = vpop.f32.mrb[0].mxu0
    %386 = vmatprep.mubr.f32.mxu0 0.0
    %387 = vmatmul.mubr.f32.gmra.mrb[0].mxu0 %v310
    %v388 = vpop.f32.mrb[0].mxu0
    %v389 = vadd.f32 0.0, %v388
    %v390 = vpop.f32.mrb[0].mxu0
    %391 = vdwg.mxu0
    %v393 = vsel %vm179, %v77, 0
    %v396 = vsel %vm179, %v78, 0
    %v399 = vsel %vm179, %v79, 0
    %401 = vmatprep.subr.mxu0 0.0
    %402 = vmatpush1.msra.mxu0 %v301
    %403 = vmatprep.subr.mxu0 0.0
    %404 = vmatpush1.msra.mxu0 %v302
    %405 = vmatprep.subr.mxu0 0.0
    %406 = vmatpush1.msra.mxu0 0.0
    %407 = vmatprep.subr.mxu0 0.0
    %408 = vmatpush1.msra.mxu0 0.0
    %409 = vmatprep.subr.mxu0 0.0
    %410 = vmatpush1.msra.mxu0 0.0
    %411 = vmatprep.subr.mxu0 0.0
    %412 = vmatpush1.msra.mxu0 0.0
    %413 = vmatprep.subr.mxu0 0.0
    %414 = vmatpush1.msra.mxu0 0.0
    %415 = vmatprep.subr.mxu0 0.0
    %416 = vmatpush1.msra.mxu0 0.0
    %417 = vmatprep.subr.mxu0 0.0
    %418 = vmatpush1.msra.mxu0 0.0
    %419 = vmatprep.subr.mxu0 0.0
    %420 = vmatpush1.msra.mxu0 0.0
    %421 = vmatprep.subr.mxu0 0.0
    %422 = vmatpush1.msra.mxu0 0.0
    %423 = vmatprep.subr.mxu0 0.0
    %424 = vmatpush1.msra.mxu0 0.0
    %425 = vmatprep.subr.mxu0 0.0
    %426 = vmatpush1.msra.mxu0 0.0
    %427 = vmatprep.subr.mxu0 0.0
    %428 = vmatpush1.msra.mxu0 0.0
    %429 = vmatprep.subr.mxu0 0.0
    %430 = vmatpush1.msra.mxu0 0.0
    %431 = vmatprep.subr.mxu0 0.0
    %432 = vmatpush1.msra.mxu0 0.0
    %433 = vmatprep.subr.mxu0 0.0
    %434 = vmatpush1.msra.mxu0 0.0
    %435 = vmatprep.subr.mxu0 0.0
    %436 = vmatpush1.msra.mxu0 0.0
    %437 = vmatprep.subr.mxu0 0.0
    %438 = vmatpush1.msra.mxu0 0.0
    %439 = vmatprep.subr.mxu0 0.0
    %440 = vmatpush1.msra.mxu0 0.0
    %441 = vmatprep.subr.mxu0 0.0
    %442 = vmatpush1.msra.mxu0 0.0
    %443 = vmatprep.subr.mxu0 0.0
    %444 = vmatpush1.msra.mxu0 0.0
    %445 = vmatprep.subr.mxu0 0.0
    %446 = vmatpush1.msra.mxu0 0.0
    %447 = vmatprep.subr.mxu0 0.0
    %448 = vmatpush1.msra.mxu0 0.0
    %449 = vmatprep.subr.mxu0 0.0
    %450 = vmatpush1.msra.mxu0 0.0
    %451 = vmatprep.subr.mxu0 0.0
    %452 = vmatpush1.msra.mxu0 0.0
    %453 = vmatprep.subr.mxu0 0.0
    %454 = vmatpush1.msra.mxu0 0.0
    %455 = vmatprep.subr.mxu0 0.0
    %456 = vmatpush1.msra.mxu0 0.0
    %457 = vmatprep.subr.mxu0 0.0
    %458 = vmatpush1.msra.mxu0 0.0
    %459 = vmatprep.subr.mxu0 0.0
    %460 = vmatpush1.msra.mxu0 0.0
    %461 = vmatprep.subr.mxu0 0.0
    %462 = vmatpush1.msra.mxu0 0.0
    %463 = vmatprep.subr.mxu0 0.0
    %464 = vmatpush1.msra.mxu0 0.0
    %465 = vmatprep.mubr.f32.mxu0 0.0
    %466 = vmatmul.mubr.f32.gmra.mrb[0].mxu0 %v393
    %v467 = vpop.f32.mrb[0].mxu0
    %v468 = vadd.f32 0.0, %v467
    %v469 = vpop.f32.mrb[0].mxu0
    %470 = vmatprep.mubr.f32.mxu0 0.0
    %471 = vmatmul.mubr.f32.gmra.mrb[0].mxu0 %v396
    %v472 = vpop.f32.mrb[0].mxu0
    %v473 = vadd.f32 0.0, %v472
    %v474 = vpop.f32.mrb[0].mxu0
    %475 = vmatprep.mubr.f32.mxu0 0.0
    %476 = vmatmul.mubr.f32.gmra.mrb[0].mxu0 %v399
    %v477 = vpop.f32.mrb[0].mxu0
    %v478 = vadd.f32 0.0, %v477
    %v479 = vpop.f32.mrb[0].mxu0
    %480 = vdwg.mxu0
    %v481 = vpack.c.bf16 %v384, %v379
    %v482 = vpack.c.bf16 %v389, %v389
    %v483 = vpack.c.bf16 %v473, %v468
    %v484 = vpack.c.bf16 %v478, %v478
    %v489 = vunpack.c.l.b16 %v29
    %v490 = vunpack.c.l.b16 %v30
    %v491 = vunpack.c.l.b16 %v31
    %v492 = vunpack.c.l.b16 %v32
    %v493 = vpack.c.b16 %v490, %v489
    %v494 = vpack.c.b16 %v492, %v491
    %vm497 = vcmask 261120
    %v499 = vsel %vm497, %v483, 0
    %v502 = vsel %vm497, %v484, 0
    %504 = vmatprep.subr.bf16.mxu0 0
    %505 = vmatpush1.bf16.msra.mxu0 %v493
    %506 = vmatprep.subr.bf16.mxu0 0
    %507 = vmatpush1.bf16.msra.mxu0 %v494
    %508 = vmatprep.subr.bf16.mxu0 0
    %509 = vmatpush1.bf16.msra.mxu0 0
    %510 = vmatprep.subr.bf16.mxu0 0
    %511 = vmatpush1.bf16.msra.mxu0 0
    %512 = vmatprep.subr.bf16.mxu0 0
    %513 = vmatpush1.bf16.msra.mxu0 0
    %514 = vmatprep.subr.bf16.mxu0 0
    %515 = vmatpush1.bf16.msra.mxu0 0
    %516 = vmatprep.subr.bf16.mxu0 0
    %517 = vmatpush1.bf16.msra.mxu0 0
    %518 = vmatprep.subr.bf16.mxu0 0
    %519 = vmatpush1.bf16.msra.mxu0 0
    %520 = vmatprep.subr.bf16.mxu0 0
    %521 = vmatpush1.bf16.msra.mxu0 0
    %522 = vmatprep.subr.bf16.mxu0 0
    %523 = vmatpush1.bf16.msra.mxu0 0
    %524 = vmatprep.subr.bf16.mxu0 0
    %525 = vmatpush1.bf16.msra.mxu0 0
    %526 = vmatprep.subr.bf16.mxu0 0
    %527 = vmatpush1.bf16.msra.mxu0 0
    %528 = vmatprep.subr.bf16.mxu0 0
    %529 = vmatpush1.bf16.msra.mxu0 0
    %530 = vmatprep.subr.bf16.mxu0 0
    %531 = vmatpush1.bf16.msra.mxu0 0
    %532 = vmatprep.subr.bf16.mxu0 0
    %533 = vmatpush1.bf16.msra.mxu0 0
    %534 = vmatprep.subr.bf16.mxu0 0
    %535 = vmatpush1.bf16.msra.mxu0 0
    %536 = vmatprep.mubr.bf16.mxu0 0
    %537 = vmatmul.mubr.bf16.gmra.mrb[0].mxu0 %v499
    %v538 = vpop.f32.mrb[0].mxu0
    %v539 = vadd.f32 0.0, %v538
    %v540 = vpop.f32.mrb[0].mxu0
    %v541 = vpop.f32.mrb[0].mxu0
    %v542 = vadd.f32 0.0, %v541
    %v543 = vpop.f32.mrb[0].mxu0
    %544 = vmatprep.mubr.bf16.mxu0 0
    %545 = vmatmul.mubr.bf16.gmra.mrb[0].mxu0 %v502
    %v546 = vpop.f32.mrb[0].mxu0
    %v547 = vadd.f32 0.0, %v546
    %v548 = vpop.f32.mrb[0].mxu0
    %v549 = vpop.f32.mrb[0].mxu0
    %v550 = vpop.f32.mrb[0].mxu0
    %551 = vdwg.mxu0
    %v556 = vunpack.c.l.b16 %v25
    %v557 = vunpack.c.l.b16 %v26
    %v558 = vunpack.c.l.b16 %v27
    %v559 = vunpack.c.l.b16 %v28
    %v560 = vpack.c.b16 %v557, %v556
    %v561 = vpack.c.b16 %v559, %v558
    %v565 = vsel %vm497, %v481, 0
    %v568 = vsel %vm497, %v482, 0
    %570 = vmatprep.subr.bf16.mxu0 0
    %571 = vmatpush1.bf16.msra.mxu0 %v560
    %572 = vmatprep.subr.bf16.mxu0 0
    %573 = vmatpush1.bf16.msra.mxu0 %v561
    %574 = vmatprep.subr.bf16.mxu0 0
    %575 = vmatpush1.bf16.msra.mxu0 0
    %576 = vmatprep.subr.bf16.mxu0 0
    %577 = vmatpush1.bf16.msra.mxu0 0
    %578 = vmatprep.subr.bf16.mxu0 0
    %579 = vmatpush1.bf16.msra.mxu0 0
    %580 = vmatprep.subr.bf16.mxu0 0
    %581 = vmatpush1.bf16.msra.mxu0 0
    %582 = vmatprep.subr.bf16.mxu0 0
    %583 = vmatpush1.bf16.msra.mxu0 0
    %584 = vmatprep.subr.bf16.mxu0 0
    %585 = vmatpush1.bf16.msra.mxu0 0
    %586 = vmatprep.subr.bf16.mxu0 0
    %587 = vmatpush1.bf16.msra.mxu0 0
    %588 = vmatprep.subr.bf16.mxu0 0
    %589 = vmatpush1.bf16.msra.mxu0 0
    %590 = vmatprep.subr.bf16.mxu0 0
    %591 = vmatpush1.bf16.msra.mxu0 0
    %592 = vmatprep.subr.bf16.mxu0 0
    %593 = vmatpush1.bf16.msra.mxu0 0
    %594 = vmatprep.subr.bf16.mxu0 0
    %595 = vmatpush1.bf16.msra.mxu0 0
    %596 = vmatprep.subr.bf16.mxu0 0
    %597 = vmatpush1.bf16.msra.mxu0 0
    %598 = vmatprep.subr.bf16.mxu0 0
    %599 = vmatpush1.bf16.msra.mxu0 0
    %600 = vmatprep.subr.bf16.mxu0 0
    %601 = vmatpush1.bf16.msra.mxu0 0
    %602 = vmatprep.mubr.bf16.mxu0 0
    %603 = vmatmul.mubr.bf16.gmra.mrb[0].mxu0 %v565
    %v604 = vpop.f32.mrb[0].mxu0
    %v605 = vadd.f32 %v539, %v604
    %v606 = vpop.f32.mrb[0].mxu0
    %v607 = vpop.f32.mrb[0].mxu0
    %v608 = vadd.f32 %v542, %v607
    %v609 = vpop.f32.mrb[0].mxu0
    %610 = vmatprep.mubr.bf16.mxu0 0
    %611 = vmatmul.mubr.bf16.gmra.mrb[0].mxu0 %v568
    %v612 = vpop.f32.mrb[0].mxu0
    %v613 = vadd.f32 %v547, %v612
    %v614 = vpop.f32.mrb[0].mxu0
    %v615 = vpop.f32.mrb[0].mxu0
    %v616 = vpop.f32.mrb[0].mxu0
    %617 = vdwg.mxu0
    %v618 = vld [vmem:[%s3] sm:$0xff]
    %v619 = vld [vmem:[%s3 + $0x8] sm:$0xff]
    %v620 = vld [vmem:[%s3 + $0x10] sm:$0xff]
    %v622 = vrot.slane %v37, 5
    %vm623 = vcmask 23552
    %v625 = vsel %vm623, %v618, 0
    %v628 = vsel %vm623, %v619, 0
    %v631 = vsel %vm623, %v620, 0
    %vm633 = vcmask 1042432
    %v634 = vsel %vm633, %v622, 0
    %636 = vmatprep.subr.mxu0 0.0
    %637 = vmatpush1.msra.mxu0 %v634
    %638 = vmatprep.subr.mxu0 0.0
    %639 = vmatpush1.msra.mxu0 0.0
    %640 = vmatprep.subr.mxu0 0.0
    %641 = vmatpush1.msra.mxu0 0.0
    %642 = vmatprep.subr.mxu0 0.0
    %643 = vmatpush1.msra.mxu0 0.0
    %644 = vmatprep.subr.mxu0 0.0
    %645 = vmatpush1.msra.mxu0 0.0
    %646 = vmatprep.subr.mxu0 0.0
    %647 = vmatpush1.msra.mxu0 0.0
    %648 = vmatprep.subr.mxu0 0.0
    %649 = vmatpush1.msra.mxu0 0.0
    %650 = vmatprep.subr.mxu0 0.0
    %651 = vmatpush1.msra.mxu0 0.0
    %652 = vmatprep.subr.mxu0 0.0
    %653 = vmatpush1.msra.mxu0 0.0
    %654 = vmatprep.subr.mxu0 0.0
    %655 = vmatpush1.msra.mxu0 0.0
    %656 = vmatprep.subr.mxu0 0.0
    %657 = vmatpush1.msra.mxu0 0.0
    %658 = vmatprep.subr.mxu0 0.0
    %659 = vmatpush1.msra.mxu0 0.0
    %660 = vmatprep.subr.mxu0 0.0
    %661 = vmatpush1.msra.mxu0 0.0
    %662 = vmatprep.subr.mxu0 0.0
    %663 = vmatpush1.msra.mxu0 0.0
    %664 = vmatprep.subr.mxu0 0.0
    %665 = vmatpush1.msra.mxu0 0.0
    %666 = vmatprep.subr.mxu0 0.0
    %667 = vmatpush1.msra.mxu0 0.0
    %668 = vmatprep.subr.mxu0 0.0
    %669 = vmatpush1.msra.mxu0 0.0
    %670 = vmatprep.subr.mxu0 0.0
    %671 = vmatpush1.msra.mxu0 0.0
    %672 = vmatprep.subr.mxu0 0.0
    %673 = vmatpush1.msra.mxu0 0.0
    %674 = vmatprep.subr.mxu0 0.0
    %675 = vmatpush1.msra.mxu0 0.0
    %676 = vmatprep.subr.mxu0 0.0
    %677 = vmatpush1.msra.mxu0 0.0
    %678 = vmatprep.subr.mxu0 0.0
    %679 = vmatpush1.msra.mxu0 0.0
    %680 = vmatprep.subr.mxu0 0.0
    %681 = vmatpush1.msra.mxu0 0.0
    %682 = vmatprep.subr.mxu0 0.0
    %683 = vmatpush1.msra.mxu0 0.0
    %684 = vmatprep.subr.mxu0 0.0
    %685 = vmatpush1.msra.mxu0 0.0
    %686 = vmatprep.subr.mxu0 0.0
    %687 = vmatpush1.msra.mxu0 0.0
    %688 = vmatprep.subr.mxu0 0.0
    %689 = vmatpush1.msra.mxu0 0.0
    %690 = vmatprep.subr.mxu0 0.0
    %691 = vmatpush1.msra.mxu0 0.0
    %692 = vmatprep.subr.mxu0 0.0
    %693 = vmatpush1.msra.mxu0 0.0
    %694 = vmatprep.subr.mxu0 0.0
    %695 = vmatpush1.msra.mxu0 0.0
    %696 = vmatprep.subr.mxu0 0.0
    %697 = vmatpush1.msra.mxu0 0.0
    %698 = vmatprep.subr.mxu0 0.0
    %699 = vmatpush1.msra.mxu0 0.0
    %700 = vmatprep.mubr.f32.mxu0 0.0
    %701 = vmatmul.mubr.f32.gmra.mrb[0].mxu0 %v625
    %v702 = vpop.f32.mrb[0].mxu0
    %v703 = vadd.f32 0.0, %v702
    %v704 = vpop.f32.mrb[0].mxu0
    %705 = vmatprep.mubr.f32.mxu0 0.0
    %706 = vmatmul.mubr.f32.gmra.mrb[0].mxu0 %v628
    %v707 = vpop.f32.mrb[0].mxu0
    %v708 = vadd.f32 0.0, %v707
    %v709 = vpop.f32.mrb[0].mxu0
    %710 = vmatprep.mubr.f32.mxu0 0.0
    %711 = vmatmul.mubr.f32.gmra.mrb[0].mxu0 %v631
    %v712 = vpop.f32.mrb[0].mxu0
    %v713 = vadd.f32 0.0, %v712
    %v714 = vpop.f32.mrb[0].mxu0
    %715 = vdwg.mxu0
    %v716 = vadd.f32 %v605, %v703
    %v717 = vadd.f32 %v608, %v708
    %v718 = vadd.f32 %v613, %v713
    %v719 = vlaneseq
    %v720 = vshrl.u32 %v719, 7
    %v721 = vsub.s32 2, %v720
    %v722 = vrot.slane %v37, %v721
    %v723 = vadd.f32 %v716, %v722
    %v724 = vadd.f32 %v717, %v722
    %v725 = vadd.f32 %v718, %v722
    %v730 = vunpack.c.l.b16 %v33
    %v731 = vunpack.c.l.b16 %v34
    %v732 = vunpack.c.l.b16 %v35
    %v733 = vunpack.c.l.b16 %v36
    %v734 = vpack.c.b16 %v731, %v730
    %v735 = vpack.c.b16 %v733, %v732
    %v739 = vsel %vm497, 0, 0
    %741 = vmatprep.subr.bf16.mxu0 0
    %742 = vmatpush1.bf16.msra.mxu0 %v734
    %743 = vmatprep.subr.bf16.mxu0 0
    %744 = vmatpush1.bf16.msra.mxu0 %v735
    %745 = vmatprep.subr.bf16.mxu0 0
    %746 = vmatpush1.bf16.msra.mxu0 0
    %747 = vmatprep.subr.bf16.mxu0 0
    %748 = vmatpush1.bf16.msra.mxu0 0
    %749 = vmatprep.subr.bf16.mxu0 0
    %750 = vmatpush1.bf16.msra.mxu0 0
    %751 = vmatprep.subr.bf16.mxu0 0
    %752 = vmatpush1.bf16.msra.mxu0 0
    %753 = vmatprep.subr.bf16.mxu0 0
    %754 = vmatpush1.bf16.msra.mxu0 0
    %755 = vmatprep.subr.bf16.mxu0 0
    %756 = vmatpush1.bf16.msra.mxu0 0
    %757 = vmatprep.subr.bf16.mxu0 0
    %758 = vmatpush1.bf16.msra.mxu0 0
    %759 = vmatprep.subr.bf16.mxu0 0
    %760 = vmatpush1.bf16.msra.mxu0 0
    %761 = vmatprep.subr.bf16.mxu0 0
    %762 = vmatpush1.bf16.msra.mxu0 0
    %763 = vmatprep.subr.bf16.mxu0 0
    %764 = vmatpush1.bf16.msra.mxu0 0
    %765 = vmatprep.subr.bf16.mxu0 0
    %766 = vmatpush1.bf16.msra.mxu0 0
    %767 = vmatprep.subr.bf16.mxu0 0
    %768 = vmatpush1.bf16.msra.mxu0 0
    %769 = vmatprep.subr.bf16.mxu0 0
    %770 = vmatpush1.bf16.msra.mxu0 0
    %771 = vmatprep.subr.bf16.mxu0 0
    %772 = vmatpush1.bf16.msra.mxu0 0
    %773 = vmatprep.mubr.bf16.mxu0 0
    %774 = vmatmul.mubr.bf16.gmra.mrb[0].mxu0 %v739
    %v775 = vpop.f32.mrb[0].mxu0
    %v776 = vadd.f32 0.0, %v775
    %v777 = vpop.f32.mrb[0].mxu0
    %v778 = vpop.f32.mrb[0].mxu0
    %v779 = vpop.f32.mrb[0].mxu0
    %780 = vdwg.mxu0
    %v781 = vadd.f32 %v723, %v776
    %v782 = vxor.u32 %v781, 2147483648
    %v783 = vmul.f32 %v782, 1.442695
    %v784 = vpow.pop %v783
    %v785 = vadd.f32 %v784, 1.0
    %v786 = vrcp.pop %v785
    %v787 = vmul.f32 1.0, %v786
    %v788 = vtanh.pop %v781
    %v789 = vmul.f32 %v787, 0.0
    %791 = vrot.lane.b32.xlu0 %v788, 64
    %v792 = vpop.permute.xlu0 %791
    %v794 = vmul.f32 %v787, %v792
    %796 = vrot.lane.b32.xlu0 %v794, 32
    %v797 = vpop.permute.xlu0 %796
    %v799 = vadd.f32 %v789, %v797
    %v800 = vtanh.pop %v799
    %802 = vrot.lane.b32.xlu0 %v800, 64
    %v803 = vpop.permute.xlu0 %802
    %v805 = vmul.f32 %v787, %v803
    %807 = vrot.lane.b32.xlu0 %v805, 32
    %v808 = vpop.permute.xlu0 %807
    %vm810 = vcmask 253952
    %811 = vst.msk [vmem:[#allocation2] sm:$0x1] %vm810, %v808
    %v812 = vpack.c.bf16 %v805, %v805
    %814 = vrot.lane.b32.xlu0 %v812, 32
    %v815 = vpop.permute.xlu0 %814
    %v817 = vsel %vm497, %v815, 0
    %819 = vmatprep.subr.bf16.mxu0 0
    %820 = vmatpush1.bf16.msra.mxu0 %v734
    %821 = vmatprep.subr.bf16.mxu0 0
    %822 = vmatpush1.bf16.msra.mxu0 %v735
    %823 = vmatprep.subr.bf16.mxu0 0
    %824 = vmatpush1.bf16.msra.mxu0 0
    %825 = vmatprep.subr.bf16.mxu0 0
    %826 = vmatpush1.bf16.msra.mxu0 0
    %827 = vmatprep.subr.bf16.mxu0 0
    %828 = vmatpush1.bf16.msra.mxu0 0
    %829 = vmatprep.subr.bf16.mxu0 0
    %830 = vmatpush1.bf16.msra.mxu0 0
    %831 = vmatprep.subr.bf16.mxu0 0
    %832 = vmatpush1.bf16.msra.mxu0 0
    %833 = vmatprep.subr.bf16.mxu0 0
    %834 = vmatpush1.bf16.msra.mxu0 0
    %835 = vmatprep.subr.bf16.mxu0 0
    %836 = vmatpush1.bf16.msra.mxu0 0
    %837 = vmatprep.subr.bf16.mxu0 0
    %838 = vmatpush1.bf16.msra.mxu0 0
    %839 = vmatprep.subr.bf16.mxu0 0
    %840 = vmatpush1.bf16.msra.mxu0 0
    %841 = vmatprep.subr.bf16.mxu0 0
    %842 = vmatpush1.bf16.msra.mxu0 0
    %843 = vmatprep.subr.bf16.mxu0 0
    %844 = vmatpush1.bf16.msra.mxu0 0
    %845 = vmatprep.subr.bf16.mxu0 0
    %846 = vmatpush1.bf16.msra.mxu0 0
    %847 = vmatprep.subr.bf16.mxu0 0
    %848 = vmatpush1.bf16.msra.mxu0 0
    %849 = vmatprep.subr.bf16.mxu0 0
    %850 = vmatpush1.bf16.msra.mxu0 0
    %851 = vmatprep.mubr.bf16.mxu0 0
    %852 = vmatmul.mubr.bf16.gmra.mrb[0].mxu0 %v817
    %v853 = vpop.f32.mrb[0].mxu0
    %v854 = vadd.f32 0.0, %v853
    %v855 = vpop.f32.mrb[0].mxu0
    %v856 = vpop.f32.mrb[0].mxu0
    %v857 = vpop.f32.mrb[0].mxu0
    %858 = vdwg.mxu0
    %v860 = vrot.slane %v854, 7
    %v862 = vadd.f32 %v723, %v860
    %v863 = vxor.u32 %v862, 2147483648
    %v864 = vmul.f32 %v863, 1.442695
    %v865 = vpow.pop %v864
    %v866 = vadd.f32 %v865, 1.0
    %v867 = vrcp.pop %v866
    %v868 = vmul.f32 1.0, %v867
    %v869 = vtanh.pop %v862
    %v871 = vrot.slane %v799, 7
    %v873 = vmul.f32 %v868, %v871
    %875 = vrot.lane.b32.xlu0 %v869, 64
    %v876 = vpop.permute.xlu0 %875
    %v878 = vmul.f32 %v868, %v876
    %880 = vrot.lane.b32.xlu0 %v878, 32
    %v881 = vpop.permute.xlu0 %880
    %v883 = vadd.f32 %v873, %v881
    %v884 = vtanh.pop %v883
    %886 = vrot.lane.b32.xlu0 %v884, 64
    %v887 = vpop.permute.xlu0 %886
    %v889 = vmul.f32 %v868, %v887
    %891 = vrot.lane.b32.xlu0 %v889, 32
    %v892 = vpop.permute.xlu0 %891
    %vm894 = vcmask 254977
    %895 = vst.msk [vmem:[#allocation2] sm:$0x2] %vm894, %v892
    %v896 = vpack.c.bf16 %v889, %v889
    %v898 = vshrl.u32 %v896, 16
    %900 = vrot.lane.b32.xlu0 %v898, 32
    %v901 = vpop.permute.xlu0 %900
    %v903 = vsel %vm497, %v901, 0
    %905 = vmatprep.subr.bf16.mxu0 0
    %906 = vmatpush1.bf16.msra.mxu0 %v734
    %907 = vmatprep.subr.bf16.mxu0 0
    %908 = vmatpush1.bf16.msra.mxu0 %v735
    %909 = vmatprep.subr.bf16.mxu0 0
    %910 = vmatpush1.bf16.msra.mxu0 0
    %911 = vmatprep.subr.bf16.mxu0 0
    %912 = vmatpush1.bf16.msra.mxu0 0
    %913 = vmatprep.subr.bf16.mxu0 0
    %914 = vmatpush1.bf16.msra.mxu0 0
    %915 = vmatprep.subr.bf16.mxu0 0
    %916 = vmatpush1.bf16.msra.mxu0 0
    %917 = vmatprep.subr.bf16.mxu0 0
    %918 = vmatpush1.bf16.msra.mxu0 0
    %919 = vmatprep.subr.bf16.mxu0 0
    %920 = vmatpush1.bf16.msra.mxu0 0
    %921 = vmatprep.subr.bf16.mxu0 0
    %922 = vmatpush1.bf16.msra.mxu0 0
    %923 = vmatprep.subr.bf16.mxu0 0
    %924 = vmatpush1.bf16.msra.mxu0 0
    %925 = vmatprep.subr.bf16.mxu0 0
    %926 = vmatpush1.bf16.msra.mxu0 0
    %927 = vmatprep.subr.bf16.mxu0 0
    %928 = vmatpush1.bf16.msra.mxu0 0
    %929 = vmatprep.subr.bf16.mxu0 0
    %930 = vmatpush1.bf16.msra.mxu0 0
    %931 = vmatprep.subr.bf16.mxu0 0
    %932 = vmatpush1.bf16.msra.mxu0 0
    %933 = vmatprep.subr.bf16.mxu0 0
    %934 = vmatpush1.bf16.msra.mxu0 0
    %935 = vmatprep.subr.bf16.mxu0 0
    %936 = vmatpush1.bf16.msra.mxu0 0
    %937 = vmatprep.mubr.bf16.mxu0 0
    %938 = vmatmul.mubr.bf16.gmra.mrb[0].mxu0 %v903
    %v939 = vpop.f32.mrb[0].mxu0
    %v940 = vadd.f32 0.0, %v939
    %v941 = vpop.f32.mrb[0].mxu0
    %v942 = vpop.f32.mrb[0].mxu0
    %v943 = vpop.f32.mrb[0].mxu0
    %944 = vdwg.mxu0
    %v946 = vrot.slane %v940, 6
    %v948 = vadd.f32 %v723, %v946
    %v949 = vxor.u32 %v948, 2147483648
    %v950 = vmul.f32 %v949, 1.442695
    %v951 = vpow.pop %v950
    %v952 = vadd.f32 %v951, 1.0
    %v953 = vrcp.pop %v952
    %v954 = vmul.f32 1.0, %v953
    %v955 = vtanh.pop %v948
    %v957 = vrot.slane %v883, 7
    %v959 = vmul.f32 %v954, %v957
    %961 = vrot.lane.b32.xlu0 %v955, 64
    %v962 = vpop.permute.xlu0 %961
    %v964 = vmul.f32 %v954, %v962
    %966 = vrot.lane.b32.xlu0 %v964, 32
    %v967 = vpop.permute.xlu0 %966
    %v969 = vadd.f32 %v959, %v967
    %v970 = vtanh.pop %v969
    %972 = vrot.lane.b32.xlu0 %v970, 64
    %v973 = vpop.permute.xlu0 %972
    %v975 = vmul.f32 %v954, %v973
    %977 = vrot.lane.b32.xlu0 %v975, 32
    %v978 = vpop.permute.xlu0 %977
    %vm980 = vcmask 256002
    %981 = vst.msk [vmem:[#allocation2] sm:$0x4] %vm980, %v978
    %v982 = vpack.c.bf16 %v975, %v975
    %v984 = vrot.slane %v982, 1
    %985 = vrot.lane.b32.xlu0 %v984, 32
    %v986 = vpop.permute.xlu0 %985
    %v988 = vsel %vm497, %v986, 0
    %990 = vmatprep.subr.bf16.mxu0 0
    %991 = vmatpush1.bf16.msra.mxu0 %v734
    %992 = vmatprep.subr.bf16.mxu0 0
    %993 = vmatpush1.bf16.msra.mxu0 %v735
    %994 = vmatprep.subr.bf16.mxu0 0
    %995 = vmatpush1.bf16.msra.mxu0 0
    %996 = vmatprep.subr.bf16.mxu0 0
    %997 = vmatpush1.bf16.msra.mxu0 0
    %998 = vmatprep.subr.bf16.mxu0 0
    %999 = vmatpush1.bf16.msra.mxu0 0
    %1000 = vmatprep.subr.bf16.mxu0 0
    %1001 = vmatpush1.bf16.msra.mxu0 0
    %1002 = vmatprep.subr.bf16.mxu0 0
    %1003 = vmatpush1.bf16.msra.mxu0 0
    %1004 = vmatprep.subr.bf16.mxu0 0
    %1005 = vmatpush1.bf16.msra.mxu0 0
    %1006 = vmatprep.subr.bf16.mxu0 0
    %1007 = vmatpush1.bf16.msra.mxu0 0
    %1008 = vmatprep.subr.bf16.mxu0 0
    %1009 = vmatpush1.bf16.msra.mxu0 0
    %1010 = vmatprep.subr.bf16.mxu0 0
    %1011 = vmatpush1.bf16.msra.mxu0 0
    %1012 = vmatprep.subr.bf16.mxu0 0
    %1013 = vmatpush1.bf16.msra.mxu0 0
    %1014 = vmatprep.subr.bf16.mxu0 0
    %1015 = vmatpush1.bf16.msra.mxu0 0
    %1016 = vmatprep.subr.bf16.mxu0 0
    %1017 = vmatpush1.bf16.msra.mxu0 0
    %1018 = vmatprep.subr.bf16.mxu0 0
    %1019 = vmatpush1.bf16.msra.mxu0 0
    %1020 = vmatprep.subr.bf16.mxu0 0
    %1021 = vmatpush1.bf16.msra.mxu0 0
    %1022 = vmatprep.mubr.bf16.mxu0 0
    %1023 = vmatmul.mubr.bf16.gmra.mrb[0].mxu0 %v988
    %v1024 = vpop.f32.mrb[0].mxu0
    %v1025 = vadd.f32 0.0, %v1024
    %v1026 = vpop.f32.mrb[0].mxu0
    %v1027 = vpop.f32.mrb[0].mxu0
    %v1028 = vpop.f32.mrb[0].mxu0
    %1029 = vdwg.mxu0
    %v1031 = vrot.slane %v1025, 5
    %v1033 = vadd.f32 %v723, %v1031
    %v1034 = vxor.u32 %v1033, 2147483648
    %v1035 = vmul.f32 %v1034, 1.442695
    %v1036 = vpow.pop %v1035
    %v1037 = vadd.f32 %v1036, 1.0
    %v1038 = vrcp.pop %v1037
    %v1039 = vmul.f32 1.0, %v1038
    %v1040 = vtanh.pop %v1033
    %v1042 = vrot.slane %v969, 7
    %v1044 = vmul.f32 %v1039, %v1042
    %1046 = vrot.lane.b32.xlu0 %v1040, 64
    %v1047 = vpop.permute.xlu0 %1046
    %v1049 = vmul.f32 %v1039, %v1047
    %1051 = vrot.lane.b32.xlu0 %v1049, 32
    %v1052 = vpop.permute.xlu0 %1051
    %v1054 = vadd.f32 %v1044, %v1052
    %v1055 = vtanh.pop %v1054
    %1057 = vrot.lane.b32.xlu0 %v1055, 64
    %v1058 = vpop.permute.xlu0 %1057
    %v1060 = vmul.f32 %v1039, %v1058
    %1062 = vrot.lane.b32.xlu0 %v1060, 32
    %v1063 = vpop.permute.xlu0 %1062
    %vm1065 = vcmask 257027
    %1066 = vst.msk [vmem:[#allocation2] sm:$0x8] %vm1065, %v1063
    %v1067 = vpack.c.bf16 %v1060, %v1060
    %v1069 = vshrl.u32 %v1067, 16
    %v1071 = vrot.slane %v1069, 1
    %1072 = vrot.lane.b32.xlu0 %v1071, 32
    %v1073 = vpop.permute.xlu0 %1072
    %v1075 = vsel %vm497, %v1073, 0
    %1077 = vmatprep.subr.bf16.mxu0 0
    %1078 = vmatpush1.bf16.msra.mxu0 %v734
    %1079 = vmatprep.subr.bf16.mxu0 0
    %1080 = vmatpush1.bf16.msra.mxu0 %v735
    %1081 = vmatprep.subr.bf16.mxu0 0
    %1082 = vmatpush1.bf16.msra.mxu0 0
    %1083 = vmatprep.subr.bf16.mxu0 0
    %1084 = vmatpush1.bf16.msra.mxu0 0
    %1085 = vmatprep.subr.bf16.mxu0 0
    %1086 = vmatpush1.bf16.msra.mxu0 0
    %1087 = vmatprep.subr.bf16.mxu0 0
    %1088 = vmatpush1.bf16.msra.mxu0 0
    %1089 = vmatprep.subr.bf16.mxu0 0
    %1090 = vmatpush1.bf16.msra.mxu0 0
    %1091 = vmatprep.subr.bf16.mxu0 0
    %1092 = vmatpush1.bf16.msra.mxu0 0
    %1093 = vmatprep.subr.bf16.mxu0 0
    %1094 = vmatpush1.bf16.msra.mxu0 0
    %1095 = vmatprep.subr.bf16.mxu0 0
    %1096 = vmatpush1.bf16.msra.mxu0 0
    %1097 = vmatprep.subr.bf16.mxu0 0
    %1098 = vmatpush1.bf16.msra.mxu0 0
    %1099 = vmatprep.subr.bf16.mxu0 0
    %1100 = vmatpush1.bf16.msra.mxu0 0
    %1101 = vmatprep.subr.bf16.mxu0 0
    %1102 = vmatpush1.bf16.msra.mxu0 0
    %1103 = vmatprep.subr.bf16.mxu0 0
    %1104 = vmatpush1.bf16.msra.mxu0 0
    %1105 = vmatprep.subr.bf16.mxu0 0
    %1106 = vmatpush1.bf16.msra.mxu0 0
    %1107 = vmatprep.subr.bf16.mxu0 0
    %1108 = vmatpush1.bf16.msra.mxu0 0
    %1109 = vmatprep.mubr.bf16.mxu0 0
    %1110 = vmatmul.mubr.bf16.gmra.mrb[0].mxu0 %v1075
    %v1111 = vpop.f32.mrb[0].mxu0
    %v1112 = vadd.f32 0.0, %v1111
    %v1113 = vpop.f32.mrb[0].mxu0
    %v1114 = vpop.f32.mrb[0].mxu0
    %v1115 = vpop.f32.mrb[0].mxu0
    %1116 = vdwg.mxu0
    %v1118 = vrot.slane %v1112, 4
    %v1120 = vadd.f32 %v723, %v1118
    %v1121 = vxor.u32 %v1120, 2147483648
    %v1122 = vmul.f32 %v1121, 1.442695
    %v1123 = vpow.pop %v1122
    %v1124 = vadd.f32 %v1123, 1.0
    %v1125 = vrcp.pop %v1124
    %v1126 = vmul.f32 1.0, %v1125
    %v1127 = vtanh.pop %v1120
    %v1129 = vrot.slane %v1054, 7
    %v1131 = vmul.f32 %v1126, %v1129
    %1133 = vrot.lane.b32.xlu0 %v1127, 64
    %v1134 = vpop.permute.xlu0 %1133
    %v1136 = vmul.f32 %v1126, %v1134
    %1138 = vrot.lane.b32.xlu0 %v1136, 32
    %v1139 = vpop.permute.xlu0 %1138
    %v1141 = vadd.f32 %v1131, %v1139
    %v1142 = vtanh.pop %v1141
    %1144 = vrot.lane.b32.xlu0 %v1142, 64
    %v1145 = vpop.permute.xlu0 %1144
    %v1147 = vmul.f32 %v1126, %v1145
    %1149 = vrot.lane.b32.xlu0 %v1147, 32
    %v1150 = vpop.permute.xlu0 %1149
    %vm1152 = vcmask 258052
    %1153 = vst.msk [vmem:[#allocation2] sm:$0x10] %vm1152, %v1150
    %v1154 = vpack.c.bf16 %v1147, %v1147
    %v1156 = vrot.slane %v1154, 2
    %1157 = vrot.lane.b32.xlu0 %v1156, 32
    %v1158 = vpop.permute.xlu0 %1157
    %v1160 = vsel %vm497, %v1158, 0
    %1162 = vmatprep.subr.bf16.mxu0 0
    %1163 = vmatpush1.bf16.msra.mxu0 %v734
    %1164 = vmatprep.subr.bf16.mxu0 0
    %1165 = vmatpush1.bf16.msra.mxu0 %v735
    %1166 = vmatprep.subr.bf16.mxu0 0
    %1167 = vmatpush1.bf16.msra.mxu0 0
    %1168 = vmatprep.subr.bf16.mxu0 0
    %1169 = vmatpush1.bf16.msra.mxu0 0
    %1170 = vmatprep.subr.bf16.mxu0 0
    %1171 = vmatpush1.bf16.msra.mxu0 0
    %1172 = vmatprep.subr.bf16.mxu0 0
    %1173 = vmatpush1.bf16.msra.mxu0 0
    %1174 = vmatprep.subr.bf16.mxu0 0
    %1175 = vmatpush1.bf16.msra.mxu0 0
    %1176 = vmatprep.subr.bf16.mxu0 0
    %1177 = vmatpush1.bf16.msra.mxu0 0
    %1178 = vmatprep.subr.bf16.mxu0 0
    %1179 = vmatpush1.bf16.msra.mxu0 0
    %1180 = vmatprep.subr.bf16.mxu0 0
    %1181 = vmatpush1.bf16.msra.mxu0 0
    %1182 = vmatprep.subr.bf16.mxu0 0
    %1183 = vmatpush1.bf16.msra.mxu0 0
    %1184 = vmatprep.subr.bf16.mxu0 0
    %1185 = vmatpush1.bf16.msra.mxu0 0
    %1186 = vmatprep.subr.bf16.mxu0 0
    %1187 = vmatpush1.bf16.msra.mxu0 0
    %1188 = vmatprep.subr.bf16.mxu0 0
    %1189 = vmatpush1.bf16.msra.mxu0 0
    %1190 = vmatprep.subr.bf16.mxu0 0
    %1191 = vmatpush1.bf16.msra.mxu0 0
    %1192 = vmatprep.subr.bf16.mxu0 0
    %1193 = vmatpush1.bf16.msra.mxu0 0
    %1194 = vmatprep.mubr.bf16.mxu0 0
    %1195 = vmatmul.mubr.bf16.gmra.mrb[0].mxu0 %v1160
    %v1196 = vpop.f32.mrb[0].mxu0
    %v1197 = vadd.f32 0.0, %v1196
    %v1198 = vpop.f32.mrb[0].mxu0
    %v1199 = vpop.f32.mrb[0].mxu0
    %v1200 = vpop.f32.mrb[0].mxu0
    %1201 = vdwg.mxu0
    %v1203 = vrot.slane %v1197, 3
    %v1205 = vadd.f32 %v723, %v1203
    %v1206 = vxor.u32 %v1205, 2147483648
    %v1207 = vmul.f32 %v1206, 1.442695
    %v1208 = vpow.pop %v1207
    %v1209 = vadd.f32 %v1208, 1.0
    %v1210 = vrcp.pop %v1209
    %v1211 = vmul.f32 1.0, %v1210
    %v1212 = vtanh.pop %v1205
    %v1214 = vrot.slane %v1141, 7
    %v1216 = vmul.f32 %v1211, %v1214
    %1218 = vrot.lane.b32.xlu0 %v1212, 64
    %v1219 = vpop.permute.xlu0 %1218
    %v1221 = vmul.f32 %v1211, %v1219
    %1223 = vrot.lane.b32.xlu0 %v1221, 32
    %v1224 = vpop.permute.xlu0 %1223
    %v1226 = vadd.f32 %v1216, %v1224
    %v1227 = vtanh.pop %v1226
    %1229 = vrot.lane.b32.xlu0 %v1227, 64
    %v1230 = vpop.permute.xlu0 %1229
    %v1232 = vmul.f32 %v1211, %v1230
    %1234 = vrot.lane.b32.xlu0 %v1232, 32
    %v1235 = vpop.permute.xlu0 %1234
    %vm1237 = vcmask 259077
    %1238 = vst.msk [vmem:[#allocation2] sm:$0x20] %vm1237, %v1235
    %v1239 = vpack.c.bf16 %v1232, %v1232
    %v1241 = vshrl.u32 %v1239, 16
    %v1243 = vrot.slane %v1241, 2
    %1244 = vrot.lane.b32.xlu0 %v1243, 32
    %v1245 = vpop.permute.xlu0 %1244
    %v1247 = vsel %vm497, %v1245, 0
    %1249 = vmatprep.subr.bf16.mxu0 0
    %1250 = vmatpush1.bf16.msra.mxu0 %v734
    %1251 = vmatprep.subr.bf16.mxu0 0
    %1252 = vmatpush1.bf16.msra.mxu0 %v735
    %1253 = vmatprep.subr.bf16.mxu0 0
    %1254 = vmatpush1.bf16.msra.mxu0 0
    %1255 = vmatprep.subr.bf16.mxu0 0
    %1256 = vmatpush1.bf16.msra.mxu0 0
    %1257 = vmatprep.subr.bf16.mxu0 0
    %1258 = vmatpush1.bf16.msra.mxu0 0
    %1259 = vmatprep.subr.bf16.mxu0 0
    %1260 = vmatpush1.bf16.msra.mxu0 0
    %1261 = vmatprep.subr.bf16.mxu0 0
    %1262 = vmatpush1.bf16.msra.mxu0 0
    %1263 = vmatprep.subr.bf16.mxu0 0
    %1264 = vmatpush1.bf16.msra.mxu0 0
    %1265 = vmatprep.subr.bf16.mxu0 0
    %1266 = vmatpush1.bf16.msra.mxu0 0
    %1267 = vmatprep.subr.bf16.mxu0 0
    %1268 = vmatpush1.bf16.msra.mxu0 0
    %1269 = vmatprep.subr.bf16.mxu0 0
    %1270 = vmatpush1.bf16.msra.mxu0 0
    %1271 = vmatprep.subr.bf16.mxu0 0
    %1272 = vmatpush1.bf16.msra.mxu0 0
    %1273 = vmatprep.subr.bf16.mxu0 0
    %1274 = vmatpush1.bf16.msra.mxu0 0
    %1275 = vmatprep.subr.bf16.mxu0 0
    %1276 = vmatpush1.bf16.msra.mxu0 0
    %1277 = vmatprep.subr.bf16.mxu0 0
    %1278 = vmatpush1.bf16.msra.mxu0 0
    %1279 = vmatprep.subr.bf16.mxu0 0
    %1280 = vmatpush1.bf16.msra.mxu0 0
    %1281 = vmatprep.mubr.bf16.mxu0 0
    %1282 = vmatmul.mubr.bf16.gmra.mrb[0].mxu0 %v1247
    %v1283 = vpop.f32.mrb[0].mxu0
    %v1284 = vadd.f32 0.0, %v1283
    %v1285 = vpop.f32.mrb[0].mxu0
    %v1286 = vpop.f32.mrb[0].mxu0
    %v1287 = vpop.f32.mrb[0].mxu0
    %1288 = vdwg.mxu0
    %v1290 = vrot.slane %v1284, 2
    %v1292 = vadd.f32 %v723, %v1290
    %v1293 = vxor.u32 %v1292, 2147483648
    %v1294 = vmul.f32 %v1293, 1.442695
    %v1295 = vpow.pop %v1294
    %v1296 = vadd.f32 %v1295, 1.0
    %v1297 = vrcp.pop %v1296
    %v1298 = vmul.f32 1.0, %v1297
    %v1299 = vtanh.pop %v1292
    %v1301 = vrot.slane %v1226, 7
    %v1303 = vmul.f32 %v1298, %v1301
    %1305 = vrot.lane.b32.xlu0 %v1299, 64
    %v1306 = vpop.permute.xlu0 %1305
    %v1308 = vmul.f32 %v1298, %v1306
    %1310 = vrot.lane.b32.xlu0 %v1308, 32
    %v1311 = vpop.permute.xlu0 %1310
    %v1313 = vadd.f32 %v1303, %v1311
    %v1314 = vtanh.pop %v1313
    %1316 = vrot.lane.b32.xlu0 %v1314, 64
    %v1317 = vpop.permute.xlu0 %1316
    %v1319 = vmul.f32 %v1298, %v1317
    %1321 = vrot.lane.b32.xlu0 %v1319, 32
    %v1322 = vpop.permute.xlu0 %1321
    %vm1324 = vcmask 260102
    %1325 = vst.msk [vmem:[#allocation2] sm:$0x40] %vm1324, %v1322
    %v1326 = vpack.c.bf16 %v1319, %v1319
    %v1328 = vrot.slane %v1326, 3
    %1329 = vrot.lane.b32.xlu0 %v1328, 32
    %v1330 = vpop.permute.xlu0 %1329
    %v1332 = vsel %vm497, %v1330, 0
    %1334 = vmatprep.subr.bf16.mxu0 0
    %1335 = vmatpush1.bf16.msra.mxu0 %v734
    %1336 = vmatprep.subr.bf16.mxu0 0
    %1337 = vmatpush1.bf16.msra.mxu0 %v735
    %1338 = vmatprep.subr.bf16.mxu0 0
    %1339 = vmatpush1.bf16.msra.mxu0 0
    %1340 = vmatprep.subr.bf16.mxu0 0
    %1341 = vmatpush1.bf16.msra.mxu0 0
    %1342 = vmatprep.subr.bf16.mxu0 0
    %1343 = vmatpush1.bf16.msra.mxu0 0
    %1344 = vmatprep.subr.bf16.mxu0 0
    %1345 = vmatpush1.bf16.msra.mxu0 0
    %1346 = vmatprep.subr.bf16.mxu0 0
    %1347 = vmatpush1.bf16.msra.mxu0 0
    %1348 = vmatprep.subr.bf16.mxu0 0
    %1349 = vmatpush1.bf16.msra.mxu0 0
    %1350 = vmatprep.subr.bf16.mxu0 0
    %1351 = vmatpush1.bf16.msra.mxu0 0
    %1352 = vmatprep.subr.bf16.mxu0 0
    %1353 = vmatpush1.bf16.msra.mxu0 0
    %1354 = vmatprep.subr.bf16.mxu0 0
    %1355 = vmatpush1.bf16.msra.mxu0 0
    %1356 = vmatprep.subr.bf16.mxu0 0
    %1357 = vmatpush1.bf16.msra.mxu0 0
    %1358 = vmatprep.subr.bf16.mxu0 0
    %1359 = vmatpush1.bf16.msra.mxu0 0
    %1360 = vmatprep.subr.bf16.mxu0 0
    %1361 = vmatpush1.bf16.msra.mxu0 0
    %1362 = vmatprep.subr.bf16.mxu0 0
    %1363 = vmatpush1.bf16.msra.mxu0 0
    %1364 = vmatprep.subr.bf16.mxu0 0
    %1365 = vmatpush1.bf16.msra.mxu0 0
    %1366 = vmatprep.mubr.bf16.mxu0 0
    %1367 = vmatmul.mubr.bf16.gmra.mrb[0].mxu0 %v1332
    %v1368 = vpop.f32.mrb[0].mxu0
    %v1369 = vadd.f32 0.0, %v1368
    %v1370 = vpop.f32.mrb[0].mxu0
    %v1371 = vpop.f32.mrb[0].mxu0
    %v1372 = vpop.f32.mrb[0].mxu0
    %1373 = vdwg.mxu0
    %v1375 = vrot.slane %v1369, 1
    %v1377 = vadd.f32 %v723, %v1375
    %v1378 = vxor.u32 %v1377, 2147483648
    %v1379 = vmul.f32 %v1378, 1.442695
    %v1380 = vpow.pop %v1379
    %v1381 = vadd.f32 %v1380, 1.0
    %v1382 = vrcp.pop %v1381
    %v1383 = vmul.f32 1.0, %v1382
    %v1384 = vtanh.pop %v1377
    %v1386 = vrot.slane %v1313, 7
    %v1388 = vmul.f32 %v1383, %v1386
    %1390 = vrot.lane.b32.xlu0 %v1384, 64
    %v1391 = vpop.permute.xlu0 %1390
    %v1393 = vmul.f32 %v1383, %v1391
    %1395 = vrot.lane.b32.xlu0 %v1393, 32
    %v1396 = vpop.permute.xlu0 %1395
    %v1398 = vadd.f32 %v1388, %v1396
    %v1399 = vtanh.pop %v1398
    %1401 = vrot.lane.b32.xlu0 %v1399, 64
    %v1402 = vpop.permute.xlu0 %1401
    %v1404 = vmul.f32 %v1383, %v1402
    %1406 = vrot.lane.b32.xlu0 %v1404, 32
    %v1407 = vpop.permute.xlu0 %1406
    %vm1409 = vcmask 261127
    %1410 = vst.msk [vmem:[#allocation2] sm:$0x80] %vm1409, %v1407
    %v1411 = vpack.c.bf16 %v1404, %v1404
    %v1413 = vshrl.u32 %v1411, 16
    %v1415 = vrot.slane %v1413, 3
    %1416 = vrot.lane.b32.xlu0 %v1415, 32
    %v1417 = vpop.permute.xlu0 %1416
    %v1419 = vsel %vm497, %v1417, 0
    %1421 = vmatprep.subr.bf16.mxu0 0
    %1422 = vmatpush1.bf16.msra.mxu0 %v734
    %1423 = vmatprep.subr.bf16.mxu0 0
    %1424 = vmatpush1.bf16.msra.mxu0 %v735
    %1425 = vmatprep.subr.bf16.mxu0 0
    %1426 = vmatpush1.bf16.msra.mxu0 0
    %1427 = vmatprep.subr.bf16.mxu0 0
    %1428 = vmatpush1.bf16.msra.mxu0 0
    %1429 = vmatprep.subr.bf16.mxu0 0
    %1430 = vmatpush1.bf16.msra.mxu0 0
    %1431 = vmatprep.subr.bf16.mxu0 0
    %1432 = vmatpush1.bf16.msra.mxu0 0
    %1433 = vmatprep.subr.bf16.mxu0 0
    %1434 = vmatpush1.bf16.msra.mxu0 0
    %1435 = vmatprep.subr.bf16.mxu0 0
    %1436 = vmatpush1.bf16.msra.mxu0 0
    %1437 = vmatprep.subr.bf16.mxu0 0
    %1438 = vmatpush1.bf16.msra.mxu0 0
    %1439 = vmatprep.subr.bf16.mxu0 0
    %1440 = vmatpush1.bf16.msra.mxu0 0
    %1441 = vmatprep.subr.bf16.mxu0 0
    %1442 = vmatpush1.bf16.msra.mxu0 0
    %1443 = vmatprep.subr.bf16.mxu0 0
    %1444 = vmatpush1.bf16.msra.mxu0 0
    %1445 = vmatprep.subr.bf16.mxu0 0
    %1446 = vmatpush1.bf16.msra.mxu0 0
    %1447 = vmatprep.subr.bf16.mxu0 0
    %1448 = vmatpush1.bf16.msra.mxu0 0
    %1449 = vmatprep.subr.bf16.mxu0 0
    %1450 = vmatpush1.bf16.msra.mxu0 0
    %1451 = vmatprep.subr.bf16.mxu0 0
    %1452 = vmatpush1.bf16.msra.mxu0 0
    %1453 = vmatprep.mubr.bf16.mxu0 0
    %1454 = vmatmul.mubr.bf16.gmra.mrb[0].mxu0 %v1419
    %v1455 = vpop.f32.mrb[0].mxu0
    %v1456 = vadd.f32 0.0, %v1455
    %v1457 = vpop.f32.mrb[0].mxu0
    %v1458 = vpop.f32.mrb[0].mxu0
    %v1459 = vpop.f32.mrb[0].mxu0
    %1460 = vdwg.mxu0
    %v1461 = vadd.f32 %v724, %v1456
    %v1462 = vxor.u32 %v1461, 2147483648
    %v1463 = vmul.f32 %v1462, 1.442695
    %v1464 = vpow.pop %v1463
    %v1465 = vadd.f32 %v1464, 1.0
    %v1466 = vrcp.pop %v1465
    %v1467 = vmul.f32 1.0, %v1466
    %v1468 = vtanh.pop %v1461
    %v1470 = vrot.slane %v1398, 7
    %v1472 = vmul.f32 %v1467, %v1470
    %1474 = vrot.lane.b32.xlu0 %v1468, 64
    %v1475 = vpop.permute.xlu0 %1474
    %v1477 = vmul.f32 %v1467, %v1475
    %1479 = vrot.lane.b32.xlu0 %v1477, 32
    %v1480 = vpop.permute.xlu0 %1479
    %v1482 = vadd.f32 %v1472, %v1480
    %v1483 = vtanh.pop %v1482
    %1485 = vrot.lane.b32.xlu0 %v1483, 64
    %v1486 = vpop.permute.xlu0 %1485
    %v1488 = vmul.f32 %v1467, %v1486
    %1490 = vrot.lane.b32.xlu0 %v1488, 32
    %v1491 = vpop.permute.xlu0 %1490
    %1493 = vst.msk [vmem:[#allocation2 + $0x8] sm:$0x1] %vm810, %v1491
    %v1494 = vpack.c.bf16 %v1488, %v1488
    %1496 = vrot.lane.b32.xlu0 %v1494, 32
    %v1497 = vpop.permute.xlu0 %1496
    %v1499 = vsel %vm497, %v1497, 0
    %1501 = vmatprep.subr.bf16.mxu0 0
    %1502 = vmatpush1.bf16.msra.mxu0 %v734
    %1503 = vmatprep.subr.bf16.mxu0 0
    %1504 = vmatpush1.bf16.msra.mxu0 %v735
    %1505 = vmatprep.subr.bf16.mxu0 0
    %1506 = vmatpush1.bf16.msra.mxu0 0
    %1507 = vmatprep.subr.bf16.mxu0 0
    %1508 = vmatpush1.bf16.msra.mxu0 0
    %1509 = vmatprep.subr.bf16.mxu0 0
    %1510 = vmatpush1.bf16.msra.mxu0 0
    %1511 = vmatprep.subr.bf16.mxu0 0
    %1512 = vmatpush1.bf16.msra.mxu0 0
    %1513 = vmatprep.subr.bf16.mxu0 0
    %1514 = vmatpush1.bf16.msra.mxu0 0
    %1515 = vmatprep.subr.bf16.mxu0 0
    %1516 = vmatpush1.bf16.msra.mxu0 0
    %1517 = vmatprep.subr.bf16.mxu0 0
    %1518 = vmatpush1.bf16.msra.mxu0 0
    %1519 = vmatprep.subr.bf16.mxu0 0
    %1520 = vmatpush1.bf16.msra.mxu0 0
    %1521 = vmatprep.subr.bf16.mxu0 0
    %1522 = vmatpush1.bf16.msra.mxu0 0
    %1523 = vmatprep.subr.bf16.mxu0 0
    %1524 = vmatpush1.bf16.msra.mxu0 0
    %1525 = vmatprep.subr.bf16.mxu0 0
    %1526 = vmatpush1.bf16.msra.mxu0 0
    %1527 = vmatprep.subr.bf16.mxu0 0
    %1528 = vmatpush1.bf16.msra.mxu0 0
    %1529 = vmatprep.subr.bf16.mxu0 0
    %1530 = vmatpush1.bf16.msra.mxu0 0
    %1531 = vmatprep.subr.bf16.mxu0 0
    %1532 = vmatpush1.bf16.msra.mxu0 0
    %1533 = vmatprep.mubr.bf16.mxu0 0
    %1534 = vmatmul.mubr.bf16.gmra.mrb[0].mxu0 %v1499
    %v1535 = vpop.f32.mrb[0].mxu0
    %v1536 = vadd.f32 0.0, %v1535
    %v1537 = vpop.f32.mrb[0].mxu0
    %v1538 = vpop.f32.mrb[0].mxu0
    %v1539 = vpop.f32.mrb[0].mxu0
    %1540 = vdwg.mxu0
    %v1542 = vrot.slane %v1536, 7
    %v1544 = vadd.f32 %v724, %v1542
    %v1545 = vxor.u32 %v1544, 2147483648
    %v1546 = vmul.f32 %v1545, 1.442695
    %v1547 = vpow.pop %v1546
    %v1548 = vadd.f32 %v1547, 1.0
    %v1549 = vrcp.pop %v1548
    %v1550 = vmul.f32 1.0, %v1549
    %v1551 = vtanh.pop %v1544
    %v1553 = vrot.slane %v1482, 7
    %v1555 = vmul.f32 %v1550, %v1553
    %1557 = vrot.lane.b32.xlu0 %v1551, 64
    %v1558 = vpop.permute.xlu0 %1557
    %v1560 = vmul.f32 %v1550, %v1558
    %1562 = vrot.lane.b32.xlu0 %v1560, 32
    %v1563 = vpop.permute.xlu0 %1562
    %v1565 = vadd.f32 %v1555, %v1563
    %v1566 = vtanh.pop %v1565
    %1568 = vrot.lane.b32.xlu0 %v1566, 64
    %v1569 = vpop.permute.xlu0 %1568
    %v1571 = vmul.f32 %v1550, %v1569
    %1573 = vrot.lane.b32.xlu0 %v1571, 32
    %v1574 = vpop.permute.xlu0 %1573
    %1576 = vst.msk [vmem:[#allocation2 + $0x8] sm:$0x2] %vm894, %v1574
    %v1577 = vpack.c.bf16 %v1571, %v1571
    %v1579 = vshrl.u32 %v1577, 16
    %1581 = vrot.lane.b32.xlu0 %v1579, 32
    %v1582 = vpop.permute.xlu0 %1581
    %v1584 = vsel %vm497, %v1582, 0
    %1586 = vmatprep.subr.bf16.mxu0 0
    %1587 = vmatpush1.bf16.msra.mxu0 %v734
    %1588 = vmatprep.subr.bf16.mxu0 0
    %1589 = vmatpush1.bf16.msra.mxu0 %v735
    %1590 = vmatprep.subr.bf16.mxu0 0
    %1591 = vmatpush1.bf16.msra.mxu0 0
    %1592 = vmatprep.subr.bf16.mxu0 0
    %1593 = vmatpush1.bf16.msra.mxu0 0
    %1594 = vmatprep.subr.bf16.mxu0 0
    %1595 = vmatpush1.bf16.msra.mxu0 0
    %1596 = vmatprep.subr.bf16.mxu0 0
    %1597 = vmatpush1.bf16.msra.mxu0 0
    %1598 = vmatprep.subr.bf16.mxu0 0
    %1599 = vmatpush1.bf16.msra.mxu0 0
    %1600 = vmatprep.subr.bf16.mxu0 0
    %1601 = vmatpush1.bf16.msra.mxu0 0
    %1602 = vmatprep.subr.bf16.mxu0 0
    %1603 = vmatpush1.bf16.msra.mxu0 0
    %1604 = vmatprep.subr.bf16.mxu0 0
    %1605 = vmatpush1.bf16.msra.mxu0 0
    %1606 = vmatprep.subr.bf16.mxu0 0
    %1607 = vmatpush1.bf16.msra.mxu0 0
    %1608 = vmatprep.subr.bf16.mxu0 0
    %1609 = vmatpush1.bf16.msra.mxu0 0
    %1610 = vmatprep.subr.bf16.mxu0 0
    %1611 = vmatpush1.bf16.msra.mxu0 0
    %1612 = vmatprep.subr.bf16.mxu0 0
    %1613 = vmatpush1.bf16.msra.mxu0 0
    %1614 = vmatprep.subr.bf16.mxu0 0
    %1615 = vmatpush1.bf16.msra.mxu0 0
    %1616 = vmatprep.subr.bf16.mxu0 0
    %1617 = vmatpush1.bf16.msra.mxu0 0
    %1618 = vmatprep.mubr.bf16.mxu0 0
    %1619 = vmatmul.mubr.bf16.gmra.mrb[0].mxu0 %v1584
    %v1620 = vpop.f32.mrb[0].mxu0
    %v1621 = vadd.f32 0.0, %v1620
    %v1622 = vpop.f32.mrb[0].mxu0
    %v1623 = vpop.f32.mrb[0].mxu0
    %v1624 = vpop.f32.mrb[0].mxu0
    %1625 = vdwg.mxu0
    %v1627 = vrot.slane %v1621, 6
    %v1629 = vadd.f32 %v724, %v1627
    %v1630 = vxor.u32 %v1629, 2147483648
    %v1631 = vmul.f32 %v1630, 1.442695
    %v1632 = vpow.pop %v1631
    %v1633 = vadd.f32 %v1632, 1.0
    %v1634 = vrcp.pop %v1633
    %v1635 = vmul.f32 1.0, %v1634
    %v1636 = vtanh.pop %v1629
    %v1638 = vrot.slane %v1565, 7
    %v1640 = vmul.f32 %v1635, %v1638
    %1642 = vrot.lane.b32.xlu0 %v1636, 64
    %v1643 = vpop.permute.xlu0 %1642
    %v1645 = vmul.f32 %v1635, %v1643
    %1647 = vrot.lane.b32.xlu0 %v1645, 32
    %v1648 = vpop.permute.xlu0 %1647
    %v1650 = vadd.f32 %v1640, %v1648
    %v1651 = vtanh.pop %v1650
    %1653 = vrot.lane.b32.xlu0 %v1651, 64
    %v1654 = vpop.permute.xlu0 %1653
    %v1656 = vmul.f32 %v1635, %v1654
    %1658 = vrot.lane.b32.xlu0 %v1656, 32
    %v1659 = vpop.permute.xlu0 %1658
    %1661 = vst.msk [vmem:[#allocation2 + $0x8] sm:$0x4] %vm980, %v1659
    %v1662 = vpack.c.bf16 %v1656, %v1656
    %v1664 = vrot.slane %v1662, 1
    %1665 = vrot.lane.b32.xlu0 %v1664, 32
    %v1666 = vpop.permute.xlu0 %1665
    %v1668 = vsel %vm497, %v1666, 0
    %1670 = vmatprep.subr.bf16.mxu0 0
    %1671 = vmatpush1.bf16.msra.mxu0 %v734
    %1672 = vmatprep.subr.bf16.mxu0 0
    %1673 = vmatpush1.bf16.msra.mxu0 %v735
    %1674 = vmatprep.subr.bf16.mxu0 0
    %1675 = vmatpush1.bf16.msra.mxu0 0
    %1676 = vmatprep.subr.bf16.mxu0 0
    %1677 = vmatpush1.bf16.msra.mxu0 0
    %1678 = vmatprep.subr.bf16.mxu0 0
    %1679 = vmatpush1.bf16.msra.mxu0 0
    %1680 = vmatprep.subr.bf16.mxu0 0
    %1681 = vmatpush1.bf16.msra.mxu0 0
    %1682 = vmatprep.subr.bf16.mxu0 0
    %1683 = vmatpush1.bf16.msra.mxu0 0
    %1684 = vmatprep.subr.bf16.mxu0 0
    %1685 = vmatpush1.bf16.msra.mxu0 0
    %1686 = vmatprep.subr.bf16.mxu0 0
    %1687 = vmatpush1.bf16.msra.mxu0 0
    %1688 = vmatprep.subr.bf16.mxu0 0
    %1689 = vmatpush1.bf16.msra.mxu0 0
    %1690 = vmatprep.subr.bf16.mxu0 0
    %1691 = vmatpush1.bf16.msra.mxu0 0
    %1692 = vmatprep.subr.bf16.mxu0 0
    %1693 = vmatpush1.bf16.msra.mxu0 0
    %1694 = vmatprep.subr.bf16.mxu0 0
    %1695 = vmatpush1.bf16.msra.mxu0 0
    %1696 = vmatprep.subr.bf16.mxu0 0
    %1697 = vmatpush1.bf16.msra.mxu0 0
    %1698 = vmatprep.subr.bf16.mxu0 0
    %1699 = vmatpush1.bf16.msra.mxu0 0
    %1700 = vmatprep.subr.bf16.mxu0 0
    %1701 = vmatpush1.bf16.msra.mxu0 0
    %1702 = vmatprep.mubr.bf16.mxu0 0
    %1703 = vmatmul.mubr.bf16.gmra.mrb[0].mxu0 %v1668
    %v1704 = vpop.f32.mrb[0].mxu0
    %v1705 = vadd.f32 0.0, %v1704
    %v1706 = vpop.f32.mrb[0].mxu0
    %v1707 = vpop.f32.mrb[0].mxu0
    %v1708 = vpop.f32.mrb[0].mxu0
    %1709 = vdwg.mxu0
    %v1711 = vrot.slane %v1705, 5
    %v1713 = vadd.f32 %v724, %v1711
    %v1714 = vxor.u32 %v1713, 2147483648
    %v1715 = vmul.f32 %v1714, 1.442695
    %v1716 = vpow.pop %v1715
    %v1717 = vadd.f32 %v1716, 1.0
    %v1718 = vrcp.pop %v1717
    %v1719 = vmul.f32 1.0, %v1718
    %v1720 = vtanh.pop %v1713
    %v1722 = vrot.slane %v1650, 7
    %v1724 = vmul.f32 %v1719, %v1722
    %1726 = vrot.lane.b32.xlu0 %v1720, 64
    %v1727 = vpop.permute.xlu0 %1726
    %v1729 = vmul.f32 %v1719, %v1727
    %1731 = vrot.lane.b32.xlu0 %v1729, 32
    %v1732 = vpop.permute.xlu0 %1731
    %v1734 = vadd.f32 %v1724, %v1732
    %v1735 = vtanh.pop %v1734
    %1737 = vrot.lane.b32.xlu0 %v1735, 64
    %v1738 = vpop.permute.xlu0 %1737
    %v1740 = vmul.f32 %v1719, %v1738
    %1742 = vrot.lane.b32.xlu0 %v1740, 32
    %v1743 = vpop.permute.xlu0 %1742
    %1745 = vst.msk [vmem:[#allocation2 + $0x8] sm:$0x8] %vm1065, %v1743
    %v1746 = vpack.c.bf16 %v1740, %v1740
    %v1748 = vshrl.u32 %v1746, 16
    %v1750 = vrot.slane %v1748, 1
    %1751 = vrot.lane.b32.xlu0 %v1750, 32
    %v1752 = vpop.permute.xlu0 %1751
    %v1754 = vsel %vm497, %v1752, 0
    %1756 = vmatprep.subr.bf16.mxu0 0
    %1757 = vmatpush1.bf16.msra.mxu0 %v734
    %1758 = vmatprep.subr.bf16.mxu0 0
    %1759 = vmatpush1.bf16.msra.mxu0 %v735
    %1760 = vmatprep.subr.bf16.mxu0 0
    %1761 = vmatpush1.bf16.msra.mxu0 0
    %1762 = vmatprep.subr.bf16.mxu0 0
    %1763 = vmatpush1.bf16.msra.mxu0 0
    %1764 = vmatprep.subr.bf16.mxu0 0
    %1765 = vmatpush1.bf16.msra.mxu0 0
    %1766 = vmatprep.subr.bf16.mxu0 0
    %1767 = vmatpush1.bf16.msra.mxu0 0
    %1768 = vmatprep.subr.bf16.mxu0 0
    %1769 = vmatpush1.bf16.msra.mxu0 0
    %1770 = vmatprep.subr.bf16.mxu0 0
    %1771 = vmatpush1.bf16.msra.mxu0 0
    %1772 = vmatprep.subr.bf16.mxu0 0
    %1773 = vmatpush1.bf16.msra.mxu0 0
    %1774 = vmatprep.subr.bf16.mxu0 0
    %1775 = vmatpush1.bf16.msra.mxu0 0
    %1776 = vmatprep.subr.bf16.mxu0 0
    %1777 = vmatpush1.bf16.msra.mxu0 0
    %1778 = vmatprep.subr.bf16.mxu0 0
    %1779 = vmatpush1.bf16.msra.mxu0 0
    %1780 = vmatprep.subr.bf16.mxu0 0
    %1781 = vmatpush1.bf16.msra.mxu0 0
    %1782 = vmatprep.subr.bf16.mxu0 0
    %1783 = vmatpush1.bf16.msra.mxu0 0
    %1784 = vmatprep.subr.bf16.mxu0 0
    %1785 = vmatpush1.bf16.msra.mxu0 0
    %1786 = vmatprep.subr.bf16.mxu0 0
    %1787 = vmatpush1.bf16.msra.mxu0 0
    %1788 = vmatprep.mubr.bf16.mxu0 0
    %1789 = vmatmul.mubr.bf16.gmra.mrb[0].mxu0 %v1754
    %v1790 = vpop.f32.mrb[0].mxu0
    %v1791 = vadd.f32 0.0, %v1790
    %v1792 = vpop.f32.mrb[0].mxu0
    %v1793 = vpop.f32.mrb[0].mxu0
    %v1794 = vpop.f32.mrb[0].mxu0
    %1795 = vdwg.mxu0
    %v1797 = vrot.slane %v1791, 4
    %v1799 = vadd.f32 %v724, %v1797
    %v1800 = vxor.u32 %v1799, 2147483648
    %v1801 = vmul.f32 %v1800, 1.442695
    %v1802 = vpow.pop %v1801
    %v1803 = vadd.f32 %v1802, 1.0
    %v1804 = vrcp.pop %v1803
    %v1805 = vmul.f32 1.0, %v1804
    %v1806 = vtanh.pop %v1799
    %v1808 = vrot.slane %v1734, 7
    %v1810 = vmul.f32 %v1805, %v1808
    %1812 = vrot.lane.b32.xlu0 %v1806, 64
    %v1813 = vpop.permute.xlu0 %1812
    %v1815 = vmul.f32 %v1805, %v1813
    %1817 = vrot.lane.b32.xlu0 %v1815, 32
    %v1818 = vpop.permute.xlu0 %1817
    %v1820 = vadd.f32 %v1810, %v1818
    %v1821 = vtanh.pop %v1820
    %1823 = vrot.lane.b32.xlu0 %v1821, 64
    %v1824 = vpop.permute.xlu0 %1823
    %v1826 = vmul.f32 %v1805, %v1824
    %1828 = vrot.lane.b32.xlu0 %v1826, 32
    %v1829 = vpop.permute.xlu0 %1828
    %1831 = vst.msk [vmem:[#allocation2 + $0x8] sm:$0x10] %vm1152, %v1829
    %v1832 = vpack.c.bf16 %v1826, %v1826
    %v1834 = vrot.slane %v1832, 2
    %1835 = vrot.lane.b32.xlu0 %v1834, 32
    %v1836 = vpop.permute.xlu0 %1835
    %v1838 = vsel %vm497, %v1836, 0
    %1840 = vmatprep.subr.bf16.mxu0 0
    %1841 = vmatpush1.bf16.msra.mxu0 %v734
    %1842 = vmatprep.subr.bf16.mxu0 0
    %1843 = vmatpush1.bf16.msra.mxu0 %v735
    %1844 = vmatprep.subr.bf16.mxu0 0
    %1845 = vmatpush1.bf16.msra.mxu0 0
    %1846 = vmatprep.subr.bf16.mxu0 0
    %1847 = vmatpush1.bf16.msra.mxu0 0
    %1848 = vmatprep.subr.bf16.mxu0 0
    %1849 = vmatpush1.bf16.msra.mxu0 0
    %1850 = vmatprep.subr.bf16.mxu0 0
    %1851 = vmatpush1.bf16.msra.mxu0 0
    %1852 = vmatprep.subr.bf16.mxu0 0
    %1853 = vmatpush1.bf16.msra.mxu0 0
    %1854 = vmatprep.subr.bf16.mxu0 0
    %1855 = vmatpush1.bf16.msra.mxu0 0
    %1856 = vmatprep.subr.bf16.mxu0 0
    %1857 = vmatpush1.bf16.msra.mxu0 0
    %1858 = vmatprep.subr.bf16.mxu0 0
    %1859 = vmatpush1.bf16.msra.mxu0 0
    %1860 = vmatprep.subr.bf16.mxu0 0
    %1861 = vmatpush1.bf16.msra.mxu0 0
    %1862 = vmatprep.subr.bf16.mxu0 0
    %1863 = vmatpush1.bf16.msra.mxu0 0
    %1864 = vmatprep.subr.bf16.mxu0 0
    %1865 = vmatpush1.bf16.msra.mxu0 0
    %1866 = vmatprep.subr.bf16.mxu0 0
    %1867 = vmatpush1.bf16.msra.mxu0 0
    %1868 = vmatprep.subr.bf16.mxu0 0
    %1869 = vmatpush1.bf16.msra.mxu0 0
    %1870 = vmatprep.subr.bf16.mxu0 0
    %1871 = vmatpush1.bf16.msra.mxu0 0
    %1872 = vmatprep.mubr.bf16.mxu0 0
    %1873 = vmatmul.mubr.bf16.gmra.mrb[0].mxu0 %v1838
    %v1874 = vpop.f32.mrb[0].mxu0
    %v1875 = vadd.f32 0.0, %v1874
    %v1876 = vpop.f32.mrb[0].mxu0
    %v1877 = vpop.f32.mrb[0].mxu0
    %v1878 = vpop.f32.mrb[0].mxu0
    %1879 = vdwg.mxu0
    %v1881 = vrot.slane %v1875, 3
    %v1883 = vadd.f32 %v724, %v1881
    %v1884 = vxor.u32 %v1883, 2147483648
    %v1885 = vmul.f32 %v1884, 1.442695
    %v1886 = vpow.pop %v1885
    %v1887 = vadd.f32 %v1886, 1.0
    %v1888 = vrcp.pop %v1887
    %v1889 = vmul.f32 1.0, %v1888
    %v1890 = vtanh.pop %v1883
    %v1892 = vrot.slane %v1820, 7
    %v1894 = vmul.f32 %v1889, %v1892
    %1896 = vrot.lane.b32.xlu0 %v1890, 64
    %v1897 = vpop.permute.xlu0 %1896
    %v1899 = vmul.f32 %v1889, %v1897
    %1901 = vrot.lane.b32.xlu0 %v1899, 32
    %v1902 = vpop.permute.xlu0 %1901
    %v1904 = vadd.f32 %v1894, %v1902
    %v1905 = vtanh.pop %v1904
    %1907 = vrot.lane.b32.xlu0 %v1905, 64
    %v1908 = vpop.permute.xlu0 %1907
    %v1910 = vmul.f32 %v1889, %v1908
    %1912 = vrot.lane.b32.xlu0 %v1910, 32
    %v1913 = vpop.permute.xlu0 %1912
    %1915 = vst.msk [vmem:[#allocation2 + $0x8] sm:$0x20] %vm1237, %v1913
    %v1916 = vpack.c.bf16 %v1910, %v1910
    %v1918 = vshrl.u32 %v1916, 16
    %v1920 = vrot.slane %v1918, 2
    %1921 = vrot.lane.b32.xlu0 %v1920, 32
    %v1922 = vpop.permute.xlu0 %1921
    %v1924 = vsel %vm497, %v1922, 0
    %1926 = vmatprep.subr.bf16.mxu0 0
    %1927 = vmatpush1.bf16.msra.mxu0 %v734
    %1928 = vmatprep.subr.bf16.mxu0 0
    %1929 = vmatpush1.bf16.msra.mxu0 %v735
    %1930 = vmatprep.subr.bf16.mxu0 0
    %1931 = vmatpush1.bf16.msra.mxu0 0
    %1932 = vmatprep.subr.bf16.mxu0 0
    %1933 = vmatpush1.bf16.msra.mxu0 0
    %1934 = vmatprep.subr.bf16.mxu0 0
    %1935 = vmatpush1.bf16.msra.mxu0 0
    %1936 = vmatprep.subr.bf16.mxu0 0
    %1937 = vmatpush1.bf16.msra.mxu0 0
    %1938 = vmatprep.subr.bf16.mxu0 0
    %1939 = vmatpush1.bf16.msra.mxu0 0
    %1940 = vmatprep.subr.bf16.mxu0 0
    %1941 = vmatpush1.bf16.msra.mxu0 0
    %1942 = vmatprep.subr.bf16.mxu0 0
    %1943 = vmatpush1.bf16.msra.mxu0 0
    %1944 = vmatprep.subr.bf16.mxu0 0
    %1945 = vmatpush1.bf16.msra.mxu0 0
    %1946 = vmatprep.subr.bf16.mxu0 0
    %1947 = vmatpush1.bf16.msra.mxu0 0
    %1948 = vmatprep.subr.bf16.mxu0 0
    %1949 = vmatpush1.bf16.msra.mxu0 0
    %1950 = vmatprep.subr.bf16.mxu0 0
    %1951 = vmatpush1.bf16.msra.mxu0 0
    %1952 = vmatprep.subr.bf16.mxu0 0
    %1953 = vmatpush1.bf16.msra.mxu0 0
    %1954 = vmatprep.subr.bf16.mxu0 0
    %1955 = vmatpush1.bf16.msra.mxu0 0
    %1956 = vmatprep.subr.bf16.mxu0 0
    %1957 = vmatpush1.bf16.msra.mxu0 0
    %1958 = vmatprep.mubr.bf16.mxu0 0
    %1959 = vmatmul.mubr.bf16.gmra.mrb[0].mxu0 %v1924
    %v1960 = vpop.f32.mrb[0].mxu0
    %v1961 = vadd.f32 0.0, %v1960
    %v1962 = vpop.f32.mrb[0].mxu0
    %v1963 = vpop.f32.mrb[0].mxu0
    %v1964 = vpop.f32.mrb[0].mxu0
    %1965 = vdwg.mxu0
    %v1967 = vrot.slane %v1961, 2
    %v1969 = vadd.f32 %v724, %v1967
    %v1970 = vxor.u32 %v1969, 2147483648
    %v1971 = vmul.f32 %v1970, 1.442695
    %v1972 = vpow.pop %v1971
    %v1973 = vadd.f32 %v1972, 1.0
    %v1974 = vrcp.pop %v1973
    %v1975 = vmul.f32 1.0, %v1974
    %v1976 = vtanh.pop %v1969
    %v1978 = vrot.slane %v1904, 7
    %v1980 = vmul.f32 %v1975, %v1978
    %1982 = vrot.lane.b32.xlu0 %v1976, 64
    %v1983 = vpop.permute.xlu0 %1982
    %v1985 = vmul.f32 %v1975, %v1983
    %1987 = vrot.lane.b32.xlu0 %v1985, 32
    %v1988 = vpop.permute.xlu0 %1987
    %v1990 = vadd.f32 %v1980, %v1988
    %v1991 = vtanh.pop %v1990
    %1993 = vrot.lane.b32.xlu0 %v1991, 64
    %v1994 = vpop.permute.xlu0 %1993
    %v1996 = vmul.f32 %v1975, %v1994
    %1998 = vrot.lane.b32.xlu0 %v1996, 32
    %v1999 = vpop.permute.xlu0 %1998
    %2001 = vst.msk [vmem:[#allocation2 + $0x8] sm:$0x40] %vm1324, %v1999
    %v2002 = vpack.c.bf16 %v1996, %v1996
    %v2004 = vrot.slane %v2002, 3
    %2005 = vrot.lane.b32.xlu0 %v2004, 32
    %v2006 = vpop.permute.xlu0 %2005
    %v2008 = vsel %vm497, %v2006, 0
    %2010 = vmatprep.subr.bf16.mxu0 0
    %2011 = vmatpush1.bf16.msra.mxu0 %v734
    %2012 = vmatprep.subr.bf16.mxu0 0
    %2013 = vmatpush1.bf16.msra.mxu0 %v735
    %2014 = vmatprep.subr.bf16.mxu0 0
    %2015 = vmatpush1.bf16.msra.mxu0 0
    %2016 = vmatprep.subr.bf16.mxu0 0
    %2017 = vmatpush1.bf16.msra.mxu0 0
    %2018 = vmatprep.subr.bf16.mxu0 0
    %2019 = vmatpush1.bf16.msra.mxu0 0
    %2020 = vmatprep.subr.bf16.mxu0 0
    %2021 = vmatpush1.bf16.msra.mxu0 0
    %2022 = vmatprep.subr.bf16.mxu0 0
    %2023 = vmatpush1.bf16.msra.mxu0 0
    %2024 = vmatprep.subr.bf16.mxu0 0
    %2025 = vmatpush1.bf16.msra.mxu0 0
    %2026 = vmatprep.subr.bf16.mxu0 0
    %2027 = vmatpush1.bf16.msra.mxu0 0
    %2028 = vmatprep.subr.bf16.mxu0 0
    %2029 = vmatpush1.bf16.msra.mxu0 0
    %2030 = vmatprep.subr.bf16.mxu0 0
    %2031 = vmatpush1.bf16.msra.mxu0 0
    %2032 = vmatprep.subr.bf16.mxu0 0
    %2033 = vmatpush1.bf16.msra.mxu0 0
    %2034 = vmatprep.subr.bf16.mxu0 0
    %2035 = vmatpush1.bf16.msra.mxu0 0
    %2036 = vmatprep.subr.bf16.mxu0 0
    %2037 = vmatpush1.bf16.msra.mxu0 0
    %2038 = vmatprep.subr.bf16.mxu0 0
    %2039 = vmatpush1.bf16.msra.mxu0 0
    %2040 = vmatprep.subr.bf16.mxu0 0
    %2041 = vmatpush1.bf16.msra.mxu0 0
    %2042 = vmatprep.mubr.bf16.mxu0 0
    %2043 = vmatmul.mubr.bf16.gmra.mrb[0].mxu0 %v2008
    %v2044 = vpop.f32.mrb[0].mxu0
    %v2045 = vadd.f32 0.0, %v2044
    %v2046 = vpop.f32.mrb[0].mxu0
    %v2047 = vpop.f32.mrb[0].mxu0
    %v2048 = vpop.f32.mrb[0].mxu0
    %2049 = vdwg.mxu0
    %v2051 = vrot.slane %v2045, 1
    %v2053 = vadd.f32 %v724, %v2051
    %v2054 = vxor.u32 %v2053, 2147483648
    %v2055 = vmul.f32 %v2054, 1.442695
    %v2056 = vpow.pop %v2055
    %v2057 = vadd.f32 %v2056, 1.0
    %v2058 = vrcp.pop %v2057
    %v2059 = vmul.f32 1.0, %v2058
    %v2060 = vtanh.pop %v2053
    %v2062 = vrot.slane %v1990, 7
    %v2064 = vmul.f32 %v2059, %v2062
    %2066 = vrot.lane.b32.xlu0 %v2060, 64
    %v2067 = vpop.permute.xlu0 %2066
    %v2069 = vmul.f32 %v2059, %v2067
    %2071 = vrot.lane.b32.xlu0 %v2069, 32
    %v2072 = vpop.permute.xlu0 %2071
    %v2074 = vadd.f32 %v2064, %v2072
    %v2075 = vtanh.pop %v2074
    %2077 = vrot.lane.b32.xlu0 %v2075, 64
    %v2078 = vpop.permute.xlu0 %2077
    %v2080 = vmul.f32 %v2059, %v2078
    %2082 = vrot.lane.b32.xlu0 %v2080, 32
    %v2083 = vpop.permute.xlu0 %2082
    %2085 = vst.msk [vmem:[#allocation2 + $0x8] sm:$0x80] %vm1409, %v2083
    %v2086 = vpack.c.bf16 %v2080, %v2080
    %v2088 = vshrl.u32 %v2086, 16
    %v2090 = vrot.slane %v2088, 3
    %2091 = vrot.lane.b32.xlu0 %v2090, 32
    %v2092 = vpop.permute.xlu0 %2091
    %v2094 = vsel %vm497, %v2092, 0
    %2096 = vmatprep.subr.bf16.mxu0 0
    %2097 = vmatpush1.bf16.msra.mxu0 %v734
    %2098 = vmatprep.subr.bf16.mxu0 0
    %2099 = vmatpush1.bf16.msra.mxu0 %v735
    %2100 = vmatprep.subr.bf16.mxu0 0
    %2101 = vmatpush1.bf16.msra.mxu0 0
    %2102 = vmatprep.subr.bf16.mxu0 0
    %2103 = vmatpush1.bf16.msra.mxu0 0
    %2104 = vmatprep.subr.bf16.mxu0 0
    %2105 = vmatpush1.bf16.msra.mxu0 0
    %2106 = vmatprep.subr.bf16.mxu0 0
    %2107 = vmatpush1.bf16.msra.mxu0 0
    %2108 = vmatprep.subr.bf16.mxu0 0
    %2109 = vmatpush1.bf16.msra.mxu0 0
    %2110 = vmatprep.subr.bf16.mxu0 0
    %2111 = vmatpush1.bf16.msra.mxu0 0
    %2112 = vmatprep.subr.bf16.mxu0 0
    %2113 = vmatpush1.bf16.msra.mxu0 0
    %2114 = vmatprep.subr.bf16.mxu0 0
    %2115 = vmatpush1.bf16.msra.mxu0 0
    %2116 = vmatprep.subr.bf16.mxu0 0
    %2117 = vmatpush1.bf16.msra.mxu0 0
    %2118 = vmatprep.subr.bf16.mxu0 0
    %2119 = vmatpush1.bf16.msra.mxu0 0
    %2120 = vmatprep.subr.bf16.mxu0 0
    %2121 = vmatpush1.bf16.msra.mxu0 0
    %2122 = vmatprep.subr.bf16.mxu0 0
    %2123 = vmatpush1.bf16.msra.mxu0 0
    %2124 = vmatprep.subr.bf16.mxu0 0
    %2125 = vmatpush1.bf16.msra.mxu0 0
    %2126 = vmatprep.subr.bf16.mxu0 0
    %2127 = vmatpush1.bf16.msra.mxu0 0
    %2128 = vmatprep.mubr.bf16.mxu0 0
    %2129 = vmatmul.mubr.bf16.gmra.mrb[0].mxu0 %v2094
    %v2130 = vpop.f32.mrb[0].mxu0
    %v2131 = vadd.f32 0.0, %v2130
    %v2132 = vpop.f32.mrb[0].mxu0
    %v2133 = vpop.f32.mrb[0].mxu0
    %v2134 = vpop.f32.mrb[0].mxu0
    %2135 = vdwg.mxu0
    %v2136 = vadd.f32 %v725, %v2131
    %v2137 = vxor.u32 %v2136, 2147483648
    %v2138 = vmul.f32 %v2137, 1.442695
    %v2139 = vpow.pop %v2138
    %v2140 = vadd.f32 %v2139, 1.0
    %v2141 = vrcp.pop %v2140
    %v2142 = vmul.f32 1.0, %v2141
    %v2143 = vtanh.pop %v2136
    %v2145 = vrot.slane %v2074, 7
    %v2147 = vmul.f32 %v2142, %v2145
    %2149 = vrot.lane.b32.xlu0 %v2143, 64
    %v2150 = vpop.permute.xlu0 %2149
    %v2152 = vmul.f32 %v2142, %v2150
    %2154 = vrot.lane.b32.xlu0 %v2152, 32
    %v2155 = vpop.permute.xlu0 %2154
    %v2157 = vadd.f32 %v2147, %v2155
    %v2158 = vtanh.pop %v2157
    %2160 = vrot.lane.b32.xlu0 %v2158, 64
    %v2161 = vpop.permute.xlu0 %2160
    %v2163 = vmul.f32 %v2142, %v2161
    %2165 = vrot.lane.b32.xlu0 %v2163, 32
    %v2166 = vpop.permute.xlu0 %2165
    %2168 = vst.msk [vmem:[#allocation2 + $0x10] sm:$0x1] %vm810, %v2166
    %v2169 = vpack.c.bf16 %v2163, %v2163
    %2171 = vrot.lane.b32.xlu0 %v2169, 32
    %v2172 = vpop.permute.xlu0 %2171
    %v2174 = vsel %vm497, %v2172, 0
    %2176 = vmatprep.subr.bf16.mxu0 0
    %2177 = vmatpush1.bf16.msra.mxu0 %v734
    %2178 = vmatprep.subr.bf16.mxu0 0
    %2179 = vmatpush1.bf16.msra.mxu0 %v735
    %2180 = vmatprep.subr.bf16.mxu0 0
    %2181 = vmatpush1.bf16.msra.mxu0 0
    %2182 = vmatprep.subr.bf16.mxu0 0
    %2183 = vmatpush1.bf16.msra.mxu0 0
    %2184 = vmatprep.subr.bf16.mxu0 0
    %2185 = vmatpush1.bf16.msra.mxu0 0
    %2186 = vmatprep.subr.bf16.mxu0 0
    %2187 = vmatpush1.bf16.msra.mxu0 0
    %2188 = vmatprep.subr.bf16.mxu0 0
    %2189 = vmatpush1.bf16.msra.mxu0 0
    %2190 = vmatprep.subr.bf16.mxu0 0
    %2191 = vmatpush1.bf16.msra.mxu0 0
    %2192 = vmatprep.subr.bf16.mxu0 0
    %2193 = vmatpush1.bf16.msra.mxu0 0
    %2194 = vmatprep.subr.bf16.mxu0 0
    %2195 = vmatpush1.bf16.msra.mxu0 0
    %2196 = vmatprep.subr.bf16.mxu0 0
    %2197 = vmatpush1.bf16.msra.mxu0 0
    %2198 = vmatprep.subr.bf16.mxu0 0
    %2199 = vmatpush1.bf16.msra.mxu0 0
    %2200 = vmatprep.subr.bf16.mxu0 0
    %2201 = vmatpush1.bf16.msra.mxu0 0
    %2202 = vmatprep.subr.bf16.mxu0 0
    %2203 = vmatpush1.bf16.msra.mxu0 0
    %2204 = vmatprep.subr.bf16.mxu0 0
    %2205 = vmatpush1.bf16.msra.mxu0 0
    %2206 = vmatprep.subr.bf16.mxu0 0
    %2207 = vmatpush1.bf16.msra.mxu0 0
    %2208 = vmatprep.mubr.bf16.mxu0 0
    %2209 = vmatmul.mubr.bf16.gmra.mrb[0].mxu0 %v2174
    %v2210 = vpop.f32.mrb[0].mxu0
    %v2211 = vadd.f32 0.0, %v2210
    %v2212 = vpop.f32.mrb[0].mxu0
    %v2213 = vpop.f32.mrb[0].mxu0
    %v2214 = vpop.f32.mrb[0].mxu0
    %2215 = vdwg.mxu0
    %v2217 = vrot.slane %v2211, 7
    %v2219 = vadd.f32 %v725, %v2217
    %v2220 = vxor.u32 %v2219, 2147483648
    %v2221 = vmul.f32 %v2220, 1.442695
    %v2222 = vpow.pop %v2221
    %v2223 = vadd.f32 %v2222, 1.0
    %v2224 = vrcp.pop %v2223
    %v2225 = vmul.f32 1.0, %v2224
    %v2226 = vtanh.pop %v2219
    %v2228 = vrot.slane %v2157, 7
    %v2230 = vmul.f32 %v2225, %v2228
    %2232 = vrot.lane.b32.xlu0 %v2226, 64
    %v2233 = vpop.permute.xlu0 %2232
    %v2235 = vmul.f32 %v2225, %v2233
    %2237 = vrot.lane.b32.xlu0 %v2235, 32
    %v2238 = vpop.permute.xlu0 %2237
    %v2240 = vadd.f32 %v2230, %v2238
    %v2241 = vtanh.pop %v2240
    %2243 = vrot.lane.b32.xlu0 %v2241, 64
    %v2244 = vpop.permute.xlu0 %2243
    %v2246 = vmul.f32 %v2225, %v2244
    %2248 = vrot.lane.b32.xlu0 %v2246, 32
    %v2249 = vpop.permute.xlu0 %2248
    %2251 = vst.msk [vmem:[#allocation2 + $0x10] sm:$0x2] %vm894, %v2249
    %v2252 = vpack.c.bf16 %v2246, %v2246
    %v2254 = vshrl.u32 %v2252, 16
    %2256 = vrot.lane.b32.xlu0 %v2254, 32
    %v2257 = vpop.permute.xlu0 %2256
    %v2259 = vsel %vm497, %v2257, 0
    %2261 = vmatprep.subr.bf16.mxu0 0
    %2262 = vmatpush1.bf16.msra.mxu0 %v734
    %2263 = vmatprep.subr.bf16.mxu0 0
    %2264 = vmatpush1.bf16.msra.mxu0 %v735
    %2265 = vmatprep.subr.bf16.mxu0 0
    %2266 = vmatpush1.bf16.msra.mxu0 0
    %2267 = vmatprep.subr.bf16.mxu0 0
    %2268 = vmatpush1.bf16.msra.mxu0 0
    %2269 = vmatprep.subr.bf16.mxu0 0
    %2270 = vmatpush1.bf16.msra.mxu0 0
    %2271 = vmatprep.subr.bf16.mxu0 0
    %2272 = vmatpush1.bf16.msra.mxu0 0
    %2273 = vmatprep.subr.bf16.mxu0 0
    %2274 = vmatpush1.bf16.msra.mxu0 0
    %2275 = vmatprep.subr.bf16.mxu0 0
    %2276 = vmatpush1.bf16.msra.mxu0 0
    %2277 = vmatprep.subr.bf16.mxu0 0
    %2278 = vmatpush1.bf16.msra.mxu0 0
    %2279 = vmatprep.subr.bf16.mxu0 0
    %2280 = vmatpush1.bf16.msra.mxu0 0
    %2281 = vmatprep.subr.bf16.mxu0 0
    %2282 = vmatpush1.bf16.msra.mxu0 0
    %2283 = vmatprep.subr.bf16.mxu0 0
    %2284 = vmatpush1.bf16.msra.mxu0 0
    %2285 = vmatprep.subr.bf16.mxu0 0
    %2286 = vmatpush1.bf16.msra.mxu0 0
    %2287 = vmatprep.subr.bf16.mxu0 0
    %2288 = vmatpush1.bf16.msra.mxu0 0
    %2289 = vmatprep.subr.bf16.mxu0 0
    %2290 = vmatpush1.bf16.msra.mxu0 0
    %2291 = vmatprep.subr.bf16.mxu0 0
    %2292 = vmatpush1.bf16.msra.mxu0 0
    %2293 = vmatprep.mubr.bf16.mxu0 0
    %2294 = vmatmul.mubr.bf16.gmra.mrb[0].mxu0 %v2259
    %v2295 = vpop.f32.mrb[0].mxu0
    %v2296 = vadd.f32 0.0, %v2295
    %v2297 = vpop.f32.mrb[0].mxu0
    %v2298 = vpop.f32.mrb[0].mxu0
    %v2299 = vpop.f32.mrb[0].mxu0
    %2300 = vdwg.mxu0
    %v2302 = vrot.slane %v2296, 6
    %v2304 = vadd.f32 %v725, %v2302
    %v2305 = vxor.u32 %v2304, 2147483648
    %v2306 = vmul.f32 %v2305, 1.442695
    %v2307 = vpow.pop %v2306
    %v2308 = vadd.f32 %v2307, 1.0
    %v2309 = vrcp.pop %v2308
    %v2310 = vmul.f32 1.0, %v2309
    %v2311 = vtanh.pop %v2304
    %v2313 = vrot.slane %v2240, 7
    %v2315 = vmul.f32 %v2310, %v2313
    %2317 = vrot.lane.b32.xlu0 %v2311, 64
    %v2318 = vpop.permute.xlu0 %2317
    %v2320 = vmul.f32 %v2310, %v2318
    %2322 = vrot.lane.b32.xlu0 %v2320, 32
    %v2323 = vpop.permute.xlu0 %2322
    %v2325 = vadd.f32 %v2315, %v2323
    %v2326 = vtanh.pop %v2325
    %2328 = vrot.lane.b32.xlu0 %v2326, 64
    %v2329 = vpop.permute.xlu0 %2328
    %v2331 = vmul.f32 %v2310, %v2329
    %2333 = vrot.lane.b32.xlu0 %v2331, 32
    %v2334 = vpop.permute.xlu0 %2333
    %2336 = vst.msk [vmem:[#allocation2 + $0x10] sm:$0x4] %vm980, %v2334
    %v2337 = vpack.c.bf16 %v2331, %v2331
    %v2339 = vrot.slane %v2337, 1
    %2340 = vrot.lane.b32.xlu0 %v2339, 32
    %v2341 = vpop.permute.xlu0 %2340
    %v2343 = vsel %vm497, %v2341, 0
    %2345 = vmatprep.subr.bf16.mxu0 0
    %2346 = vmatpush1.bf16.msra.mxu0 %v734
    %2347 = vmatprep.subr.bf16.mxu0 0
    %2348 = vmatpush1.bf16.msra.mxu0 %v735
    %2349 = vmatprep.subr.bf16.mxu0 0
    %2350 = vmatpush1.bf16.msra.mxu0 0
    %2351 = vmatprep.subr.bf16.mxu0 0
    %2352 = vmatpush1.bf16.msra.mxu0 0
    %2353 = vmatprep.subr.bf16.mxu0 0
    %2354 = vmatpush1.bf16.msra.mxu0 0
    %2355 = vmatprep.subr.bf16.mxu0 0
    %2356 = vmatpush1.bf16.msra.mxu0 0
    %2357 = vmatprep.subr.bf16.mxu0 0
    %2358 = vmatpush1.bf16.msra.mxu0 0
    %2359 = vmatprep.subr.bf16.mxu0 0
    %2360 = vmatpush1.bf16.msra.mxu0 0
    %2361 = vmatprep.subr.bf16.mxu0 0
    %2362 = vmatpush1.bf16.msra.mxu0 0
    %2363 = vmatprep.subr.bf16.mxu0 0
    %2364 = vmatpush1.bf16.msra.mxu0 0
    %2365 = vmatprep.subr.bf16.mxu0 0
    %2366 = vmatpush1.bf16.msra.mxu0 0
    %2367 = vmatprep.subr.bf16.mxu0 0
    %2368 = vmatpush1.bf16.msra.mxu0 0
    %2369 = vmatprep.subr.bf16.mxu0 0
    %2370 = vmatpush1.bf16.msra.mxu0 0
    %2371 = vmatprep.subr.bf16.mxu0 0
    %2372 = vmatpush1.bf16.msra.mxu0 0
    %2373 = vmatprep.subr.bf16.mxu0 0
    %2374 = vmatpush1.bf16.msra.mxu0 0
    %2375 = vmatprep.subr.bf16.mxu0 0
    %2376 = vmatpush1.bf16.msra.mxu0 0
    %2377 = vmatprep.mubr.bf16.mxu0 0
    %2378 = vmatmul.mubr.bf16.gmra.mrb[0].mxu0 %v2343
    %v2379 = vpop.f32.mrb[0].mxu0
    %v2380 = vadd.f32 0.0, %v2379
    %v2381 = vpop.f32.mrb[0].mxu0
    %v2382 = vpop.f32.mrb[0].mxu0
    %v2383 = vpop.f32.mrb[0].mxu0
    %2384 = vdwg.mxu0
    %v2386 = vrot.slane %v2380, 5
    %v2388 = vadd.f32 %v725, %v2386
    %v2389 = vxor.u32 %v2388, 2147483648
    %v2390 = vmul.f32 %v2389, 1.442695
    %v2391 = vpow.pop %v2390
    %v2392 = vadd.f32 %v2391, 1.0
    %v2393 = vrcp.pop %v2392
    %v2394 = vmul.f32 1.0, %v2393
    %v2395 = vtanh.pop %v2388
    %v2397 = vrot.slane %v2325, 7
    %v2399 = vmul.f32 %v2394, %v2397
    %2401 = vrot.lane.b32.xlu0 %v2395, 64
    %v2402 = vpop.permute.xlu0 %2401
    %v2404 = vmul.f32 %v2394, %v2402
    %2406 = vrot.lane.b32.xlu0 %v2404, 32
    %v2407 = vpop.permute.xlu0 %2406
    %v2409 = vadd.f32 %v2399, %v2407
    %v2410 = vtanh.pop %v2409
    %2412 = vrot.lane.b32.xlu0 %v2410, 64
    %v2413 = vpop.permute.xlu0 %2412
    %v2415 = vmul.f32 %v2394, %v2413
    %2417 = vrot.lane.b32.xlu0 %v2415, 32
    %v2418 = vpop.permute.xlu0 %2417
    %2420 = vst.msk [vmem:[#allocation2 + $0x10] sm:$0x8] %vm1065, %v2418
    %v2421 = vpack.c.bf16 %v2415, %v2415
    %v2423 = vshrl.u32 %v2421, 16
    %v2425 = vrot.slane %v2423, 1
    %2426 = vrot.lane.b32.xlu0 %v2425, 32
    %v2427 = vpop.permute.xlu0 %2426
    %v2429 = vsel %vm497, %v2427, 0
    %2431 = vmatprep.subr.bf16.mxu0 0
    %2432 = vmatpush1.bf16.msra.mxu0 %v734
    %2433 = vmatprep.subr.bf16.mxu0 0
    %2434 = vmatpush1.bf16.msra.mxu0 %v735
    %2435 = vmatprep.subr.bf16.mxu0 0
    %2436 = vmatpush1.bf16.msra.mxu0 0
    %2437 = vmatprep.subr.bf16.mxu0 0
    %2438 = vmatpush1.bf16.msra.mxu0 0
    %2439 = vmatprep.subr.bf16.mxu0 0
    %2440 = vmatpush1.bf16.msra.mxu0 0
    %2441 = vmatprep.subr.bf16.mxu0 0
    %2442 = vmatpush1.bf16.msra.mxu0 0
    %2443 = vmatprep.subr.bf16.mxu0 0
    %2444 = vmatpush1.bf16.msra.mxu0 0
    %2445 = vmatprep.subr.bf16.mxu0 0
    %2446 = vmatpush1.bf16.msra.mxu0 0
    %2447 = vmatprep.subr.bf16.mxu0 0
    %2448 = vmatpush1.bf16.msra.mxu0 0
    %2449 = vmatprep.subr.bf16.mxu0 0
    %2450 = vmatpush1.bf16.msra.mxu0 0
    %2451 = vmatprep.subr.bf16.mxu0 0
    %2452 = vmatpush1.bf16.msra.mxu0 0
    %2453 = vmatprep.subr.bf16.mxu0 0
    %2454 = vmatpush1.bf16.msra.mxu0 0
    %2455 = vmatprep.subr.bf16.mxu0 0
    %2456 = vmatpush1.bf16.msra.mxu0 0
    %2457 = vmatprep.subr.bf16.mxu0 0
    %2458 = vmatpush1.bf16.msra.mxu0 0
    %2459 = vmatprep.subr.bf16.mxu0 0
    %2460 = vmatpush1.bf16.msra.mxu0 0
    %2461 = vmatprep.subr.bf16.mxu0 0
    %2462 = vmatpush1.bf16.msra.mxu0 0
    %2463 = vmatprep.mubr.bf16.mxu0 0
    %2464 = vmatmul.mubr.bf16.gmra.mrb[0].mxu0 %v2429
    %v2465 = vpop.f32.mrb[0].mxu0
    %v2466 = vadd.f32 0.0, %v2465
    %v2467 = vpop.f32.mrb[0].mxu0
    %v2468 = vpop.f32.mrb[0].mxu0
    %v2469 = vpop.f32.mrb[0].mxu0
    %2470 = vdwg.mxu0
    %v2472 = vrot.slane %v2466, 4
    %v2474 = vadd.f32 %v725, %v2472
    %v2475 = vxor.u32 %v2474, 2147483648
    %v2476 = vmul.f32 %v2475, 1.442695
    %v2477 = vpow.pop %v2476
    %v2478 = vadd.f32 %v2477, 1.0
    %v2479 = vrcp.pop %v2478
    %v2480 = vmul.f32 1.0, %v2479
    %v2481 = vtanh.pop %v2474
    %v2483 = vrot.slane %v2409, 7
    %v2485 = vmul.f32 %v2480, %v2483
    %2487 = vrot.lane.b32.xlu0 %v2481, 64
    %v2488 = vpop.permute.xlu0 %2487
    %v2490 = vmul.f32 %v2480, %v2488
    %2492 = vrot.lane.b32.xlu0 %v2490, 32
    %v2493 = vpop.permute.xlu0 %2492
    %v2495 = vadd.f32 %v2485, %v2493
    %v2496 = vtanh.pop %v2495
    %2498 = vrot.lane.b32.xlu0 %v2496, 64
    %v2499 = vpop.permute.xlu0 %2498
    %v2501 = vmul.f32 %v2480, %v2499
    %2503 = vrot.lane.b32.xlu0 %v2501, 32
    %v2504 = vpop.permute.xlu0 %2503
    %2506 = vst.msk [vmem:[#allocation2 + $0x10] sm:$0x10] %vm1152, %v2504
    %v2507 = vpack.c.bf16 %v2501, %v2501
    %v2509 = vrot.slane %v2507, 2
    %2510 = vrot.lane.b32.xlu0 %v2509, 32
    %v2511 = vpop.permute.xlu0 %2510
    %v2513 = vsel %vm497, %v2511, 0
    %2515 = vmatprep.subr.bf16.mxu0 0
    %2516 = vmatpush1.bf16.msra.mxu0 %v734
    %2517 = vmatprep.subr.bf16.mxu0 0
    %2518 = vmatpush1.bf16.msra.mxu0 %v735
    %2519 = vmatprep.subr.bf16.mxu0 0
    %2520 = vmatpush1.bf16.msra.mxu0 0
    %2521 = vmatprep.subr.bf16.mxu0 0
    %2522 = vmatpush1.bf16.msra.mxu0 0
    %2523 = vmatprep.subr.bf16.mxu0 0
    %2524 = vmatpush1.bf16.msra.mxu0 0
    %2525 = vmatprep.subr.bf16.mxu0 0
    %2526 = vmatpush1.bf16.msra.mxu0 0
    %2527 = vmatprep.subr.bf16.mxu0 0
    %2528 = vmatpush1.bf16.msra.mxu0 0
    %2529 = vmatprep.subr.bf16.mxu0 0
    %2530 = vmatpush1.bf16.msra.mxu0 0
    %2531 = vmatprep.subr.bf16.mxu0 0
    %2532 = vmatpush1.bf16.msra.mxu0 0
    %2533 = vmatprep.subr.bf16.mxu0 0
    %2534 = vmatpush1.bf16.msra.mxu0 0
    %2535 = vmatprep.subr.bf16.mxu0 0
    %2536 = vmatpush1.bf16.msra.mxu0 0
    %2537 = vmatprep.subr.bf16.mxu0 0
    %2538 = vmatpush1.bf16.msra.mxu0 0
    %2539 = vmatprep.subr.bf16.mxu0 0
    %2540 = vmatpush1.bf16.msra.mxu0 0
    %2541 = vmatprep.subr.bf16.mxu0 0
    %2542 = vmatpush1.bf16.msra.mxu0 0
    %2543 = vmatprep.subr.bf16.mxu0 0
    %2544 = vmatpush1.bf16.msra.mxu0 0
    %2545 = vmatprep.subr.bf16.mxu0 0
    %2546 = vmatpush1.bf16.msra.mxu0 0
    %2547 = vmatprep.mubr.bf16.mxu0 0
    %2548 = vmatmul.mubr.bf16.gmra.mrb[0].mxu0 %v2513
    %v2549 = vpop.f32.mrb[0].mxu0
    %v2550 = vadd.f32 0.0, %v2549
    %v2551 = vpop.f32.mrb[0].mxu0
    %v2552 = vpop.f32.mrb[0].mxu0
    %v2553 = vpop.f32.mrb[0].mxu0
    %2554 = vdwg.mxu0
    %v2556 = vrot.slane %v2550, 3
    %v2558 = vadd.f32 %v725, %v2556
    %v2559 = vxor.u32 %v2558, 2147483648
    %v2560 = vmul.f32 %v2559, 1.442695
    %v2561 = vpow.pop %v2560
    %v2562 = vadd.f32 %v2561, 1.0
    %v2563 = vrcp.pop %v2562
    %v2564 = vmul.f32 1.0, %v2563
    %v2565 = vtanh.pop %v2558
    %v2567 = vrot.slane %v2495, 7
    %v2569 = vmul.f32 %v2564, %v2567
    %2571 = vrot.lane.b32.xlu0 %v2565, 64
    %v2572 = vpop.permute.xlu0 %2571
    %v2574 = vmul.f32 %v2564, %v2572
    %2576 = vrot.lane.b32.xlu0 %v2574, 32
    %v2577 = vpop.permute.xlu0 %2576
    %v2579 = vadd.f32 %v2569, %v2577
    %v2580 = vtanh.pop %v2579
    %2582 = vrot.lane.b32.xlu0 %v2580, 64
    %v2583 = vpop.permute.xlu0 %2582
    %v2585 = vmul.f32 %v2564, %v2583
    %2587 = vrot.lane.b32.xlu0 %v2585, 32
    %v2588 = vpop.permute.xlu0 %2587
    %2590 = vst.msk [vmem:[#allocation2 + $0x10] sm:$0x20] %vm1237, %v2588
    %v2591 = vpack.c.bf16 %v2585, %v2585
    %v2593 = vshrl.u32 %v2591, 16
    %v2595 = vrot.slane %v2593, 2
    %2596 = vrot.lane.b32.xlu0 %v2595, 32
    %v2597 = vpop.permute.xlu0 %2596
    %v2599 = vsel %vm497, %v2597, 0
    %2601 = vmatprep.subr.bf16.mxu0 0
    %2602 = vmatpush1.bf16.msra.mxu0 %v734
    %2603 = vmatprep.subr.bf16.mxu0 0
    %2604 = vmatpush1.bf16.msra.mxu0 %v735
    %2605 = vmatprep.subr.bf16.mxu0 0
    %2606 = vmatpush1.bf16.msra.mxu0 0
    %2607 = vmatprep.subr.bf16.mxu0 0
    %2608 = vmatpush1.bf16.msra.mxu0 0
    %2609 = vmatprep.subr.bf16.mxu0 0
    %2610 = vmatpush1.bf16.msra.mxu0 0
    %2611 = vmatprep.subr.bf16.mxu0 0
    %2612 = vmatpush1.bf16.msra.mxu0 0
    %2613 = vmatprep.subr.bf16.mxu0 0
    %2614 = vmatpush1.bf16.msra.mxu0 0
    %2615 = vmatprep.subr.bf16.mxu0 0
    %2616 = vmatpush1.bf16.msra.mxu0 0
    %2617 = vmatprep.subr.bf16.mxu0 0
    %2618 = vmatpush1.bf16.msra.mxu0 0
    %2619 = vmatprep.subr.bf16.mxu0 0
    %2620 = vmatpush1.bf16.msra.mxu0 0
    %2621 = vmatprep.subr.bf16.mxu0 0
    %2622 = vmatpush1.bf16.msra.mxu0 0
    %2623 = vmatprep.subr.bf16.mxu0 0
    %2624 = vmatpush1.bf16.msra.mxu0 0
    %2625 = vmatprep.subr.bf16.mxu0 0
    %2626 = vmatpush1.bf16.msra.mxu0 0
    %2627 = vmatprep.subr.bf16.mxu0 0
    %2628 = vmatpush1.bf16.msra.mxu0 0
    %2629 = vmatprep.subr.bf16.mxu0 0
    %2630 = vmatpush1.bf16.msra.mxu0 0
    %2631 = vmatprep.subr.bf16.mxu0 0
    %2632 = vmatpush1.bf16.msra.mxu0 0
    %2633 = vmatprep.mubr.bf16.mxu0 0
    %2634 = vmatmul.mubr.bf16.gmra.mrb[0].mxu0 %v2599
    %v2635 = vpop.f32.mrb[0].mxu0
    %v2636 = vadd.f32 0.0, %v2635
    %v2637 = vpop.f32.mrb[0].mxu0
    %v2638 = vpop.f32.mrb[0].mxu0
    %v2639 = vpop.f32.mrb[0].mxu0
    %2640 = vdwg.mxu0
    %v2642 = vrot.slane %v2636, 2
    %v2644 = vadd.f32 %v725, %v2642
    %v2645 = vxor.u32 %v2644, 2147483648
    %v2646 = vmul.f32 %v2645, 1.442695
    %v2647 = vpow.pop %v2646
    %v2648 = vadd.f32 %v2647, 1.0
    %v2649 = vrcp.pop %v2648
    %v2650 = vmul.f32 1.0, %v2649
    %v2651 = vtanh.pop %v2644
    %v2653 = vrot.slane %v2579, 7
    %v2655 = vmul.f32 %v2650, %v2653
    %2657 = vrot.lane.b32.xlu0 %v2651, 64
    %v2658 = vpop.permute.xlu0 %2657
    %v2660 = vmul.f32 %v2650, %v2658
    %2662 = vrot.lane.b32.xlu0 %v2660, 32
    %v2663 = vpop.permute.xlu0 %2662
    %v2665 = vadd.f32 %v2655, %v2663
    %v2666 = vtanh.pop %v2665
    %2668 = vrot.lane.b32.xlu0 %v2666, 64
    %v2669 = vpop.permute.xlu0 %2668
    %v2671 = vmul.f32 %v2650, %v2669
    %2673 = vrot.lane.b32.xlu0 %v2671, 32
    %v2674 = vpop.permute.xlu0 %2673
    %2676 = vst.msk [vmem:[#allocation2 + $0x10] sm:$0x40] %vm1324, %v2674
    %v2677 = vpack.c.bf16 %v2671, %v2671
    %v2679 = vrot.slane %v2677, 3
    %2680 = vrot.lane.b32.xlu0 %v2679, 32
    %v2681 = vpop.permute.xlu0 %2680
    %v2683 = vsel %vm497, %v2681, 0
    %2685 = vmatprep.subr.bf16.mxu0 0
    %2686 = vmatpush1.bf16.msra.mxu0 %v734
    %2687 = vmatprep.subr.bf16.mxu0 0
    %2688 = vmatpush1.bf16.msra.mxu0 %v735
    %2689 = vmatprep.subr.bf16.mxu0 0
    %2690 = vmatpush1.bf16.msra.mxu0 0
    %2691 = vmatprep.subr.bf16.mxu0 0
    %2692 = vmatpush1.bf16.msra.mxu0 0
    %2693 = vmatprep.subr.bf16.mxu0 0
    %2694 = vmatpush1.bf16.msra.mxu0 0
    %2695 = vmatprep.subr.bf16.mxu0 0
    %2696 = vmatpush1.bf16.msra.mxu0 0
    %2697 = vmatprep.subr.bf16.mxu0 0
    %2698 = vmatpush1.bf16.msra.mxu0 0
    %2699 = vmatprep.subr.bf16.mxu0 0
    %2700 = vmatpush1.bf16.msra.mxu0 0
    %2701 = vmatprep.subr.bf16.mxu0 0
    %2702 = vmatpush1.bf16.msra.mxu0 0
    %2703 = vmatprep.subr.bf16.mxu0 0
    %2704 = vmatpush1.bf16.msra.mxu0 0
    %2705 = vmatprep.subr.bf16.mxu0 0
    %2706 = vmatpush1.bf16.msra.mxu0 0
    %2707 = vmatprep.subr.bf16.mxu0 0
    %2708 = vmatpush1.bf16.msra.mxu0 0
    %2709 = vmatprep.subr.bf16.mxu0 0
    %2710 = vmatpush1.bf16.msra.mxu0 0
    %2711 = vmatprep.subr.bf16.mxu0 0
    %2712 = vmatpush1.bf16.msra.mxu0 0
    %2713 = vmatprep.subr.bf16.mxu0 0
    %2714 = vmatpush1.bf16.msra.mxu0 0
    %2715 = vmatprep.subr.bf16.mxu0 0
    %2716 = vmatpush1.bf16.msra.mxu0 0
    %2717 = vmatprep.mubr.bf16.mxu0 0
    %2718 = vmatmul.mubr.bf16.gmra.mrb[0].mxu0 %v2683
    %v2719 = vpop.f32.mrb[0].mxu0
    %v2720 = vadd.f32 0.0, %v2719
    %v2721 = vpop.f32.mrb[0].mxu0
    %v2722 = vpop.f32.mrb[0].mxu0
    %v2723 = vpop.f32.mrb[0].mxu0
    %2724 = vdwg.mxu0
    %v2726 = vrot.slane %v2720, 1
    %v2728 = vadd.f32 %v725, %v2726
    %v2729 = vxor.u32 %v2728, 2147483648
    %v2730 = vmul.f32 %v2729, 1.442695
    %v2731 = vpow.pop %v2730
    %v2732 = vadd.f32 %v2731, 1.0
    %v2733 = vrcp.pop %v2732
    %v2734 = vmul.f32 1.0, %v2733
    %v2735 = vtanh.pop %v2728
    %v2737 = vrot.slane %v2665, 7
    %v2739 = vmul.f32 %v2734, %v2737
    %2741 = vrot.lane.b32.xlu0 %v2735, 64
    %v2742 = vpop.permute.xlu0 %2741
    %v2744 = vmul.f32 %v2734, %v2742
    %2746 = vrot.lane.b32.xlu0 %v2744, 32
    %v2747 = vpop.permute.xlu0 %2746
    %v2749 = vadd.f32 %v2739, %v2747
    %v2750 = vtanh.pop %v2749
    %2752 = vrot.lane.b32.xlu0 %v2750, 64
    %v2753 = vpop.permute.xlu0 %2752
    %v2755 = vmul.f32 %v2734, %v2753
    %2757 = vrot.lane.b32.xlu0 %v2755, 32
    %v2758 = vpop.permute.xlu0 %2757
    %2760 = vst.msk [vmem:[#allocation2 + $0x10] sm:$0x80] %vm1409, %v2758
    %v2761 = vld [vmem:[#allocation2] sm:$0xff]
    %v2762 = vld [vmem:[#allocation2 + $0x8] sm:$0xff]
    %v2763 = vld [vmem:[#allocation2 + $0x10] sm:$0xff]
    %2764 = vset.pattern.permute.xlu0 0
    %2765 = vperm.xlu0 %2764, %v37
    %v2766 = vpop.permute.xlu0 %2765
    %v2767 = vrot.slane %v37, 3
    %v2768 = vrot.slane %v2766, 4
    %v2770 = vsel %vm497, %v2767, 0
    %v2773 = vsel %vm497, %v2761, 0
    %v2776 = vsel %vm497, %v2762, 0
    %v2779 = vsel %vm497, %v2763, 0
    %2781 = vmatprep.subr.mxu0 0.0
    %2782 = vmatpush1.xpose.msra.mxu0 %v2773
    %2783 = vmatprep.subr.mxu0 0.0
    %2784 = vmatpush1.xpose.msra.mxu0 %v2776
    %2785 = vmatprep.subr.mxu0 0.0
    %2786 = vmatpush1.xpose.msra.mxu0 %v2779
    %2787 = vmatprep.subr.mxu0 0.0
    %2788 = vmatpush1.xpose.msra.mxu0 0.0
    %2789 = vmatprep.subr.mxu0 0.0
    %2790 = vmatpush1.xpose.msra.mxu0 0.0
    %2791 = vmatprep.subr.mxu0 0.0
    %2792 = vmatpush1.xpose.msra.mxu0 0.0
    %2793 = vmatprep.subr.mxu0 0.0
    %2794 = vmatpush1.xpose.msra.mxu0 0.0
    %2795 = vmatprep.subr.mxu0 0.0
    %2796 = vmatpush1.xpose.msra.mxu0 0.0
    %2797 = vmatprep.subr.mxu0 0.0
    %2798 = vmatpush1.xpose.msra.mxu0 0.0
    %2799 = vmatprep.subr.mxu0 0.0
    %2800 = vmatpush1.xpose.msra.mxu0 0.0
    %2801 = vmatprep.subr.mxu0 0.0
    %2802 = vmatpush1.xpose.msra.mxu0 0.0
    %2803 = vmatprep.subr.mxu0 0.0
    %2804 = vmatpush1.xpose.msra.mxu0 0.0
    %2805 = vmatprep.subr.mxu0 0.0
    %2806 = vmatpush1.xpose.msra.mxu0 0.0
    %2807 = vmatprep.subr.mxu0 0.0
    %2808 = vmatpush1.xpose.msra.mxu0 0.0
    %2809 = vmatprep.subr.mxu0 0.0
    %2810 = vmatpush1.xpose.msra.mxu0 0.0
    %2811 = vmatprep.subr.mxu0 0.0
    %2812 = vmatpush1.xpose.msra.mxu0 0.0
    %2813 = vmatprep.subr.mxu0 0.0
    %2814 = vmatpush1.xpose.msra.mxu0 0.0
    %2815 = vmatprep.subr.mxu0 0.0
    %2816 = vmatpush1.xpose.msra.mxu0 0.0
    %2817 = vmatprep.subr.mxu0 0.0
    %2818 = vmatpush1.xpose.msra.mxu0 0.0
    %2819 = vmatprep.subr.mxu0 0.0
    %2820 = vmatpush1.xpose.msra.mxu0 0.0
    %2821 = vmatprep.subr.mxu0 0.0
    %2822 = vmatpush1.xpose.msra.mxu0 0.0
    %2823 = vmatprep.subr.mxu0 0.0
    %2824 = vmatpush1.xpose.msra.mxu0 0.0
    %2825 = vmatprep.subr.mxu0 0.0
    %2826 = vmatpush1.xpose.msra.mxu0 0.0
    %2827 = vmatprep.subr.mxu0 0.0
    %2828 = vmatpush1.xpose.msra.mxu0 0.0
    %2829 = vmatprep.subr.mxu0 0.0
    %2830 = vmatpush1.xpose.msra.mxu0 0.0
    %2831 = vmatprep.subr.mxu0 0.0
    %2832 = vmatpush1.xpose.msra.mxu0 0.0
    %2833 = vmatprep.subr.mxu0 0.0
    %2834 = vmatpush1.xpose.msra.mxu0 0.0
    %2835 = vmatprep.subr.mxu0 0.0
    %2836 = vmatpush1.xpose.msra.mxu0 0.0
    %2837 = vmatprep.subr.mxu0 0.0
    %2838 = vmatpush1.xpose.msra.mxu0 0.0
    %2839 = vmatprep.subr.mxu0 0.0
    %2840 = vmatpush1.xpose.msra.mxu0 0.0
    %2841 = vmatprep.subr.mxu0 0.0
    %2842 = vmatpush1.xpose.msra.mxu0 0.0
    %2843 = vmatprep.subr.mxu0 0.0
    %2844 = vmatpush1.xpose.msra.mxu0 0.0
    %2845 = vmatprep.mubr.f32.mxu0 0.0
    %2846 = vmatmul.mubr.f32.gmra.mrb[0].mxu0 %v2770
    %v2847 = vpop.f32.mrb[0].mxu0
    %v2848 = vadd.f32 %v2768, %v2847
    %v2849 = vpop.f32.mrb[0].mxu0
    %2850 = vdwg.mxu0
    %vm2851 = vcmask 188416
    %2852 = vst.msk [vmem:[#allocation3] sm:$0x1] %vm2851, %v2848
    // Predicated region
    $region26: #{edge_gcn_lstm_forward.1} parent=1 // pred_check
      _
    $region27: #{edge_gcn_lstm_forward.1} parent=1 // pred_check_branch
      %2854 = sbr.rel (0) target = $region29
    $region28: #{edge_gcn_lstm_forward.1} parent=1 // pred_region
      %s2856 = ssub.s32 16, 16
      %2857 = vsyncadd [#allocation4], %s2856
      %s2859 = sshll.u32 [#allocation3], 4
      %s2860 = int_to_ptr.vmem [resolvable:$true] %s2859
      %2862 = dma.vmem_to_hbm [thread:$0]  %s2860, 16, %s6, [#allocation4]
    $region29: #{edge_gcn_lstm_forward.1} parent=1 // pred_fallthru
      _
    // Predicated region
    $region30: #{edge_gcn_lstm_forward.1} parent=1 // pred_check
      _
    $region31: #{edge_gcn_lstm_forward.1} parent=1 // pred_check_branch
      %2864 = sbr.rel (0) target = $region33
    $region32: #{edge_gcn_lstm_forward.1} parent=1 // pred_region
      %2865 = dma.done [#allocation4], 16
    $region33: #{edge_gcn_lstm_forward.1} parent=1 // pred_fallthru
      _
    %2866 = vsyncpa [#allocation4], 1

</llo_original>
